<compile_context>
chip_gen: v5e
topology: v5e:2x2
jax: 0.10.0
libtpu: 0.0.40
codegen_flags: <defaults>
</compile_context>

<pallas_src>
import jax
import jax.numpy as jnp
import numpy as np
from jax.experimental import pallas as pl
from jax.experimental.pallas import tpu as pltpu

EPS = 1e-5


# ---------------------------------------------------------------------------
# Banded weight: fold the kw tap (and the W zero-padding) of a 3x3x3 conv into
# a (W*Cin, W*Cout) matrix per (kd, kh) so the conv becomes 9 dense matmuls
# over lane-dense (D*H, W*Cin) scanline slabs.
#   Wb[kd, kh, (w+kw-1)*Ci + ci, w*Co + co] = wt[co, ci, kd, kh, kw]
# ---------------------------------------------------------------------------
def _build_banded_weight(wt, W):
    Co, Ci = int(wt.shape[0]), int(wt.shape[1])
    band = jnp.transpose(wt, (2, 3, 4, 1, 0))          # [kd, kh, kw, ci, co]
    Wb = jnp.zeros((3, 3, W * Ci, W * Co), jnp.float32)
    for kw in range(3):
        for w in range(W):
            wi = w + kw - 1
            if 0 <= wi < W:
                Wb = Wb.at[:, :, wi * Ci:(wi + 1) * Ci,
                           w * Co:(w + 1) * Co].set(band[:, :, kw])
    return Wb


# ---------------------------------------------------------------------------
# Pallas kernel 1/2: direct 3x3x3 conv + fused BN (inference) [+ ReLU]
# [+ SE global-sum by-product].  Grid = (N,), weight/scale/bias VMEM-resident.
# ---------------------------------------------------------------------------
def conv3x3_bn(x_pad, w_banded, scale_row, bias_row, *, relu, pool, out_dtype):
    """x_pad: (N, D+2, H+2, W*Ci) bf16, zero-padded along D and H.
       w_banded: (3, 3, W*Ci, W*Co) bf16.  scale/bias_row: (1, W*Co) f32.
       Returns y: (N, D*H, W*Co) [, pool: (N, 1, W*Co) f32]."""
    N, Dp, Hp, WCi = x_pad.shape
    D, H = Dp - 2, Hp - 2
    WCo = w_banded.shape[-1]
    M = D * H

    def kernel(x_ref, w_ref, s_ref, b_ref, o_ref, *pool_refs):
        # Upcast the halo block once: f32 has a clean (8,128) sublane layout,
        # so the per-tap slice + (D,H)->(D*H) merge is a cheap relayout.  The
        # slab is cast back to bf16 right before the MXU dot (values exact).
        x = x_ref[0].astype(jnp.float32)                       # (Dp, Hp, WCi)
        acc = jnp.zeros((M, WCo), jnp.float32)
        for kd in range(3):                                    # in-kernel taps
            for kh in range(3):
                slab = x[kd:kd + D, kh:kh + H, :].reshape(M, WCi)
                acc = acc + jnp.dot(slab.astype(jnp.bfloat16), w_ref[kd, kh],
                                    preferred_element_type=jnp.float32)
        y = acc * s_ref[...] + b_ref[...]                      # f32 epilogue
        if relu:
            y = jnp.maximum(y, 0.0)
        o_ref[0] = y.astype(o_ref.dtype)                       # single store
        if pool:                                               # (1, WCo) row
            pool_refs[0][0] = jnp.sum(y, axis=0, keepdims=True)

    out_shapes = [jax.ShapeDtypeStruct((N, M, WCo), out_dtype)]
    out_specs = [pl.BlockSpec((1, M, WCo), lambda n: (n, 0, 0))]
    if pool:
        out_shapes.append(jax.ShapeDtypeStruct((N, 1, WCo), jnp.float32))
        out_specs.append(pl.BlockSpec((1, 1, WCo), lambda n: (n, 0, 0)))

    isz = lambda d: jnp.dtype(d).itemsize
    flops = 2 * N * 9 * M * WCi * WCo
    bytes_accessed = (N * Dp * Hp * WCi * isz(x_pad.dtype)        # x once
                      + 9 * WCi * WCo * isz(w_banded.dtype)       # weight once
                      + 2 * WCo * 4                                # scale/bias
                      + N * M * WCo * isz(out_dtype)               # y out
                      + (N * WCo * 4 if pool else 0))              # pool out

    # VMEM budget: double-buffered per-sample x/y blocks + resident weight +
    # local accumulator + relayout slack.
    need = (2 * Dp * Hp * WCi * isz(x_pad.dtype)
            + Dp * Hp * WCi * 4                     # f32 upcast of the block
            + 2 * M * WCo * isz(out_dtype)
            + 9 * WCi * WCo * isz(w_banded.dtype)
            + 2 * M * WCo * 4                        # acc + epilogue temps
            + 2 * WCo * 4)
    vmem_limit = int(min(48 * 1024 * 1024, max(4 * need, 16 * 1024 * 1024)))

    outs = pl.pallas_call(
        kernel,
        out_shape=tuple(out_shapes),
        grid_spec=pltpu.PrefetchScalarGridSpec(
            num_scalar_prefetch=0,
            grid=(N,),
            in_specs=[
                pl.BlockSpec((1, Dp, Hp, WCi), lambda n: (n, 0, 0, 0)),
                # Constant index_maps -> fetched once, VMEM-resident.
                pl.BlockSpec((3, 3, WCi, WCo), lambda n: (0, 0, 0, 0)),
                pl.BlockSpec((1, WCo), lambda n: (0, 0)),
                pl.BlockSpec((1, WCo), lambda n: (0, 0)),
            ],
            out_specs=tuple(out_specs),
        ),
        compiler_params=pltpu.CompilerParams(
            dimension_semantics=("parallel",),
            vmem_limit_bytes=vmem_limit),
        cost_estimate=pl.CostEstimate(flops=int(flops), transcendentals=0,
                                      bytes_accessed=int(bytes_accessed)),
    )(x_pad, w_banded, scale_row, bias_row)
    return outs if pool else outs[0]


# ---------------------------------------------------------------------------
# Pallas kernel 3: streaming SE gate-apply + residual add + ReLU.
# ---------------------------------------------------------------------------
def _pick_row_tile(rows, cap=512):
    """Near-cap row tile; never collapses to tiny tiles (ragged last tile is
    handled by the pl.cdiv grid)."""
    if rows <= cap:
        return rows
    for t in range(cap, 7, -8):            # prefer exact multiple-of-8 divisor
        if rows % t == 0:
            return t
    return cap


def se_apply(y2_rows, res_rows, gate_rows):
    """out = relu(gate * y2 + residual); y2 is bf16, everything else f32."""
    N, R, WCo = y2_rows.shape
    TR = _pick_row_tile(R)
    nt = pl.cdiv(R, TR)

    def kernel(y_ref, r_ref, g_ref, o_ref):
        y = y_ref[0].astype(jnp.float32)                 # bf16 -> f32 in VMEM
        o_ref[0] = jnp.maximum(y * g_ref[0] + r_ref[0], 0.0)

    bytes_accessed = int(N * R * WCo * (2 + 4 + 4) + N * WCo * 4)
    return pl.pallas_call(
        kernel,
        out_shape=jax.ShapeDtypeStruct((N, R, WCo), jnp.float32),
        grid_spec=pltpu.PrefetchScalarGridSpec(
            num_scalar_prefetch=0,
            grid=(N, nt),
            in_specs=[
                pl.BlockSpec((1, TR, WCo), lambda n, t: (n, t, 0)),
                pl.BlockSpec((1, TR, WCo), lambda n, t: (n, t, 0)),
                pl.BlockSpec((1, 1, WCo), lambda n, t: (n, 0, 0)),
            ],
            out_specs=pl.BlockSpec((1, TR, WCo), lambda n, t: (n, t, 0)),
        ),
        compiler_params=pltpu.CompilerParams(
            dimension_semantics=("parallel", "parallel")),
        cost_estimate=pl.CostEstimate(flops=int(3 * N * R * WCo),
                                      transcendentals=0,
                                      bytes_accessed=bytes_accessed),
    )(y2_rows, res_rows, gate_rows)


# ---------------------------------------------------------------------------
# ResidualBlock forward (Pallas path)
# ---------------------------------------------------------------------------
def residual_block_forward(x, params):
    (w1, b1, g1, be1, rm1, rv1,
     w2, b2, g2, be2, rm2, rv2,
     fc1, fc2) = params
    N, Ci, D, H, W = x.shape
    Co = w1.shape[0]
    assert Ci == Co, "downsample=None path requires in_channels == out_channels"

    # NCDHW -> lane-dense scanline layout (N, D, H, W*C).
    x_rows = jnp.transpose(x, (0, 2, 3, 4, 1)).reshape(N, D, H, W * Ci)
    res_rows = x_rows.reshape(N, D * H, W * Ci)            # f32 residual

    def pad_dh(a):                                          # zero-pad D and H
        return jnp.pad(a, ((0, 0), (1, 1), (1, 1), (0, 0)))

    def fold_bn(gamma, beta, rmean, rvar, cbias):           # inference BN fold
        s = gamma / jnp.sqrt(rvar + EPS)
        return s, (cbias - rmean) * s + beta

    # conv1 + BN1 + ReLU  (bf16 MXU operands, f32 accum/epilogue, bf16 out)
    s1, bias1 = fold_bn(g1, be1, rm1, rv1, b1)
    y1 = conv3x3_bn(pad_dh(x_rows.astype(jnp.bfloat16)),
                    _build_banded_weight(w1, W).astype(jnp.bfloat16),
                    jnp.tile(s1, W)[None, :], jnp.tile(bias1, W)[None, :],
                    relu=True, pool=False, out_dtype=jnp.bfloat16)

    # conv2 + BN2 (no ReLU) with fused SE global-sum by-product (bf16 out)
    s2, bias2 = fold_bn(g2, be2, rm2, rv2, b2)
    y2, pool_row = conv3x3_bn(pad_dh(y1.reshape(N, D, H, W * Co)),
                              _build_banded_weight(w2, W).astype(jnp.bfloat16),
                              jnp.tile(s2, W)[None, :],
                              jnp.tile(bias2, W)[None, :],
                              relu=False, pool=True, out_dtype=jnp.bfloat16)

    # SE gate: tiny (N, C) FC stack -> plain JAX (negligible work).
    pool_c = pool_row[:, 0, :].reshape(N, W, Co).sum(axis=1) / float(D * H * W)
    hid = jnp.maximum(pool_c @ fc1.T, 0.0)
    gate = jax.nn.sigmoid(hid @ fc2.T)                      # (N, Co)
    gate_rows = jnp.tile(gate, (1, W))[:, None, :].astype(jnp.float32)

    # streaming gate*y2 + residual + ReLU (f32 output)
    out_rows = se_apply(y2, res_rows, gate_rows)
    out = out_rows.reshape(N, D, H, W, Co)
    return jnp.transpose(out, (0, 4, 1, 2, 3))              # back to NCDHW


# ---------------------------------------------------------------------------
# Pure-JAX reference (mirrors the PyTorch forward, BN in inference mode)
# ---------------------------------------------------------------------------
def residual_block_ref(x, params):
    (w1, b1, g1, be1, rm1, rv1,
     w2, b2, g2, be2, rm2, rv2,
     fc1, fc2) = params

    def conv_bn(h, w, b, g, be, rm, rv, relu):
        y = jax.lax.conv_general_dilated(
            h, w, window_strides=(1, 1, 1),
            padding=((1, 1), (1, 1), (1, 1)),
            dimension_numbers=("NCDHW", "OIDHW", "NCDHW"))
        y = y + b[None, :, None, None, None]
        y = (y - rm[None, :, None, None, None]) / jnp.sqrt(
            rv[None, :, None, None, None] + EPS) * g[None, :, None, None, None] \
            + be[None, :, None, None, None]
        if relu:
            y = jnp.maximum(y, 0.0)
        return y

    o1 = conv_bn(x, w1, b1, g1, be1, rm1, rv1, True)
    o2 = conv_bn(o1, w2, b2, g2, be2, rm2, rv2, False)
    pool = jnp.mean(o2, axis=(2, 3, 4))                     # (N, C)
    h = jnp.maximum(pool @ fc1.T, 0.0)
    gate = jax.nn.sigmoid(h @ fc2.T)
    out = o2 * gate[:, :, None, None, None] + x
    return jnp.maximum(out, 0.0)


if __name__ == "__main__":
    # Small kernel-friendly shapes: W*C = 8*16 = 128 (lane-dense);
    # out_channels=16 with reduction=16 -> SE hidden width 1.
    B, Cin, Cout, D, H, W = 2, 16, 16, 8, 8, 8
    reduction = 16
    Cr = Cout // reduction

    keys = jax.random.split(jax.random.PRNGKey(0), 16)
    x = jax.random.normal(keys[0], (B, Cin, D, H, W), jnp.float32)

    w1 = jax.random.normal(keys[1], (Cout, Cin, 3, 3, 3), jnp.float32) * 0.1
    b1 = jax.random.normal(keys[2], (Cout,), jnp.float32) * 0.1
    g1 = 1.0 + 0.1 * jax.random.normal(keys[3], (Cout,), jnp.float32)
    be1 = 0.1 * jax.random.normal(keys[4], (Cout,), jnp.float32)
    rm1 = 0.1 * jax.random.normal(keys[5], (Cout,), jnp.float32)
    rv1 = 1.0 + 0.5 * jax.random.uniform(keys[6], (Cout,), jnp.float32)

    w2 = jax.random.normal(keys[7], (Cout, Cout, 3, 3, 3), jnp.float32) * 0.1
    b2 = jax.random.normal(keys[8], (Cout,), jnp.float32) * 0.1
    g2 = 1.0 + 0.1 * jax.random.normal(keys[9], (Cout,), jnp.float32)
    be2 = 0.1 * jax.random.normal(keys[10], (Cout,), jnp.float32)
    rm2 = 0.1 * jax.random.normal(keys[11], (Cout,), jnp.float32)
    rv2 = 1.0 + 0.5 * jax.random.uniform(keys[12], (Cout,), jnp.float32)

    fc1 = jax.random.normal(keys[13], (Cr, Cout), jnp.float32) * 0.3   # Linear(C, C//r)
    fc2 = jax.random.normal(keys[14], (Cout, Cr), jnp.float32) * 0.3   # Linear(C//r, C)

    # Make conv inputs/weights exactly bf16-representable so the f32 reference
    # isolates kernel error to the (intentional) bf16 intermediate activations
    # (y1 between the convs, y2 into the SE epilogue).
    x = x.astype(jnp.bfloat16).astype(jnp.float32)
    w1 = w1.astype(jnp.bfloat16).astype(jnp.float32)
    w2 = w2.astype(jnp.bfloat16).astype(jnp.float32)

    params = (w1, b1, g1, be1, rm1, rv1,
              w2, b2, g2, be2, rm2, rv2,
              fc1, fc2)

    fwd = jax.jit(residual_block_forward)
    ref_fn = jax.jit(residual_block_ref)

    out = jax.block_until_ready(fwd(x, params))
    ref = jax.block_until_ready(ref_fn(x, params))

    np.testing.assert_allclose(np.asarray(out), np.asarray(ref),
                               rtol=2e-2, atol=4e-2)
    print("KERNEL_OK")
</pallas_src>

<mosaic_0001>
module attributes {stable_mosaic.version = 11 : i64} {
  func.func @kernel(%arg0: i32, %arg1: memref<1x10x10x128xbf16, #tpu.memory_space<vmem>>, %arg2: memref<3x3x128x128xbf16, #tpu.memory_space<vmem>>, %arg3: memref<1x128xf32, #tpu.memory_space<vmem>>, %arg4: memref<1x128xf32, #tpu.memory_space<vmem>>, %arg5: memref<1x64x128xbf16, #tpu.memory_space<vmem>>) attributes {dimension_semantics = [#tpu.dimension_semantics<parallel>], iteration_bounds = array<i64: 2>, scalar_prefetch = 0 : i64, scratch_operands = 0 : i64, tpu.core_type = #tpu.core_type<tc>, window_params = [{transform_indices = @transform_0, window_bounds = array<i64: 1, 10, 10, 128>}, {pipeline_mode = #tpu.pipeline_mode<synchronous>, transform_indices = @transform_1, window_bounds = array<i64: 3, 3, 128, 128>}, {pipeline_mode = #tpu.pipeline_mode<synchronous>, transform_indices = @transform_2, window_bounds = array<i64: 1, 128>}, {pipeline_mode = #tpu.pipeline_mode<synchronous>, transform_indices = @transform_3, window_bounds = array<i64: 1, 128>}, {transform_indices = @transform_4, window_bounds = array<i64: 1, 64, 128>}]} {
    %c0 = arith.constant 0 : index
    %c0_0 = arith.constant 0 : index
    %c0_1 = arith.constant 0 : index
    %c0_2 = arith.constant 0 : index
    %0 = vector.load %arg1[%c0, %c0_0, %c0_1, %c0_2] : memref<1x10x10x128xbf16, #tpu.memory_space<vmem>>, vector<1x10x10x128xbf16>
    %1 = vector.shape_cast %0 : vector<1x10x10x128xbf16> to vector<10x10x128xbf16>
    %2 = arith.extf %1 : vector<10x10x128xbf16> to vector<10x10x128xf32>
    %cst = arith.constant 0.000000e+00 : f32
    %3 = vector.broadcast %cst : f32 to vector<64x128xf32>
    %4 = vector.extract_strided_slice %2 {offsets = [0, 0, 0], sizes = [8, 8, 128], strides = [1, 1, 1]} : vector<10x10x128xf32> to vector<8x8x128xf32>
    %5 = vector.shape_cast %4 : vector<8x8x128xf32> to vector<64x128xf32>
    %6 = arith.truncf %5 : vector<64x128xf32> to vector<64x128xbf16>
    %c0_3 = arith.constant 0 : index
    %c0_4 = arith.constant 0 : index
    %c0_5 = arith.constant 0 : index
    %c0_6 = arith.constant 0 : index
    %7 = vector.load %arg2[%c0_3, %c0_4, %c0_5, %c0_6] : memref<3x3x128x128xbf16, #tpu.memory_space<vmem>>, vector<1x1x128x128xbf16>
    %8 = vector.shape_cast %7 : vector<1x1x128x128xbf16> to vector<128x128xbf16>
    %cst_7 = arith.constant dense<0.000000e+00> : vector<64x128xf32>
    %9 = tpu.matmul %6, %8, %cst_7 {dimension_numbers = #tpu.dot_dimension_numbers<[1], [0], [0], [1], [0, 0, 1, 1], [], []>} : vector<64x128xbf16>, vector<128x128xbf16>, vector<64x128xf32> -> vector<64x128xf32>
    %10 = arith.addf %3, %9 : vector<64x128xf32>
    %11 = vector.extract_strided_slice %2 {offsets = [0, 1, 0], sizes = [8, 8, 128], strides = [1, 1, 1]} : vector<10x10x128xf32> to vector<8x8x128xf32>
    %12 = vector.shape_cast %11 : vector<8x8x128xf32> to vector<64x128xf32>
    %13 = arith.truncf %12 : vector<64x128xf32> to vector<64x128xbf16>
    %c0_8 = arith.constant 0 : index
    %c1 = arith.constant 1 : index
    %c0_9 = arith.constant 0 : index
    %c0_10 = arith.constant 0 : index
    %14 = vector.load %arg2[%c0_8, %c1, %c0_9, %c0_10] : memref<3x3x128x128xbf16, #tpu.memory_space<vmem>>, vector<1x1x128x128xbf16>
    %15 = vector.shape_cast %14 : vector<1x1x128x128xbf16> to vector<128x128xbf16>
    %cst_11 = arith.constant dense<0.000000e+00> : vector<64x128xf32>
    %16 = tpu.matmul %13, %15, %cst_11 {dimension_numbers = #tpu.dot_dimension_numbers<[1], [0], [0], [1], [0, 0, 1, 1], [], []>} : vector<64x128xbf16>, vector<128x128xbf16>, vector<64x128xf32> -> vector<64x128xf32>
    %17 = arith.addf %10, %16 : vector<64x128xf32>
    %18 = vector.extract_strided_slice %2 {offsets = [0, 2, 0], sizes = [8, 8, 128], strides = [1, 1, 1]} : vector<10x10x128xf32> to vector<8x8x128xf32>
    %19 = vector.shape_cast %18 : vector<8x8x128xf32> to vector<64x128xf32>
    %20 = arith.truncf %19 : vector<64x128xf32> to vector<64x128xbf16>
    %c0_12 = arith.constant 0 : index
    %c2 = arith.constant 2 : index
    %c0_13 = arith.constant 0 : index
    %c0_14 = arith.constant 0 : index
    %21 = vector.load %arg2[%c0_12, %c2, %c0_13, %c0_14] : memref<3x3x128x128xbf16, #tpu.memory_space<vmem>>, vector<1x1x128x128xbf16>
    %22 = vector.shape_cast %21 : vector<1x1x128x128xbf16> to vector<128x128xbf16>
    %cst_15 = arith.constant dense<0.000000e+00> : vector<64x128xf32>
    %23 = tpu.matmul %20, %22, %cst_15 {dimension_numbers = #tpu.dot_dimension_numbers<[1], [0], [0], [1], [0, 0, 1, 1], [], []>} : vector<64x128xbf16>, vector<128x128xbf16>, vector<64x128xf32> -> vector<64x128xf32>
    %24 = arith.addf %17, %23 : vector<64x128xf32>
    %25 = vector.extract_strided_slice %2 {offsets = [1, 0, 0], sizes = [8, 8, 128], strides = [1, 1, 1]} : vector<10x10x128xf32> to vector<8x8x128xf32>
    %26 = vector.shape_cast %25 : vector<8x8x128xf32> to vector<64x128xf32>
    %27 = arith.truncf %26 : vector<64x128xf32> to vector<64x128xbf16>
    %c1_16 = arith.constant 1 : index
    %c0_17 = arith.constant 0 : index
    %c0_18 = arith.constant 0 : index
    %c0_19 = arith.constant 0 : index
    %28 = vector.load %arg2[%c1_16, %c0_17, %c0_18, %c0_19] : memref<3x3x128x128xbf16, #tpu.memory_space<vmem>>, vector<1x1x128x128xbf16>
    %29 = vector.shape_cast %28 : vector<1x1x128x128xbf16> to vector<128x128xbf16>
    %cst_20 = arith.constant dense<0.000000e+00> : vector<64x128xf32>
    %30 = tpu.matmul %27, %29, %cst_20 {dimension_numbers = #tpu.dot_dimension_numbers<[1], [0], [0], [1], [0, 0, 1, 1], [], []>} : vector<64x128xbf16>, vector<128x128xbf16>, vector<64x128xf32> -> vector<64x128xf32>
    %31 = arith.addf %24, %30 : vector<64x128xf32>
    %32 = vector.extract_strided_slice %2 {offsets = [1, 1, 0], sizes = [8, 8, 128], strides = [1, 1, 1]} : vector<10x10x128xf32> to vector<8x8x128xf32>
    %33 = vector.shape_cast %32 : vector<8x8x128xf32> to vector<64x128xf32>
    %34 = arith.truncf %33 : vector<64x128xf32> to vector<64x128xbf16>
    %c1_21 = arith.constant 1 : index
    %c1_22 = arith.constant 1 : index
    %c0_23 = arith.constant 0 : index
    %c0_24 = arith.constant 0 : index
    %35 = vector.load %arg2[%c1_21, %c1_22, %c0_23, %c0_24] : memref<3x3x128x128xbf16, #tpu.memory_space<vmem>>, vector<1x1x128x128xbf16>
    %36 = vector.shape_cast %35 : vector<1x1x128x128xbf16> to vector<128x128xbf16>
    %cst_25 = arith.constant dense<0.000000e+00> : vector<64x128xf32>
    %37 = tpu.matmul %34, %36, %cst_25 {dimension_numbers = #tpu.dot_dimension_numbers<[1], [0], [0], [1], [0, 0, 1, 1], [], []>} : vector<64x128xbf16>, vector<128x128xbf16>, vector<64x128xf32> -> vector<64x128xf32>
    %38 = arith.addf %31, %37 : vector<64x128xf32>
    %39 = vector.extract_strided_slice %2 {offsets = [1, 2, 0], sizes = [8, 8, 128], strides = [1, 1, 1]} : vector<10x10x128xf32> to vector<8x8x128xf32>
    %40 = vector.shape_cast %39 : vector<8x8x128xf32> to vector<64x128xf32>
    %41 = arith.truncf %40 : vector<64x128xf32> to vector<64x128xbf16>
    %c1_26 = arith.constant 1 : index
    %c2_27 = arith.constant 2 : index
    %c0_28 = arith.constant 0 : index
    %c0_29 = arith.constant 0 : index
    %42 = vector.load %arg2[%c1_26, %c2_27, %c0_28, %c0_29] : memref<3x3x128x128xbf16, #tpu.memory_space<vmem>>, vector<1x1x128x128xbf16>
    %43 = vector.shape_cast %42 : vector<1x1x128x128xbf16> to vector<128x128xbf16>
    %cst_30 = arith.constant dense<0.000000e+00> : vector<64x128xf32>
    %44 = tpu.matmul %41, %43, %cst_30 {dimension_numbers = #tpu.dot_dimension_numbers<[1], [0], [0], [1], [0, 0, 1, 1], [], []>} : vector<64x128xbf16>, vector<128x128xbf16>, vector<64x128xf32> -> vector<64x128xf32>
    %45 = arith.addf %38, %44 : vector<64x128xf32>
    %46 = vector.extract_strided_slice %2 {offsets = [2, 0, 0], sizes = [8, 8, 128], strides = [1, 1, 1]} : vector<10x10x128xf32> to vector<8x8x128xf32>
    %47 = vector.shape_cast %46 : vector<8x8x128xf32> to vector<64x128xf32>
    %48 = arith.truncf %47 : vector<64x128xf32> to vector<64x128xbf16>
    %c2_31 = arith.constant 2 : index
    %c0_32 = arith.constant 0 : index
    %c0_33 = arith.constant 0 : index
    %c0_34 = arith.constant 0 : index
    %49 = vector.load %arg2[%c2_31, %c0_32, %c0_33, %c0_34] : memref<3x3x128x128xbf16, #tpu.memory_space<vmem>>, vector<1x1x128x128xbf16>
    %50 = vector.shape_cast %49 : vector<1x1x128x128xbf16> to vector<128x128xbf16>
    %cst_35 = arith.constant dense<0.000000e+00> : vector<64x128xf32>
    %51 = tpu.matmul %48, %50, %cst_35 {dimension_numbers = #tpu.dot_dimension_numbers<[1], [0], [0], [1], [0, 0, 1, 1], [], []>} : vector<64x128xbf16>, vector<128x128xbf16>, vector<64x128xf32> -> vector<64x128xf32>
    %52 = arith.addf %45, %51 : vector<64x128xf32>
    %53 = vector.extract_strided_slice %2 {offsets = [2, 1, 0], sizes = [8, 8, 128], strides = [1, 1, 1]} : vector<10x10x128xf32> to vector<8x8x128xf32>
    %54 = vector.shape_cast %53 : vector<8x8x128xf32> to vector<64x128xf32>
    %55 = arith.truncf %54 : vector<64x128xf32> to vector<64x128xbf16>
    %c2_36 = arith.constant 2 : index
    %c1_37 = arith.constant 1 : index
    %c0_38 = arith.constant 0 : index
    %c0_39 = arith.constant 0 : index
    %56 = vector.load %arg2[%c2_36, %c1_37, %c0_38, %c0_39] : memref<3x3x128x128xbf16, #tpu.memory_space<vmem>>, vector<1x1x128x128xbf16>
    %57 = vector.shape_cast %56 : vector<1x1x128x128xbf16> to vector<128x128xbf16>
    %cst_40 = arith.constant dense<0.000000e+00> : vector<64x128xf32>
    %58 = tpu.matmul %55, %57, %cst_40 {dimension_numbers = #tpu.dot_dimension_numbers<[1], [0], [0], [1], [0, 0, 1, 1], [], []>} : vector<64x128xbf16>, vector<128x128xbf16>, vector<64x128xf32> -> vector<64x128xf32>
    %59 = arith.addf %52, %58 : vector<64x128xf32>
    %60 = vector.extract_strided_slice %2 {offsets = [2, 2, 0], sizes = [8, 8, 128], strides = [1, 1, 1]} : vector<10x10x128xf32> to vector<8x8x128xf32>
    %61 = vector.shape_cast %60 : vector<8x8x128xf32> to vector<64x128xf32>
    %62 = arith.truncf %61 : vector<64x128xf32> to vector<64x128xbf16>
    %c2_41 = arith.constant 2 : index
    %c2_42 = arith.constant 2 : index
    %c0_43 = arith.constant 0 : index
    %c0_44 = arith.constant 0 : index
    %63 = vector.load %arg2[%c2_41, %c2_42, %c0_43, %c0_44] : memref<3x3x128x128xbf16, #tpu.memory_space<vmem>>, vector<1x1x128x128xbf16>
    %64 = vector.shape_cast %63 : vector<1x1x128x128xbf16> to vector<128x128xbf16>
    %cst_45 = arith.constant dense<0.000000e+00> : vector<64x128xf32>
    %65 = tpu.matmul %62, %64, %cst_45 {dimension_numbers = #tpu.dot_dimension_numbers<[1], [0], [0], [1], [0, 0, 1, 1], [], []>} : vector<64x128xbf16>, vector<128x128xbf16>, vector<64x128xf32> -> vector<64x128xf32>
    %66 = arith.addf %59, %65 : vector<64x128xf32>
    %c0_46 = arith.constant 0 : index
    %c0_47 = arith.constant 0 : index
    %67 = vector.load %arg3[%c0_46, %c0_47] : memref<1x128xf32, #tpu.memory_space<vmem>>, vector<1x128xf32>
    %68 = vector.broadcast %67 : vector<1x128xf32> to vector<64x128xf32>
    %69 = arith.mulf %66, %68 : vector<64x128xf32>
    %c0_48 = arith.constant 0 : index
    %c0_49 = arith.constant 0 : index
    %70 = vector.load %arg4[%c0_48, %c0_49] : memref<1x128xf32, #tpu.memory_space<vmem>>, vector<1x128xf32>
    %71 = vector.broadcast %70 : vector<1x128xf32> to vector<64x128xf32>
    %72 = arith.addf %69, %71 : vector<64x128xf32>
    %cst_50 = arith.constant 0.000000e+00 : f32
    %73 = vector.broadcast %cst_50 : f32 to vector<64x128xf32>
    %74 = arith.maximumf %72, %73 : vector<64x128xf32>
    %75 = arith.truncf %74 : vector<64x128xf32> to vector<64x128xbf16>
    %c0_51 = arith.constant 0 : index
    %c0_52 = arith.constant 0 : index
    %c0_53 = arith.constant 0 : index
    %76 = vector.load %arg5[%c0_51, %c0_52, %c0_53] : memref<1x64x128xbf16, #tpu.memory_space<vmem>>, vector<1x64x128xbf16>
    %77 = vector.shape_cast %76 : vector<1x64x128xbf16> to vector<64x128xbf16>
    %78 = vector.shape_cast %75 : vector<64x128xbf16> to vector<1x64x128xbf16>
    tpu.vector_store %arg5[%c0_51, %c0_52, %c0_53], %78 {strides = array<i32>} : memref<1x64x128xbf16, #tpu.memory_space<vmem>>, vector<1x64x128xbf16>,
    return
  }
  func.func @transform_0(%arg0: i32) -> (i32, i32, i32, i32) {
    %c0_i32 = arith.constant 0 : i32
    %c0_i32_0 = arith.constant 0 : i32
    %c0_i32_1 = arith.constant 0 : i32
    %c0_i32_2 = arith.constant 0 : i32
    return %arg0, %c0_i32, %c0_i32_0, %c0_i32_1 : i32, i32, i32, i32
  }
  func.func @transform_1(%arg0: i32) -> (i32, i32, i32, i32) {
    %c0_i32 = arith.constant 0 : i32
    %c0_i32_0 = arith.constant 0 : i32
    %c0_i32_1 = arith.constant 0 : i32
    %c0_i32_2 = arith.constant 0 : i32
    %c0_i32_3 = arith.constant 0 : i32
    return %c0_i32, %c0_i32_0, %c0_i32_1, %c0_i32_2 : i32, i32, i32, i32
  }
  func.func @transform_2(%arg0: i32) -> (i32, i32) {
    %c0_i32 = arith.constant 0 : i32
    %c0_i32_0 = arith.constant 0 : i32
    %c0_i32_1 = arith.constant 0 : i32
    return %c0_i32, %c0_i32_0 : i32, i32
  }
  func.func @transform_3(%arg0: i32) -> (i32, i32) {
    %c0_i32 = arith.constant 0 : i32
    %c0_i32_0 = arith.constant 0 : i32
    %c0_i32_1 = arith.constant 0 : i32
    return %c0_i32, %c0_i32_0 : i32, i32
  }
  func.func @transform_4(%arg0: i32) -> (i32, i32, i32) {
    %c0_i32 = arith.constant 0 : i32
    %c0_i32_0 = arith.constant 0 : i32
    %c0_i32_1 = arith.constant 0 : i32
    return %arg0, %c0_i32, %c0_i32_0 : i32, i32, i32
  }
}

module attributes {stable_mosaic.version = 11 : i64} {
  func.func @kernel(%arg0: i32, %arg1: memref<1x10x10x128xbf16, #tpu.memory_space<vmem>>, %arg2: memref<3x3x128x128xbf16, #tpu.memory_space<vmem>>, %arg3: memref<1x128xf32, #tpu.memory_space<vmem>>, %arg4: memref<1x128xf32, #tpu.memory_space<vmem>>, %arg5: memref<1x64x128xbf16, #tpu.memory_space<vmem>>, %arg6: memref<1x1x128xf32, #tpu.memory_space<vmem>>) attributes {dimension_semantics = [#tpu.dimension_semantics<parallel>], iteration_bounds = array<i64: 2>, scalar_prefetch = 0 : i64, scratch_operands = 0 : i64, tpu.core_type = #tpu.core_type<tc>, window_params = [{transform_indices = @transform_0, window_bounds = array<i64: 1, 10, 10, 128>}, {pipeline_mode = #tpu.pipeline_mode<synchronous>, transform_indices = @transform_1, window_bounds = array<i64: 3, 3, 128, 128>}, {pipeline_mode = #tpu.pipeline_mode<synchronous>, transform_indices = @transform_2, window_bounds = array<i64: 1, 128>}, {pipeline_mode = #tpu.pipeline_mode<synchronous>, transform_indices = @transform_3, window_bounds = array<i64: 1, 128>}, {transform_indices = @transform_4, window_bounds = array<i64: 1, 64, 128>}, {transform_indices = @transform_5, window_bounds = array<i64: 1, 1, 128>}]} {
    %c0 = arith.constant 0 : index
    %c0_0 = arith.constant 0 : index
    %c0_1 = arith.constant 0 : index
    %c0_2 = arith.constant 0 : index
    %0 = vector.load %arg1[%c0, %c0_0, %c0_1, %c0_2] : memref<1x10x10x128xbf16, #tpu.memory_space<vmem>>, vector<1x10x10x128xbf16>
    %1 = vector.shape_cast %0 : vector<1x10x10x128xbf16> to vector<10x10x128xbf16>
    %2 = arith.extf %1 : vector<10x10x128xbf16> to vector<10x10x128xf32>
    %cst = arith.constant 0.000000e+00 : f32
    %3 = vector.broadcast %cst : f32 to vector<64x128xf32>
    %4 = vector.extract_strided_slice %2 {offsets = [0, 0, 0], sizes = [8, 8, 128], strides = [1, 1, 1]} : vector<10x10x128xf32> to vector<8x8x128xf32>
    %5 = vector.shape_cast %4 : vector<8x8x128xf32> to vector<64x128xf32>
    %6 = arith.truncf %5 : vector<64x128xf32> to vector<64x128xbf16>
    %c0_3 = arith.constant 0 : index
    %c0_4 = arith.constant 0 : index
    %c0_5 = arith.constant 0 : index
    %c0_6 = arith.constant 0 : index
    %7 = vector.load %arg2[%c0_3, %c0_4, %c0_5, %c0_6] : memref<3x3x128x128xbf16, #tpu.memory_space<vmem>>, vector<1x1x128x128xbf16>
    %8 = vector.shape_cast %7 : vector<1x1x128x128xbf16> to vector<128x128xbf16>
    %cst_7 = arith.constant dense<0.000000e+00> : vector<64x128xf32>
    %9 = tpu.matmul %6, %8, %cst_7 {dimension_numbers = #tpu.dot_dimension_numbers<[1], [0], [0], [1], [0, 0, 1, 1], [], []>} : vector<64x128xbf16>, vector<128x128xbf16>, vector<64x128xf32> -> vector<64x128xf32>
    %10 = arith.addf %3, %9 : vector<64x128xf32>
    %11 = vector.extract_strided_slice %2 {offsets = [0, 1, 0], sizes = [8, 8, 128], strides = [1, 1, 1]} : vector<10x10x128xf32> to vector<8x8x128xf32>
    %12 = vector.shape_cast %11 : vector<8x8x128xf32> to vector<64x128xf32>
    %13 = arith.truncf %12 : vector<64x128xf32> to vector<64x128xbf16>
    %c0_8 = arith.constant 0 : index
    %c1 = arith.constant 1 : index
    %c0_9 = arith.constant 0 : index
    %c0_10 = arith.constant 0 : index
    %14 = vector.load %arg2[%c0_8, %c1, %c0_9, %c0_10] : memref<3x3x128x128xbf16, #tpu.memory_space<vmem>>, vector<1x1x128x128xbf16>
    %15 = vector.shape_cast %14 : vector<1x1x128x128xbf16> to vector<128x128xbf16>
    %cst_11 = arith.constant dense<0.000000e+00> : vector<64x128xf32>
    %16 = tpu.matmul %13, %15, %cst_11 {dimension_numbers = #tpu.dot_dimension_numbers<[1], [0], [0], [1], [0, 0, 1, 1], [], []>} : vector<64x128xbf16>, vector<128x128xbf16>, vector<64x128xf32> -> vector<64x128xf32>
    %17 = arith.addf %10, %16 : vector<64x128xf32>
    %18 = vector.extract_strided_slice %2 {offsets = [0, 2, 0], sizes = [8, 8, 128], strides = [1, 1, 1]} : vector<10x10x128xf32> to vector<8x8x128xf32>
    %19 = vector.shape_cast %18 : vector<8x8x128xf32> to vector<64x128xf32>
    %20 = arith.truncf %19 : vector<64x128xf32> to vector<64x128xbf16>
    %c0_12 = arith.constant 0 : index
    %c2 = arith.constant 2 : index
    %c0_13 = arith.constant 0 : index
    %c0_14 = arith.constant 0 : index
    %21 = vector.load %arg2[%c0_12, %c2, %c0_13, %c0_14] : memref<3x3x128x128xbf16, #tpu.memory_space<vmem>>, vector<1x1x128x128xbf16>
    %22 = vector.shape_cast %21 : vector<1x1x128x128xbf16> to vector<128x128xbf16>
    %cst_15 = arith.constant dense<0.000000e+00> : vector<64x128xf32>
    %23 = tpu.matmul %20, %22, %cst_15 {dimension_numbers = #tpu.dot_dimension_numbers<[1], [0], [0], [1], [0, 0, 1, 1], [], []>} : vector<64x128xbf16>, vector<128x128xbf16>, vector<64x128xf32> -> vector<64x128xf32>
    %24 = arith.addf %17, %23 : vector<64x128xf32>
    %25 = vector.extract_strided_slice %2 {offsets = [1, 0, 0], sizes = [8, 8, 128], strides = [1, 1, 1]} : vector<10x10x128xf32> to vector<8x8x128xf32>
    %26 = vector.shape_cast %25 : vector<8x8x128xf32> to vector<64x128xf32>
    %27 = arith.truncf %26 : vector<64x128xf32> to vector<64x128xbf16>
    %c1_16 = arith.constant 1 : index
    %c0_17 = arith.constant 0 : index
    %c0_18 = arith.constant 0 : index
    %c0_19 = arith.constant 0 : index
    %28 = vector.load %arg2[%c1_16, %c0_17, %c0_18, %c0_19] : memref<3x3x128x128xbf16, #tpu.memory_space<vmem>>, vector<1x1x128x128xbf16>
    %29 = vector.shape_cast %28 : vector<1x1x128x128xbf16> to vector<128x128xbf16>
    %cst_20 = arith.constant dense<0.000000e+00> : vector<64x128xf32>
    %30 = tpu.matmul %27, %29, %cst_20 {dimension_numbers = #tpu.dot_dimension_numbers<[1], [0], [0], [1], [0, 0, 1, 1], [], []>} : vector<64x128xbf16>, vector<128x128xbf16>, vector<64x128xf32> -> vector<64x128xf32>
    %31 = arith.addf %24, %30 : vector<64x128xf32>
    %32 = vector.extract_strided_slice %2 {offsets = [1, 1, 0], sizes = [8, 8, 128], strides = [1, 1, 1]} : vector<10x10x128xf32> to vector<8x8x128xf32>
    %33 = vector.shape_cast %32 : vector<8x8x128xf32> to vector<64x128xf32>
    %34 = arith.truncf %33 : vector<64x128xf32> to vector<64x128xbf16>
    %c1_21 = arith.constant 1 : index
    %c1_22 = arith.constant 1 : index
    %c0_23 = arith.constant 0 : index
    %c0_24 = arith.constant 0 : index
    %35 = vector.load %arg2[%c1_21, %c1_22, %c0_23, %c0_24] : memref<3x3x128x128xbf16, #tpu.memory_space<vmem>>, vector<1x1x128x128xbf16>
    %36 = vector.shape_cast %35 : vector<1x1x128x128xbf16> to vector<128x128xbf16>
    %cst_25 = arith.constant dense<0.000000e+00> : vector<64x128xf32>
    %37 = tpu.matmul %34, %36, %cst_25 {dimension_numbers = #tpu.dot_dimension_numbers<[1], [0], [0], [1], [0, 0, 1, 1], [], []>} : vector<64x128xbf16>, vector<128x128xbf16>, vector<64x128xf32> -> vector<64x128xf32>
    %38 = arith.addf %31, %37 : vector<64x128xf32>
    %39 = vector.extract_strided_slice %2 {offsets = [1, 2, 0], sizes = [8, 8, 128], strides = [1, 1, 1]} : vector<10x10x128xf32> to vector<8x8x128xf32>
    %40 = vector.shape_cast %39 : vector<8x8x128xf32> to vector<64x128xf32>
    %41 = arith.truncf %40 : vector<64x128xf32> to vector<64x128xbf16>
    %c1_26 = arith.constant 1 : index
    %c2_27 = arith.constant 2 : index
    %c0_28 = arith.constant 0 : index
    %c0_29 = arith.constant 0 : index
    %42 = vector.load %arg2[%c1_26, %c2_27, %c0_28, %c0_29] : memref<3x3x128x128xbf16, #tpu.memory_space<vmem>>, vector<1x1x128x128xbf16>
    %43 = vector.shape_cast %42 : vector<1x1x128x128xbf16> to vector<128x128xbf16>
    %cst_30 = arith.constant dense<0.000000e+00> : vector<64x128xf32>
    %44 = tpu.matmul %41, %43, %cst_30 {dimension_numbers = #tpu.dot_dimension_numbers<[1], [0], [0], [1], [0, 0, 1, 1], [], []>} : vector<64x128xbf16>, vector<128x128xbf16>, vector<64x128xf32> -> vector<64x128xf32>
    %45 = arith.addf %38, %44 : vector<64x128xf32>
    %46 = vector.extract_strided_slice %2 {offsets = [2, 0, 0], sizes = [8, 8, 128], strides = [1, 1, 1]} : vector<10x10x128xf32> to vector<8x8x128xf32>
    %47 = vector.shape_cast %46 : vector<8x8x128xf32> to vector<64x128xf32>
    %48 = arith.truncf %47 : vector<64x128xf32> to vector<64x128xbf16>
    %c2_31 = arith.constant 2 : index
    %c0_32 = arith.constant 0 : index
    %c0_33 = arith.constant 0 : index
    %c0_34 = arith.constant 0 : index
    %49 = vector.load %arg2[%c2_31, %c0_32, %c0_33, %c0_34] : memref<3x3x128x128xbf16, #tpu.memory_space<vmem>>, vector<1x1x128x128xbf16>
    %50 = vector.shape_cast %49 : vector<1x1x128x128xbf16> to vector<128x128xbf16>
    %cst_35 = arith.constant dense<0.000000e+00> : vector<64x128xf32>
    %51 = tpu.matmul %48, %50, %cst_35 {dimension_numbers = #tpu.dot_dimension_numbers<[1], [0], [0], [1], [0, 0, 1, 1], [], []>} : vector<64x128xbf16>, vector<128x128xbf16>, vector<64x128xf32> -> vector<64x128xf32>
    %52 = arith.addf %45, %51 : vector<64x128xf32>
    %53 = vector.extract_strided_slice %2 {offsets = [2, 1, 0], sizes = [8, 8, 128], strides = [1, 1, 1]} : vector<10x10x128xf32> to vector<8x8x128xf32>
    %54 = vector.shape_cast %53 : vector<8x8x128xf32> to vector<64x128xf32>
    %55 = arith.truncf %54 : vector<64x128xf32> to vector<64x128xbf16>
    %c2_36 = arith.constant 2 : index
    %c1_37 = arith.constant 1 : index
    %c0_38 = arith.constant 0 : index
    %c0_39 = arith.constant 0 : index
    %56 = vector.load %arg2[%c2_36, %c1_37, %c0_38, %c0_39] : memref<3x3x128x128xbf16, #tpu.memory_space<vmem>>, vector<1x1x128x128xbf16>
    %57 = vector.shape_cast %56 : vector<1x1x128x128xbf16> to vector<128x128xbf16>
    %cst_40 = arith.constant dense<0.000000e+00> : vector<64x128xf32>
    %58 = tpu.matmul %55, %57, %cst_40 {dimension_numbers = #tpu.dot_dimension_numbers<[1], [0], [0], [1], [0, 0, 1, 1], [], []>} : vector<64x128xbf16>, vector<128x128xbf16>, vector<64x128xf32> -> vector<64x128xf32>
    %59 = arith.addf %52, %58 : vector<64x128xf32>
    %60 = vector.extract_strided_slice %2 {offsets = [2, 2, 0], sizes = [8, 8, 128], strides = [1, 1, 1]} : vector<10x10x128xf32> to vector<8x8x128xf32>
    %61 = vector.shape_cast %60 : vector<8x8x128xf32> to vector<64x128xf32>
    %62 = arith.truncf %61 : vector<64x128xf32> to vector<64x128xbf16>
    %c2_41 = arith.constant 2 : index
    %c2_42 = arith.constant 2 : index
    %c0_43 = arith.constant 0 : index
    %c0_44 = arith.constant 0 : index
    %63 = vector.load %arg2[%c2_41, %c2_42, %c0_43, %c0_44] : memref<3x3x128x128xbf16, #tpu.memory_space<vmem>>, vector<1x1x128x128xbf16>
    %64 = vector.shape_cast %63 : vector<1x1x128x128xbf16> to vector<128x128xbf16>
    %cst_45 = arith.constant dense<0.000000e+00> : vector<64x128xf32>
    %65 = tpu.matmul %62, %64, %cst_45 {dimension_numbers = #tpu.dot_dimension_numbers<[1], [0], [0], [1], [0, 0, 1, 1], [], []>} : vector<64x128xbf16>, vector<128x128xbf16>, vector<64x128xf32> -> vector<64x128xf32>
    %66 = arith.addf %59, %65 : vector<64x128xf32>
    %c0_46 = arith.constant 0 : index
    %c0_47 = arith.constant 0 : index
    %67 = vector.load %arg3[%c0_46, %c0_47] : memref<1x128xf32, #tpu.memory_space<vmem>>, vector<1x128xf32>
    %68 = vector.broadcast %67 : vector<1x128xf32> to vector<64x128xf32>
    %69 = arith.mulf %66, %68 : vector<64x128xf32>
    %c0_48 = arith.constant 0 : index
    %c0_49 = arith.constant 0 : index
    %70 = vector.load %arg4[%c0_48, %c0_49] : memref<1x128xf32, #tpu.memory_space<vmem>>, vector<1x128xf32>
    %71 = vector.broadcast %70 : vector<1x128xf32> to vector<64x128xf32>
    %72 = arith.addf %69, %71 : vector<64x128xf32>
    %73 = arith.truncf %72 : vector<64x128xf32> to vector<64x128xbf16>
    %c0_50 = arith.constant 0 : index
    %c0_51 = arith.constant 0 : index
    %c0_52 = arith.constant 0 : index
    %74 = vector.load %arg5[%c0_50, %c0_51, %c0_52] : memref<1x64x128xbf16, #tpu.memory_space<vmem>>, vector<1x64x128xbf16>
    %75 = vector.shape_cast %74 : vector<1x64x128xbf16> to vector<64x128xbf16>
    %76 = vector.shape_cast %73 : vector<64x128xbf16> to vector<1x64x128xbf16>
    tpu.vector_store %arg5[%c0_50, %c0_51, %c0_52], %76 {strides = array<i32>} : memref<1x64x128xbf16, #tpu.memory_space<vmem>>, vector<1x64x128xbf16>,
    %cst_53 = arith.constant dense<0.000000e+00> : vector<128xf32>
    %77 = vector.multi_reduction <add>, %72, %cst_53 [0] : vector<64x128xf32> to vector<128xf32>
    %78 = vector.shape_cast %77 : vector<128xf32> to vector<1x128xf32>
    %c0_54 = arith.constant 0 : index
    %c0_55 = arith.constant 0 : index
    %c0_56 = arith.constant 0 : index
    %79 = vector.load %arg6[%c0_54, %c0_55, %c0_56] : memref<1x1x128xf32, #tpu.memory_space<vmem>>, vector<1x1x128xf32>
    %80 = vector.shape_cast %79 : vector<1x1x128xf32> to vector<1x128xf32>
    %81 = vector.shape_cast %78 : vector<1x128xf32> to vector<1x1x128xf32>
    tpu.vector_store %arg6[%c0_54, %c0_55, %c0_56], %81 {strides = array<i32>} : memref<1x1x128xf32, #tpu.memory_space<vmem>>, vector<1x1x128xf32>,
    return
  }
  func.func @transform_0(%arg0: i32) -> (i32, i32, i32, i32) {
    %c0_i32 = arith.constant 0 : i32
    %c0_i32_0 = arith.constant 0 : i32
    %c0_i32_1 = arith.constant 0 : i32
    %c0_i32_2 = arith.constant 0 : i32
    return %arg0, %c0_i32, %c0_i32_0, %c0_i32_1 : i32, i32, i32, i32
  }
  func.func @transform_1(%arg0: i32) -> (i32, i32, i32, i32) {
    %c0_i32 = arith.constant 0 : i32
    %c0_i32_0 = arith.constant 0 : i32
    %c0_i32_1 = arith.constant 0 : i32
    %c0_i32_2 = arith.constant 0 : i32
    %c0_i32_3 = arith.constant 0 : i32
    return %c0_i32, %c0_i32_0, %c0_i32_1, %c0_i32_2 : i32, i32, i32, i32
  }
  func.func @transform_2(%arg0: i32) -> (i32, i32) {
    %c0_i32 = arith.constant 0 : i32
    %c0_i32_0 = arith.constant 0 : i32
    %c0_i32_1 = arith.constant 0 : i32
    return %c0_i32, %c0_i32_0 : i32, i32
  }
  func.func @transform_3(%arg0: i32) -> (i32, i32) {
    %c0_i32 = arith.constant 0 : i32
    %c0_i32_0 = arith.constant 0 : i32
    %c0_i32_1 = arith.constant 0 : i32
    return %c0_i32, %c0_i32_0 : i32, i32
  }
  func.func @transform_4(%arg0: i32) -> (i32, i32, i32) {
    %c0_i32 = arith.constant 0 : i32
    %c0_i32_0 = arith.constant 0 : i32
    %c0_i32_1 = arith.constant 0 : i32
    return %arg0, %c0_i32, %c0_i32_0 : i32, i32, i32
  }
  func.func @transform_5(%arg0: i32) -> (i32, i32, i32) {
    %c0_i32 = arith.constant 0 : i32
    %c0_i32_0 = arith.constant 0 : i32
    %c0_i32_1 = arith.constant 0 : i32
    return %arg0, %c0_i32, %c0_i32_0 : i32, i32, i32
  }
}

module attributes {stable_mosaic.version = 11 : i64} {
  func.func @kernel(%arg0: i32, %arg1: i32, %arg2: memref<1x64x128xbf16, #tpu.memory_space<vmem>>, %arg3: memref<1x64x128xf32, #tpu.memory_space<vmem>>, %arg4: memref<1x1x128xf32, #tpu.memory_space<vmem>>, %arg5: memref<1x64x128xf32, #tpu.memory_space<vmem>>) attributes {dimension_semantics = [#tpu.dimension_semantics<parallel>, #tpu.dimension_semantics<parallel>], iteration_bounds = array<i64: 2, 1>, scalar_prefetch = 0 : i64, scratch_operands = 0 : i64, tpu.core_type = #tpu.core_type<tc>, window_params = [{transform_indices = @transform_0, window_bounds = array<i64: 1, 64, 128>}, {transform_indices = @transform_1, window_bounds = array<i64: 1, 64, 128>}, {transform_indices = @transform_2, window_bounds = array<i64: 1, 1, 128>}, {transform_indices = @transform_3, window_bounds = array<i64: 1, 64, 128>}]} {
    %c0 = arith.constant 0 : index
    %c0_0 = arith.constant 0 : index
    %c0_1 = arith.constant 0 : index
    %0 = vector.load %arg2[%c0, %c0_0, %c0_1] : memref<1x64x128xbf16, #tpu.memory_space<vmem>>, vector<1x64x128xbf16>
    %1 = vector.shape_cast %0 : vector<1x64x128xbf16> to vector<64x128xbf16>
    %2 = arith.extf %1 : vector<64x128xbf16> to vector<64x128xf32>
    %c0_2 = arith.constant 0 : index
    %c0_3 = arith.constant 0 : index
    %c0_4 = arith.constant 0 : index
    %3 = vector.load %arg4[%c0_2, %c0_3, %c0_4] : memref<1x1x128xf32, #tpu.memory_space<vmem>>, vector<1x1x128xf32>
    %4 = vector.shape_cast %3 : vector<1x1x128xf32> to vector<1x128xf32>
    %5 = vector.broadcast %4 : vector<1x128xf32> to vector<64x128xf32>
    %6 = arith.mulf %2, %5 : vector<64x128xf32>
    %c0_5 = arith.constant 0 : index
    %c0_6 = arith.constant 0 : index
    %c0_7 = arith.constant 0 : index
    %7 = vector.load %arg3[%c0_5, %c0_6, %c0_7] : memref<1x64x128xf32, #tpu.memory_space<vmem>>, vector<1x64x128xf32>
    %8 = vector.shape_cast %7 : vector<1x64x128xf32> to vector<64x128xf32>
    %9 = arith.addf %6, %8 : vector<64x128xf32>
    %cst = arith.constant 0.000000e+00 : f32
    %10 = vector.broadcast %cst : f32 to vector<64x128xf32>
    %11 = arith.maximumf %9, %10 : vector<64x128xf32>
    %c0_8 = arith.constant 0 : index
    %c0_9 = arith.constant 0 : index
    %c0_10 = arith.constant 0 : index
    %12 = vector.load %arg5[%c0_8, %c0_9, %c0_10] : memref<1x64x128xf32, #tpu.memory_space<vmem>>, vector<1x64x128xf32>
    %13 = vector.shape_cast %12 : vector<1x64x128xf32> to vector<64x128xf32>
    %14 = vector.shape_cast %11 : vector<64x128xf32> to vector<1x64x128xf32>
    tpu.vector_store %arg5[%c0_8, %c0_9, %c0_10], %14 {strides = array<i32>} : memref<1x64x128xf32, #tpu.memory_space<vmem>>, vector<1x64x128xf32>,
    return
  }
  func.func @transform_0(%arg0: i32, %arg1: i32) -> (i32, i32, i32) {
    %c0_i32 = arith.constant 0 : i32
    %c0_i32_0 = arith.constant 0 : i32
    return %arg0, %arg1, %c0_i32 : i32, i32, i32
  }
  func.func @transform_1(%arg0: i32, %arg1: i32) -> (i32, i32, i32) {
    %c0_i32 = arith.constant 0 : i32
    %c0_i32_0 = arith.constant 0 : i32
    return %arg0, %arg1, %c0_i32 : i32, i32, i32
  }
  func.func @transform_2(%arg0: i32, %arg1: i32) -> (i32, i32, i32) {
    %c0_i32 = arith.constant 0 : i32
    %c0_i32_0 = arith.constant 0 : i32
    %c0_i32_1 = arith.constant 0 : i32
    return %arg0, %c0_i32, %c0_i32_0 : i32, i32, i32
  }
  func.func @transform_3(%arg0: i32, %arg1: i32) -> (i32, i32, i32) {
    %c0_i32 = arith.constant 0 : i32
    %c0_i32_0 = arith.constant 0 : i32
    return %arg0, %arg1, %c0_i32 : i32, i32, i32
  }
}

</mosaic_0001>

<llo_original>
// kernel: tile.28
$region0: #{tile.28}
  #allocation0 [shape = 's32[1]{0}', space=sflag, size = 0x4, scoped, tag = 'scoped memory for tile.28']
  %s0 = inlined_call_operand.vmem [shape: f32[16], index: 0, kind: input, shape index: {}]
  %s1 = inlined_call_operand.vmem [shape: f32[8,16], index: 1, kind: output, shape index: {}]
  // Predicated region
  $region2: #{tile.28} parent=0 // pred_check
    _
  $region3: #{tile.28} parent=0 // pred_check_branch
    %3 = sbr.rel (0) target = $region5
  $region4: #{tile.28} parent=0 // pred_region
    _
  $region5: #{tile.28} parent=0 // pred_fallthru
    _
  %v4 = vld [vmem:[%s0] ss:$0 sm:$0xff]
  %5 = vst [vmem:[%s1] sm:$0xff] %v4

// kernel: tile.29
$region0: #{tile.29}
  %s0 = inlined_call_operand.vmem [shape: f32[8,16], index: 0, kind: input, shape index: {}]
  %s1 = inlined_call_operand.vmem [shape: f32[1,128], index: 1, kind: output, shape index: {}]
  $region1: #{tile.29} parent=0
    #allocation0 [shape = 'u8[4096]{0}', space=vmem, size = 0x1000, scoped, tag = 'scoped mem for output reshape']
    %v2 = vld [vmem:[%s0] sm:$0x1]
    %vm3 = vcmask 130048
    %4 = vst.msk [vmem:[#allocation0] sm:$0x1] %vm3, %v2
    %s5 = scalar_lea.vmem %s0, 7
    %v6 = vld [vmem:[%s5] sm:$0x1]
    %7 = vrot.lane.b32.xlu0 %v6, 112
    %v8 = vpop.permute.xlu0 %7
    %vm9 = vcmask 1048448
    %10 = vst.msk [vmem:[#allocation0] sm:$0x1] %vm9, %v8
    %s11 = scalar_lea.vmem %s0, 6
    %v12 = vld [vmem:[%s11] sm:$0x1]
    %13 = vrot.lane.b32.xlu0 %v12, 96
    %v14 = vpop.permute.xlu0 %13
    %vm15 = vcmask 917248
    %16 = vst.msk [vmem:[#allocation0] sm:$0x1] %vm15, %v14
    %s17 = scalar_lea.vmem %s0, 5
    %v18 = vld [vmem:[%s17] sm:$0x1]
    %19 = vrot.lane.b32.xlu0 %v18, 80
    %v20 = vpop.permute.xlu0 %19
    %vm21 = vcmask 786048
    %22 = vst.msk [vmem:[#allocation0] sm:$0x1] %vm21, %v20
    %s23 = scalar_lea.vmem %s0, 4
    %v24 = vld [vmem:[%s23] sm:$0x1]
    %25 = vrot.lane.b32.xlu0 %v24, 64
    %v26 = vpop.permute.xlu0 %25
    %vm27 = vcmask 654848
    %28 = vst.msk [vmem:[#allocation0] sm:$0x1] %vm27, %v26
    %s29 = scalar_lea.vmem %s0, 3
    %v30 = vld [vmem:[%s29] sm:$0x1]
    %31 = vrot.lane.b32.xlu0 %v30, 48
    %v32 = vpop.permute.xlu0 %31
    %vm33 = vcmask 523648
    %34 = vst.msk [vmem:[#allocation0] sm:$0x1] %vm33, %v32
    %s35 = scalar_lea.vmem %s0, 2
    %v36 = vld [vmem:[%s35] sm:$0x1]
    %37 = vrot.lane.b32.xlu0 %v36, 32
    %v38 = vpop.permute.xlu0 %37
    %vm39 = vcmask 392448
    %40 = vst.msk [vmem:[#allocation0] sm:$0x1] %vm39, %v38
    %s41 = scalar_lea.vmem %s0, 1
    %v42 = vld [vmem:[%s41] sm:$0x1]
    %43 = vrot.lane.b32.xlu0 %v42, 16
    %v44 = vpop.permute.xlu0 %43
    %vm45 = vcmask 261248
    %46 = vst.msk [vmem:[#allocation0] sm:$0x1] %vm45, %v44
    %s48 = ssub.s32 2, 1
    %v49 = vld [vmem:[#allocation0] sm:%s48]
    %s51 = ssub.s32 2, 1
    %52 = vst [vmem:[%s1] sm:%s51] %v49

// kernel: residual_block_forward.3
$region0: #{residual_block_forward.3}
  #allocation0 [shape = 'u32[]', space=smem, size = 0x4, offset = 0x4, fixed_abs, tag = 'smem constant byte address 0x4 - core index']
  #allocation1 [shape = 'u32[72,128]{1,0:T(1,128)}', space=vmem, size = 0x9000, scoped, tag = 'internal scratch']
  %s0 = inlined_call_operand.vmem [shape: bf16[2,10,10,128], index: 0, kind: input, shape index: {}]
  %s1 = inlined_call_operand.vmem [shape: bf16[3,3,128,128], index: 1, kind: input, shape index: {}]
  %s2 = inlined_call_operand.vmem [shape: f32[1,128], index: 2, kind: input, shape index: {}]
  %s3 = inlined_call_operand.vmem [shape: f32[1,128], index: 3, kind: input, shape index: {}]
  %s4 = inlined_call_operand.vmem [shape: bf16[2,64,128], index: 4, kind: output, shape index: {}]
  %s5 = sld [smem:[#allocation0]]
  $region49: #{residual_block_forward.3} parent=0
    _
  %s7 = ssub.s32 1, %s5
  %s8 = scalar_select 0, %s7, %s5
  loop: start=0, step=1, limit=4
  $region2: #{residual_block_forward.3} parent=0 // loop_pre_header
    _
  $region3: #{residual_block_forward.3} parent=0 // loop_header
    %s10 = sphi 0, %s14
    %p11 = scmp.ge.s32.totalorder %s10, 4
    %s20 = sphi 0, %s22
    %s23 = sphi 0, %s20
    %s24 = sphi 0, %s23
    %s40 = sphi 0, %s24
    %s44 = sphi 0, %s44
    %s46 = sphi 0, %s44
    %s47 = sphi 0, %s46
    %s61 = sphi 0, %s47
    %s65 = sphi 0, %s65
    %s67 = sphi 0, %s65
    %s68 = sphi 0, %s67
    %s82 = sphi 0, %s68
    %s86 = sphi 0, %s86
    %s88 = sphi 0, %s86
    %s89 = sphi 0, %s88
    %s103 = sphi 0, %s89
    %s109 = sphi 0, %s111
    %s112 = sphi 0, %s109
    %s113 = sphi 0, %s112
    %s129 = sphi 0, %s113
  $region4: #{residual_block_forward.3} parent=0 // loop_header_branch
    %13 = sbr.rel (%p11) target = $region8
  $region5: #{residual_block_forward.3} parent=0 // loop_body
    %s15 = ssub.s32 %s10, 1
    %s16 = ssub.s32 %s10, 2
    %s17 = sadd.s32 %s10, 1
    %s18 = ssub.s32 %s10, %s17
    %p19 = scmp.eq.s32.totalorder %s18, 0
    %s21 = sadd.s32 %s20, 1
    %s22 = scalar_select %p19, %s20, %s21
    %p25 = pneg %p19
    %p26 = scmp.eq.s32.totalorder %s10, 1
    %p27 = por %p25, %p26
    %p28 = scmp.ne.s32.totalorder %s20, %s23
    %p29 = scmp.eq.s32.totalorder %s10, 0
    %p30 = por %p28, %p29
    %p31 = scmp.ne.s32.totalorder %s20, %s23
    %p32 = scmp.eq.s32.totalorder %s15, 1
    %p33 = por %p31, %p32
    %p34 = scmp.ne.s32.totalorder %s23, %s24
    %p35 = scmp.eq.s32.totalorder %s15, 0
    %p36 = por %p34, %p35
    %p37 = scmp.ne.s32.totalorder %s23, %s24
    %p38 = scmp.eq.s32.totalorder %s16, 1
    %p39 = por %p37, %p38
    %p41 = scmp.ne.s32.totalorder %s24, %s40
    %p42 = scmp.eq.s32.totalorder %s16, 0
    %p43 = por %p41, %p42
    %s45 = sadd.s32 %s44, 1
    %p48 = scmp.eq.s32.totalorder %s10, 1
    %p49 = scmp.ne.s32.totalorder %s44, %s46
    %p50 = scmp.eq.s32.totalorder %s10, 0
    %p51 = por %p49, %p50
    %p52 = scmp.ne.s32.totalorder %s44, %s46
    %p53 = scmp.eq.s32.totalorder %s15, 1
    %p54 = por %p52, %p53
    %p55 = scmp.ne.s32.totalorder %s46, %s47
    %p56 = scmp.eq.s32.totalorder %s15, 0
    %p57 = por %p55, %p56
    %p58 = scmp.ne.s32.totalorder %s46, %s47
    %p59 = scmp.eq.s32.totalorder %s16, 1
    %p60 = por %p58, %p59
    %p62 = scmp.ne.s32.totalorder %s47, %s61
    %p63 = scmp.eq.s32.totalorder %s16, 0
    %p64 = por %p62, %p63
    %s66 = sadd.s32 %s65, 1
    %p69 = scmp.eq.s32.totalorder %s10, 1
    %p70 = scmp.ne.s32.totalorder %s65, %s67
    %p71 = scmp.eq.s32.totalorder %s10, 0
    %p72 = por %p70, %p71
    %p73 = scmp.ne.s32.totalorder %s65, %s67
    %p74 = scmp.eq.s32.totalorder %s15, 1
    %p75 = por %p73, %p74
    %p76 = scmp.ne.s32.totalorder %s67, %s68
    %p77 = scmp.eq.s32.totalorder %s15, 0
    %p78 = por %p76, %p77
    %p79 = scmp.ne.s32.totalorder %s67, %s68
    %p80 = scmp.eq.s32.totalorder %s16, 1
    %p81 = por %p79, %p80
    %p83 = scmp.ne.s32.totalorder %s68, %s82
    %p84 = scmp.eq.s32.totalorder %s16, 0
    %p85 = por %p83, %p84
    %s87 = sadd.s32 %s86, 1
    %p90 = scmp.eq.s32.totalorder %s10, 1
    %p91 = scmp.ne.s32.totalorder %s86, %s88
    %p92 = scmp.eq.s32.totalorder %s10, 0
    %p93 = por %p91, %p92
    %p94 = scmp.ne.s32.totalorder %s86, %s88
    %p95 = scmp.eq.s32.totalorder %s15, 1
    %p96 = por %p94, %p95
    %p97 = scmp.ne.s32.totalorder %s88, %s89
    %p98 = scmp.eq.s32.totalorder %s15, 0
    %p99 = por %p97, %p98
    %p100 = scmp.ne.s32.totalorder %s88, %s89
    %p101 = scmp.eq.s32.totalorder %s16, 1
    %p102 = por %p100, %p101
    %p104 = scmp.ne.s32.totalorder %s89, %s103
    %p105 = scmp.eq.s32.totalorder %s16, 0
    %p106 = por %p104, %p105
    %s107 = ssub.s32 %s10, %s17
    %p108 = scmp.eq.s32.totalorder %s107, 0
    %s110 = sadd.s32 %s109, 1
    %s111 = scalar_select %p108, %s109, %s110
    %p114 = pneg %p108
    %p115 = scmp.eq.s32.totalorder %s10, 1
    %p116 = por %p114, %p115
    %p117 = scmp.ne.s32.totalorder %s109, %s112
    %p118 = scmp.eq.s32.totalorder %s10, 0
    %p119 = por %p117, %p118
    %p120 = scmp.ne.s32.totalorder %s109, %s112
    %p121 = scmp.eq.s32.totalorder %s15, 1
    %p122 = por %p120, %p121
    %p123 = scmp.ne.s32.totalorder %s112, %s113
    %p124 = scmp.eq.s32.totalorder %s15, 0
    %p125 = por %p123, %p124
    %p126 = scmp.ne.s32.totalorder %s112, %s113
    %p127 = scmp.eq.s32.totalorder %s16, 1
    %p128 = por %p126, %p127
    %p130 = scmp.ne.s32.totalorder %s113, %s129
    %p131 = scmp.eq.s32.totalorder %s16, 0
    %p132 = por %p130, %p131
    %p133 = scmp.le.s32.totalorder 1, %s10
    %p134 = scmp.lt.s32.totalorder %s10, 3
    %p135 = pnand %p133, %p134
    %p136 = pneg %p135
    // Predicated region
    $region9: #{residual_block_forward.3} parent=5 // pred_check
      _
    $region10: #{residual_block_forward.3} parent=5 // pred_check_branch
      %138 = sbr.rel (%p135) target = $region12
    $region11: #{residual_block_forward.3} parent=5 // pred_region
      %s139 = ssub.s32 %s10, 1
      // Predicated region
      $region13: #{residual_block_forward.3} parent=11 // pred_check
        %p140 = pneg %p57
      $region14: #{residual_block_forward.3} parent=11 // pred_check_branch
        %142 = sbr.rel (%p140) target = $region16
      $region15: #{residual_block_forward.3} parent=11 // pred_region
        _
      $region16: #{residual_block_forward.3} parent=11 // pred_fallthru
        _
      // Predicated region
      $region17: #{residual_block_forward.3} parent=11 // pred_check
        %p143 = pneg %p78
      $region18: #{residual_block_forward.3} parent=11 // pred_check_branch
        %145 = sbr.rel (%p143) target = $region20
      $region19: #{residual_block_forward.3} parent=11 // pred_region
        _
      $region20: #{residual_block_forward.3} parent=11 // pred_fallthru
        _
      // Predicated region
      $region21: #{residual_block_forward.3} parent=11 // pred_check
        %p146 = pneg %p99
      $region22: #{residual_block_forward.3} parent=11 // pred_check_branch
        %148 = sbr.rel (%p146) target = $region24
      $region23: #{residual_block_forward.3} parent=11 // pred_region
        _
      $region24: #{residual_block_forward.3} parent=11 // pred_fallthru
        _
    $region12: #{residual_block_forward.3} parent=5 // pred_fallthru
      _
    %p149 = scmp.lt.s32.totalorder %s10, 2
    // Predicated region
    $region25: #{residual_block_forward.3} parent=5 // pred_check
      %p150 = pneg %p149
    $region26: #{residual_block_forward.3} parent=5 // pred_check_branch
      %152 = sbr.rel (%p150) target = $region28
    $region27: #{residual_block_forward.3} parent=5 // pred_region
      // Predicated region
      $region29: #{residual_block_forward.3} parent=27 // pred_check
        %p153 = pneg %p30
      $region30: #{residual_block_forward.3} parent=27 // pred_check_branch
        %155 = sbr.rel (%p153) target = $region32
      $region31: #{residual_block_forward.3} parent=27 // pred_region
        %p156 = scmp.lt.s32.totalorder %s10, 1
        %s157 = scalar_select %p156, %s10, 1
        %s158 = smul.addr %s157, 20
        %s159 = smul.addr %s158, 4
        %s160 = scalar_lea.vmem %s0, %s159
      $region32: #{residual_block_forward.3} parent=27 // pred_fallthru
        _
    $region28: #{residual_block_forward.3} parent=5 // pred_fallthru
      _
    %p161 = scmp.le.s32.totalorder 1, %s10
    %p162 = scmp.lt.s32.totalorder %s10, 3
    %p163 = pnand %p161, %p162
    %p164 = pneg %p163
    // Predicated region
    $region33: #{residual_block_forward.3} parent=5 // pred_check
      _
    $region34: #{residual_block_forward.3} parent=5 // pred_check_branch
      %166 = sbr.rel (%p163) target = $region36
    $region35: #{residual_block_forward.3} parent=5 // pred_region
      %s167 = ssub.s32 %s10, 1
      %p168 = scmp.lt.s32.totalorder %s15, 1
      %s169 = scalar_select %p168, %s15, 1
      %s170 = smul.addr %s169, 20
      %s171 = smul.addr %s170, 4
      %s172 = scalar_lea.vmem %s0, %s171
      %p173 = pneg %p36
      %p174 = pneg %p33
      %p175 = pneg %p57
      %p176 = pneg %p54
      %p177 = pneg %p78
      %p178 = pneg %p75
      %p179 = pneg %p99
      %p180 = pneg %p96
      %p181 = pneg %p125
      %p182 = pneg %p122
      %p183 = scmp.lt.s32.totalorder %s15, 1
      %s184 = scalar_select %p183, %s15, 1
      %s185 = smul.addr %s184, 8
      %s186 = smul.addr %s185, 4
      %s187 = scalar_lea.vmem %s4, %s186
      %p188 = scmp.lt.s32.totalorder %s15, 1
      %s189 = scalar_select %p188, %s15, 1
      %s190 = smul.addr %s189, 20
      %s191 = smul.addr %s190, 4
      %s192 = scalar_lea.vmem %s0, %s191
      %p193 = scmp.lt.s32.totalorder %s15, 1
      %s194 = scalar_select %p193, %s15, 1
      %s195 = smul.addr %s194, 8
      %s196 = smul.addr %s195, 4
      %s197 = scalar_lea.vmem %s4, %s196
      %v198 = vld [vmem:[%s192] sm:$0xf]
      %v199 = vld [vmem:[%s192 + $0x4] sm:$0x1]
      %v200 = vld [vmem:[%s192 + $0x8] sm:$0xf]
      %v201 = vld [vmem:[%s192 + $0xc] sm:$0x1]
      %v202 = vld [vmem:[%s192 + $0x10] sm:$0xf]
      %v203 = vld [vmem:[%s192 + $0x14] sm:$0x1]
      %v204 = vld [vmem:[%s192 + $0x18] sm:$0xf]
      %v205 = vld [vmem:[%s192 + $0x1c] sm:$0x1]
      %v206 = vld [vmem:[%s192 + $0x20] sm:$0xf]
      %v207 = vld [vmem:[%s192 + $0x24] sm:$0x1]
      %v208 = vld [vmem:[%s192 + $0x28] sm:$0xf]
      %v209 = vld [vmem:[%s192 + $0x2c] sm:$0x1]
      %v210 = vld [vmem:[%s192 + $0x30] sm:$0xf]
      %v211 = vld [vmem:[%s192 + $0x34] sm:$0x1]
      %v212 = vld [vmem:[%s192 + $0x38] sm:$0xf]
      %v213 = vld [vmem:[%s192 + $0x3c] sm:$0x1]
      %v214 = vld [vmem:[%s192 + $0x40] sm:$0xf]
      %v215 = vld [vmem:[%s192 + $0x44] sm:$0x1]
      %v216 = vld [vmem:[%s192 + $0x48] sm:$0xf]
      %v217 = vld [vmem:[%s192 + $0x4c] sm:$0x1]
      %v218 = vunpack.c.l.bf16 %v198
      %v219 = vunpack.c.l.bf16 %v199
      %v220 = vunpack.c.l.bf16 %v200
      %v221 = vunpack.c.l.bf16 %v201
      %v222 = vunpack.c.l.bf16 %v202
      %v223 = vunpack.c.l.bf16 %v203
      %v224 = vunpack.c.l.bf16 %v204
      %v225 = vunpack.c.l.bf16 %v205
      %v226 = vunpack.c.l.bf16 %v206
      %v227 = vunpack.c.l.bf16 %v207
      %v228 = vunpack.c.l.bf16 %v208
      %v229 = vunpack.c.l.bf16 %v209
      %v230 = vunpack.c.l.bf16 %v210
      %v231 = vunpack.c.l.bf16 %v211
      %v232 = vunpack.c.l.bf16 %v212
      %v233 = vunpack.c.l.bf16 %v213
      %v234 = vunpack.c.l.bf16 %v214
      %v235 = vunpack.c.l.bf16 %v215
      %v236 = vunpack.c.l.bf16 %v216
      %v237 = vunpack.c.l.bf16 %v217
      %v238 = vpack.c.bf16 %v220, %v218
      %v239 = vpack.c.bf16 %v224, %v222
      %v240 = vpack.c.bf16 %v228, %v226
      %v241 = vpack.c.bf16 %v232, %v230
      %v242 = vld [vmem:[%s1] sm:$0xf]
      %v243 = vld [vmem:[%s1 + $0x4] sm:$0xf]
      %v244 = vld [vmem:[%s1 + $0x8] sm:$0xf]
      %v245 = vld [vmem:[%s1 + $0xc] sm:$0xf]
      %v246 = vld [vmem:[%s1 + $0x10] sm:$0xf]
      %v247 = vld [vmem:[%s1 + $0x14] sm:$0xf]
      %v248 = vld [vmem:[%s1 + $0x18] sm:$0xf]
      %v249 = vld [vmem:[%s1 + $0x1c] sm:$0xf]
      %v250 = vld [vmem:[%s1 + $0x20] sm:$0xf]
      %v251 = vld [vmem:[%s1 + $0x24] sm:$0xf]
      %v252 = vld [vmem:[%s1 + $0x28] sm:$0xf]
      %v253 = vld [vmem:[%s1 + $0x2c] sm:$0xf]
      %v254 = vld [vmem:[%s1 + $0x30] sm:$0xf]
      %v255 = vld [vmem:[%s1 + $0x34] sm:$0xf]
      %v256 = vld [vmem:[%s1 + $0x38] sm:$0xf]
      %v257 = vld [vmem:[%s1 + $0x3c] sm:$0xf]
      %vm274 = vcmask 1046528
      %v275 = vrot.slane %v218, 1
      %v276 = vrot.slane %v219, 1
      %v277 = vsel %vm274, %v275, %v276
      %v278 = vrot.slane %v220, 1
      %v279 = vrot.slane %v221, 1
      %v280 = vsel %vm274, %v278, %v279
      %v281 = vrot.slane %v222, 1
      %v282 = vrot.slane %v223, 1
      %v283 = vsel %vm274, %v281, %v282
      %v284 = vrot.slane %v224, 1
      %v285 = vrot.slane %v225, 1
      %v286 = vsel %vm274, %v284, %v285
      %v287 = vrot.slane %v226, 1
      %v288 = vrot.slane %v227, 1
      %v289 = vsel %vm274, %v287, %v288
      %v290 = vrot.slane %v228, 1
      %v291 = vrot.slane %v229, 1
      %v292 = vsel %vm274, %v290, %v291
      %v293 = vrot.slane %v230, 1
      %v294 = vrot.slane %v231, 1
      %v295 = vsel %vm274, %v293, %v294
      %v296 = vrot.slane %v232, 1
      %v297 = vrot.slane %v233, 1
      %v298 = vsel %vm274, %v296, %v297
      %v307 = vpack.c.bf16 %v280, %v277
      %v308 = vpack.c.bf16 %v286, %v283
      %v309 = vpack.c.bf16 %v292, %v289
      %v310 = vpack.c.bf16 %v298, %v295
      %s311 = scalar_lea.vmem %s1, 64
      %v312 = vld [vmem:[%s311] sm:$0xf]
      %v313 = vld [vmem:[%s311 + $0x4] sm:$0xf]
      %v314 = vld [vmem:[%s311 + $0x8] sm:$0xf]
      %v315 = vld [vmem:[%s311 + $0xc] sm:$0xf]
      %v316 = vld [vmem:[%s311 + $0x10] sm:$0xf]
      %v317 = vld [vmem:[%s311 + $0x14] sm:$0xf]
      %v318 = vld [vmem:[%s311 + $0x18] sm:$0xf]
      %v319 = vld [vmem:[%s311 + $0x1c] sm:$0xf]
      %v320 = vld [vmem:[%s311 + $0x20] sm:$0xf]
      %v321 = vld [vmem:[%s311 + $0x24] sm:$0xf]
      %v322 = vld [vmem:[%s311 + $0x28] sm:$0xf]
      %v323 = vld [vmem:[%s311 + $0x2c] sm:$0xf]
      %v324 = vld [vmem:[%s311 + $0x30] sm:$0xf]
      %v325 = vld [vmem:[%s311 + $0x34] sm:$0xf]
      %v326 = vld [vmem:[%s311 + $0x38] sm:$0xf]
      %v327 = vld [vmem:[%s311 + $0x3c] sm:$0xf]
      %v344 = vunpack.c.l.b16 %v312
      %v345 = vunpack.c.l.b16 %v313
      %v346 = vunpack.c.l.b16 %v314
      %v347 = vunpack.c.l.b16 %v315
      %v348 = vunpack.c.l.b16 %v316
      %v349 = vunpack.c.l.b16 %v317
      %v350 = vunpack.c.l.b16 %v318
      %v351 = vunpack.c.l.b16 %v319
      %v352 = vunpack.c.l.b16 %v320
      %v353 = vunpack.c.l.b16 %v321
      %v354 = vunpack.c.l.b16 %v322
      %v355 = vunpack.c.l.b16 %v323
      %v356 = vunpack.c.l.b16 %v324
      %v357 = vunpack.c.l.b16 %v325
      %v358 = vunpack.c.l.b16 %v326
      %v359 = vunpack.c.l.b16 %v327
      %v360 = vpack.c.b16 %v345, %v344
      %v361 = vpack.c.b16 %v347, %v346
      %v362 = vpack.c.b16 %v349, %v348
      %v363 = vpack.c.b16 %v351, %v350
      %v364 = vpack.c.b16 %v353, %v352
      %v365 = vpack.c.b16 %v355, %v354
      %v366 = vpack.c.b16 %v357, %v356
      %v367 = vpack.c.b16 %v359, %v358
      %376 = vmatpush.bf16.msra.mxu0 %v367
      %377 = vmatpush.bf16.msra.mxu0 %v366
      %378 = vmatpush.bf16.msra.mxu0 %v365
      %379 = vmatpush.bf16.msra.mxu0 %v364
      %380 = vmatpush.bf16.msra.mxu0 %v363
      %381 = vmatpush.bf16.msra.mxu0 %v362
      %382 = vmatpush.bf16.msra.mxu0 %v361
      %383 = vmatpush.bf16.msra.mxu0 %v360
      %384 = vmatmul.bf16.gmra.mxu0 %v307
      %v385 = vpop.f32.mrf.mxu0
      %v386 = vadd.f32 0.0, %v385
      %v387 = vpop.f32.mrf.mxu0
      %v388 = vadd.f32 0.0, %v387
      %389 = vmatmul.bf16.gmra.mxu0 %v308
      %v390 = vpop.f32.mrf.mxu0
      %v391 = vadd.f32 0.0, %v390
      %v392 = vpop.f32.mrf.mxu0
      %v393 = vadd.f32 0.0, %v392
      %394 = vmatmul.bf16.gmra.mxu0 %v309
      %v395 = vpop.f32.mrf.mxu0
      %v396 = vadd.f32 0.0, %v395
      %v397 = vpop.f32.mrf.mxu0
      %v398 = vadd.f32 0.0, %v397
      %399 = vmatmul.bf16.gmra.mxu0 %v310
      %v400 = vpop.f32.mrf.mxu0
      %v401 = vadd.f32 0.0, %v400
      %v402 = vpop.f32.mrf.mxu0
      %v403 = vadd.f32 0.0, %v402
      %404 = vdwg.mxu0
      %v421 = vunpack.c.l.b16 %v242
      %v422 = vunpack.c.l.b16 %v243
      %v423 = vunpack.c.l.b16 %v244
      %v424 = vunpack.c.l.b16 %v245
      %v425 = vunpack.c.l.b16 %v246
      %v426 = vunpack.c.l.b16 %v247
      %v427 = vunpack.c.l.b16 %v248
      %v428 = vunpack.c.l.b16 %v249
      %v429 = vunpack.c.l.b16 %v250
      %v430 = vunpack.c.l.b16 %v251
      %v431 = vunpack.c.l.b16 %v252
      %v432 = vunpack.c.l.b16 %v253
      %v433 = vunpack.c.l.b16 %v254
      %v434 = vunpack.c.l.b16 %v255
      %v435 = vunpack.c.l.b16 %v256
      %v436 = vunpack.c.l.b16 %v257
      %v437 = vpack.c.b16 %v422, %v421
      %v438 = vpack.c.b16 %v424, %v423
      %v439 = vpack.c.b16 %v426, %v425
      %v440 = vpack.c.b16 %v428, %v427
      %v441 = vpack.c.b16 %v430, %v429
      %v442 = vpack.c.b16 %v432, %v431
      %v443 = vpack.c.b16 %v434, %v433
      %v444 = vpack.c.b16 %v436, %v435
      %453 = vmatpush.bf16.msra.mxu0 %v444
      %454 = vmatpush.bf16.msra.mxu0 %v443
      %455 = vmatpush.bf16.msra.mxu0 %v442
      %456 = vmatpush.bf16.msra.mxu0 %v441
      %457 = vmatpush.bf16.msra.mxu0 %v440
      %458 = vmatpush.bf16.msra.mxu0 %v439
      %459 = vmatpush.bf16.msra.mxu0 %v438
      %460 = vmatpush.bf16.msra.mxu0 %v437
      %461 = vmatmul.bf16.gmra.mxu0 %v238
      %v462 = vpop.f32.mrf.mxu0
      %v463 = vadd.f32 %v386, %v462
      %v464 = vpop.f32.mrf.mxu0
      %v465 = vadd.f32 %v388, %v464
      %466 = vmatmul.bf16.gmra.mxu0 %v239
      %v467 = vpop.f32.mrf.mxu0
      %v468 = vadd.f32 %v391, %v467
      %v469 = vpop.f32.mrf.mxu0
      %v470 = vadd.f32 %v393, %v469
      %471 = vmatmul.bf16.gmra.mxu0 %v240
      %v472 = vpop.f32.mrf.mxu0
      %v473 = vadd.f32 %v396, %v472
      %v474 = vpop.f32.mrf.mxu0
      %v475 = vadd.f32 %v398, %v474
      %476 = vmatmul.bf16.gmra.mxu0 %v241
      %v477 = vpop.f32.mrf.mxu0
      %v478 = vadd.f32 %v401, %v477
      %v479 = vpop.f32.mrf.mxu0
      %v480 = vadd.f32 %v403, %v479
      %481 = vdwg.mxu0
      %vm482 = vcmask 1045504
      %v483 = vrot.slane %v218, 2
      %v484 = vrot.slane %v219, 2
      %v485 = vsel %vm482, %v483, %v484
      %v486 = vrot.slane %v220, 2
      %v487 = vrot.slane %v221, 2
      %v488 = vsel %vm482, %v486, %v487
      %v489 = vrot.slane %v222, 2
      %v490 = vrot.slane %v223, 2
      %v491 = vsel %vm482, %v489, %v490
      %v492 = vrot.slane %v224, 2
      %v493 = vrot.slane %v225, 2
      %v494 = vsel %vm482, %v492, %v493
      %v495 = vrot.slane %v226, 2
      %v496 = vrot.slane %v227, 2
      %v497 = vsel %vm482, %v495, %v496
      %v498 = vrot.slane %v228, 2
      %v499 = vrot.slane %v229, 2
      %v500 = vsel %vm482, %v498, %v499
      %v501 = vrot.slane %v230, 2
      %v502 = vrot.slane %v231, 2
      %v503 = vsel %vm482, %v501, %v502
      %v504 = vrot.slane %v232, 2
      %v505 = vrot.slane %v233, 2
      %v506 = vsel %vm482, %v504, %v505
      %v515 = vpack.c.bf16 %v488, %v485
      %v516 = vpack.c.bf16 %v494, %v491
      %v517 = vpack.c.bf16 %v500, %v497
      %v518 = vpack.c.bf16 %v506, %v503
      %s519 = scalar_lea.vmem %s1, 128
      %v520 = vld [vmem:[%s519] sm:$0xf]
      %v521 = vld [vmem:[%s519 + $0x4] sm:$0xf]
      %v522 = vld [vmem:[%s519 + $0x8] sm:$0xf]
      %v523 = vld [vmem:[%s519 + $0xc] sm:$0xf]
      %v524 = vld [vmem:[%s519 + $0x10] sm:$0xf]
      %v525 = vld [vmem:[%s519 + $0x14] sm:$0xf]
      %v526 = vld [vmem:[%s519 + $0x18] sm:$0xf]
      %v527 = vld [vmem:[%s519 + $0x1c] sm:$0xf]
      %v528 = vld [vmem:[%s519 + $0x20] sm:$0xf]
      %v529 = vld [vmem:[%s519 + $0x24] sm:$0xf]
      %v530 = vld [vmem:[%s519 + $0x28] sm:$0xf]
      %v531 = vld [vmem:[%s519 + $0x2c] sm:$0xf]
      %v532 = vld [vmem:[%s519 + $0x30] sm:$0xf]
      %v533 = vld [vmem:[%s519 + $0x34] sm:$0xf]
      %v534 = vld [vmem:[%s519 + $0x38] sm:$0xf]
      %v535 = vld [vmem:[%s519 + $0x3c] sm:$0xf]
      %v552 = vunpack.c.l.b16 %v520
      %v553 = vunpack.c.l.b16 %v521
      %v554 = vunpack.c.l.b16 %v522
      %v555 = vunpack.c.l.b16 %v523
      %v556 = vunpack.c.l.b16 %v524
      %v557 = vunpack.c.l.b16 %v525
      %v558 = vunpack.c.l.b16 %v526
      %v559 = vunpack.c.l.b16 %v527
      %v560 = vunpack.c.l.b16 %v528
      %v561 = vunpack.c.l.b16 %v529
      %v562 = vunpack.c.l.b16 %v530
      %v563 = vunpack.c.l.b16 %v531
      %v564 = vunpack.c.l.b16 %v532
      %v565 = vunpack.c.l.b16 %v533
      %v566 = vunpack.c.l.b16 %v534
      %v567 = vunpack.c.l.b16 %v535
      %v568 = vpack.c.b16 %v553, %v552
      %v569 = vpack.c.b16 %v555, %v554
      %v570 = vpack.c.b16 %v557, %v556
      %v571 = vpack.c.b16 %v559, %v558
      %v572 = vpack.c.b16 %v561, %v560
      %v573 = vpack.c.b16 %v563, %v562
      %v574 = vpack.c.b16 %v565, %v564
      %v575 = vpack.c.b16 %v567, %v566
      %584 = vmatpush.bf16.msra.mxu0 %v575
      %585 = vmatpush.bf16.msra.mxu0 %v574
      %586 = vmatpush.bf16.msra.mxu0 %v573
      %587 = vmatpush.bf16.msra.mxu0 %v572
      %588 = vmatpush.bf16.msra.mxu0 %v571
      %589 = vmatpush.bf16.msra.mxu0 %v570
      %590 = vmatpush.bf16.msra.mxu0 %v569
      %591 = vmatpush.bf16.msra.mxu0 %v568
      %592 = vmatmul.bf16.gmra.mxu0 %v515
      %v593 = vpop.f32.mrf.mxu0
      %v594 = vadd.f32 0.0, %v593
      %v595 = vpop.f32.mrf.mxu0
      %v596 = vadd.f32 0.0, %v595
      %597 = vmatmul.bf16.gmra.mxu0 %v516
      %v598 = vpop.f32.mrf.mxu0
      %v599 = vadd.f32 0.0, %v598
      %v600 = vpop.f32.mrf.mxu0
      %v601 = vadd.f32 0.0, %v600
      %602 = vmatmul.bf16.gmra.mxu0 %v517
      %v603 = vpop.f32.mrf.mxu0
      %v604 = vadd.f32 0.0, %v603
      %v605 = vpop.f32.mrf.mxu0
      %v606 = vadd.f32 0.0, %v605
      %607 = vmatmul.bf16.gmra.mxu0 %v518
      %v608 = vpop.f32.mrf.mxu0
      %v609 = vadd.f32 0.0, %v608
      %v610 = vpop.f32.mrf.mxu0
      %v611 = vadd.f32 0.0, %v610
      %612 = vdwg.mxu0
      %v613 = vadd.f32 %v463, %v594
      %v614 = vadd.f32 %v465, %v596
      %v615 = vadd.f32 %v468, %v599
      %v616 = vadd.f32 %v470, %v601
      %v617 = vadd.f32 %v473, %v604
      %v618 = vadd.f32 %v475, %v606
      %v619 = vadd.f32 %v478, %v609
      %v620 = vadd.f32 %v480, %v611
      %v621 = vpack.c.bf16 %v222, %v220
      %v622 = vpack.c.bf16 %v226, %v224
      %v623 = vpack.c.bf16 %v230, %v228
      %v624 = vpack.c.bf16 %v234, %v232
      %s625 = scalar_lea.vmem %s1, 192
      %v626 = vld [vmem:[%s625] sm:$0xf]
      %v627 = vld [vmem:[%s625 + $0x4] sm:$0xf]
      %v628 = vld [vmem:[%s625 + $0x8] sm:$0xf]
      %v629 = vld [vmem:[%s625 + $0xc] sm:$0xf]
      %v630 = vld [vmem:[%s625 + $0x10] sm:$0xf]
      %v631 = vld [vmem:[%s625 + $0x14] sm:$0xf]
      %v632 = vld [vmem:[%s625 + $0x18] sm:$0xf]
      %v633 = vld [vmem:[%s625 + $0x1c] sm:$0xf]
      %v634 = vld [vmem:[%s625 + $0x20] sm:$0xf]
      %v635 = vld [vmem:[%s625 + $0x24] sm:$0xf]
      %v636 = vld [vmem:[%s625 + $0x28] sm:$0xf]
      %v637 = vld [vmem:[%s625 + $0x2c] sm:$0xf]
      %v638 = vld [vmem:[%s625 + $0x30] sm:$0xf]
      %v639 = vld [vmem:[%s625 + $0x34] sm:$0xf]
      %v640 = vld [vmem:[%s625 + $0x38] sm:$0xf]
      %v641 = vld [vmem:[%s625 + $0x3c] sm:$0xf]
      %v658 = vunpack.c.l.b16 %v626
      %v659 = vunpack.c.l.b16 %v627
      %v660 = vunpack.c.l.b16 %v628
      %v661 = vunpack.c.l.b16 %v629
      %v662 = vunpack.c.l.b16 %v630
      %v663 = vunpack.c.l.b16 %v631
      %v664 = vunpack.c.l.b16 %v632
      %v665 = vunpack.c.l.b16 %v633
      %v666 = vunpack.c.l.b16 %v634
      %v667 = vunpack.c.l.b16 %v635
      %v668 = vunpack.c.l.b16 %v636
      %v669 = vunpack.c.l.b16 %v637
      %v670 = vunpack.c.l.b16 %v638
      %v671 = vunpack.c.l.b16 %v639
      %v672 = vunpack.c.l.b16 %v640
      %v673 = vunpack.c.l.b16 %v641
      %v674 = vpack.c.b16 %v659, %v658
      %v675 = vpack.c.b16 %v661, %v660
      %v676 = vpack.c.b16 %v663, %v662
      %v677 = vpack.c.b16 %v665, %v664
      %v678 = vpack.c.b16 %v667, %v666
      %v679 = vpack.c.b16 %v669, %v668
      %v680 = vpack.c.b16 %v671, %v670
      %v681 = vpack.c.b16 %v673, %v672
      %690 = vmatpush.bf16.msra.mxu0 %v681
      %691 = vmatpush.bf16.msra.mxu0 %v680
      %692 = vmatpush.bf16.msra.mxu0 %v679
      %693 = vmatpush.bf16.msra.mxu0 %v678
      %694 = vmatpush.bf16.msra.mxu0 %v677
      %695 = vmatpush.bf16.msra.mxu0 %v676
      %696 = vmatpush.bf16.msra.mxu0 %v675
      %697 = vmatpush.bf16.msra.mxu0 %v674
      %698 = vmatmul.bf16.gmra.mxu0 %v621
      %v699 = vpop.f32.mrf.mxu0
      %v700 = vadd.f32 0.0, %v699
      %v701 = vpop.f32.mrf.mxu0
      %v702 = vadd.f32 0.0, %v701
      %703 = vmatmul.bf16.gmra.mxu0 %v622
      %v704 = vpop.f32.mrf.mxu0
      %v705 = vadd.f32 0.0, %v704
      %v706 = vpop.f32.mrf.mxu0
      %v707 = vadd.f32 0.0, %v706
      %708 = vmatmul.bf16.gmra.mxu0 %v623
      %v709 = vpop.f32.mrf.mxu0
      %v710 = vadd.f32 0.0, %v709
      %v711 = vpop.f32.mrf.mxu0
      %v712 = vadd.f32 0.0, %v711
      %713 = vmatmul.bf16.gmra.mxu0 %v624
      %v714 = vpop.f32.mrf.mxu0
      %v715 = vadd.f32 0.0, %v714
      %v716 = vpop.f32.mrf.mxu0
      %v717 = vadd.f32 0.0, %v716
      %718 = vdwg.mxu0
      %v719 = vadd.f32 %v613, %v700
      %v720 = vadd.f32 %v614, %v702
      %v721 = vadd.f32 %v615, %v705
      %v722 = vadd.f32 %v616, %v707
      %v723 = vadd.f32 %v617, %v710
      %v724 = vadd.f32 %v618, %v712
      %v725 = vadd.f32 %v619, %v715
      %v726 = vadd.f32 %v620, %v717
      %v729 = vrot.slane %v234, 1
      %v730 = vrot.slane %v235, 1
      %v731 = vsel %vm274, %v729, %v730
      %v733 = vpack.c.bf16 %v283, %v280
      %v734 = vpack.c.bf16 %v289, %v286
      %v735 = vpack.c.bf16 %v295, %v292
      %v736 = vpack.c.bf16 %v731, %v298
      %s737 = scalar_lea.vmem %s1, 256
      %v738 = vld [vmem:[%s737] sm:$0xf]
      %v739 = vld [vmem:[%s737 + $0x4] sm:$0xf]
      %v740 = vld [vmem:[%s737 + $0x8] sm:$0xf]
      %v741 = vld [vmem:[%s737 + $0xc] sm:$0xf]
      %v742 = vld [vmem:[%s737 + $0x10] sm:$0xf]
      %v743 = vld [vmem:[%s737 + $0x14] sm:$0xf]
      %v744 = vld [vmem:[%s737 + $0x18] sm:$0xf]
      %v745 = vld [vmem:[%s737 + $0x1c] sm:$0xf]
      %v746 = vld [vmem:[%s737 + $0x20] sm:$0xf]
      %v747 = vld [vmem:[%s737 + $0x24] sm:$0xf]
      %v748 = vld [vmem:[%s737 + $0x28] sm:$0xf]
      %v749 = vld [vmem:[%s737 + $0x2c] sm:$0xf]
      %v750 = vld [vmem:[%s737 + $0x30] sm:$0xf]
      %v751 = vld [vmem:[%s737 + $0x34] sm:$0xf]
      %v752 = vld [vmem:[%s737 + $0x38] sm:$0xf]
      %v753 = vld [vmem:[%s737 + $0x3c] sm:$0xf]
      %v770 = vunpack.c.l.b16 %v738
      %v771 = vunpack.c.l.b16 %v739
      %v772 = vunpack.c.l.b16 %v740
      %v773 = vunpack.c.l.b16 %v741
      %v774 = vunpack.c.l.b16 %v742
      %v775 = vunpack.c.l.b16 %v743
      %v776 = vunpack.c.l.b16 %v744
      %v777 = vunpack.c.l.b16 %v745
      %v778 = vunpack.c.l.b16 %v746
      %v779 = vunpack.c.l.b16 %v747
      %v780 = vunpack.c.l.b16 %v748
      %v781 = vunpack.c.l.b16 %v749
      %v782 = vunpack.c.l.b16 %v750
      %v783 = vunpack.c.l.b16 %v751
      %v784 = vunpack.c.l.b16 %v752
      %v785 = vunpack.c.l.b16 %v753
      %v786 = vpack.c.b16 %v771, %v770
      %v787 = vpack.c.b16 %v773, %v772
      %v788 = vpack.c.b16 %v775, %v774
      %v789 = vpack.c.b16 %v777, %v776
      %v790 = vpack.c.b16 %v779, %v778
      %v791 = vpack.c.b16 %v781, %v780
      %v792 = vpack.c.b16 %v783, %v782
      %v793 = vpack.c.b16 %v785, %v784
      %802 = vmatpush.bf16.msra.mxu0 %v793
      %803 = vmatpush.bf16.msra.mxu0 %v792
      %804 = vmatpush.bf16.msra.mxu0 %v791
      %805 = vmatpush.bf16.msra.mxu0 %v790
      %806 = vmatpush.bf16.msra.mxu0 %v789
      %807 = vmatpush.bf16.msra.mxu0 %v788
      %808 = vmatpush.bf16.msra.mxu0 %v787
      %809 = vmatpush.bf16.msra.mxu0 %v786
      %810 = vmatmul.bf16.gmra.mxu0 %v733
      %v811 = vpop.f32.mrf.mxu0
      %v812 = vadd.f32 0.0, %v811
      %v813 = vpop.f32.mrf.mxu0
      %v814 = vadd.f32 0.0, %v813
      %815 = vmatmul.bf16.gmra.mxu0 %v734
      %v816 = vpop.f32.mrf.mxu0
      %v817 = vadd.f32 0.0, %v816
      %v818 = vpop.f32.mrf.mxu0
      %v819 = vadd.f32 0.0, %v818
      %820 = vmatmul.bf16.gmra.mxu0 %v735
      %v821 = vpop.f32.mrf.mxu0
      %v822 = vadd.f32 0.0, %v821
      %v823 = vpop.f32.mrf.mxu0
      %v824 = vadd.f32 0.0, %v823
      %825 = vmatmul.bf16.gmra.mxu0 %v736
      %v826 = vpop.f32.mrf.mxu0
      %v827 = vadd.f32 0.0, %v826
      %v828 = vpop.f32.mrf.mxu0
      %v829 = vadd.f32 0.0, %v828
      %830 = vdwg.mxu0
      %v831 = vadd.f32 %v719, %v812
      %v832 = vadd.f32 %v720, %v814
      %v833 = vadd.f32 %v721, %v817
      %v834 = vadd.f32 %v722, %v819
      %v835 = vadd.f32 %v723, %v822
      %v836 = vadd.f32 %v724, %v824
      %v837 = vadd.f32 %v725, %v827
      %v838 = vadd.f32 %v726, %v829
      %v839 = vrot.slane %v234, 2
      %v840 = vrot.slane %v235, 2
      %v841 = vsel %vm482, %v839, %v840
      %v843 = vpack.c.bf16 %v491, %v488
      %v844 = vpack.c.bf16 %v497, %v494
      %v845 = vpack.c.bf16 %v503, %v500
      %v846 = vpack.c.bf16 %v841, %v506
      %s847 = scalar_lea.vmem %s1, 320
      %v848 = vld [vmem:[%s847] sm:$0xf]
      %v849 = vld [vmem:[%s847 + $0x4] sm:$0xf]
      %v850 = vld [vmem:[%s847 + $0x8] sm:$0xf]
      %v851 = vld [vmem:[%s847 + $0xc] sm:$0xf]
      %v852 = vld [vmem:[%s847 + $0x10] sm:$0xf]
      %v853 = vld [vmem:[%s847 + $0x14] sm:$0xf]
      %v854 = vld [vmem:[%s847 + $0x18] sm:$0xf]
      %v855 = vld [vmem:[%s847 + $0x1c] sm:$0xf]
      %v856 = vld [vmem:[%s847 + $0x20] sm:$0xf]
      %v857 = vld [vmem:[%s847 + $0x24] sm:$0xf]
      %v858 = vld [vmem:[%s847 + $0x28] sm:$0xf]
      %v859 = vld [vmem:[%s847 + $0x2c] sm:$0xf]
      %v860 = vld [vmem:[%s847 + $0x30] sm:$0xf]
      %v861 = vld [vmem:[%s847 + $0x34] sm:$0xf]
      %v862 = vld [vmem:[%s847 + $0x38] sm:$0xf]
      %v863 = vld [vmem:[%s847 + $0x3c] sm:$0xf]
      %v880 = vunpack.c.l.b16 %v848
      %v881 = vunpack.c.l.b16 %v849
      %v882 = vunpack.c.l.b16 %v850
      %v883 = vunpack.c.l.b16 %v851
      %v884 = vunpack.c.l.b16 %v852
      %v885 = vunpack.c.l.b16 %v853
      %v886 = vunpack.c.l.b16 %v854
      %v887 = vunpack.c.l.b16 %v855
      %v888 = vunpack.c.l.b16 %v856
      %v889 = vunpack.c.l.b16 %v857
      %v890 = vunpack.c.l.b16 %v858
      %v891 = vunpack.c.l.b16 %v859
      %v892 = vunpack.c.l.b16 %v860
      %v893 = vunpack.c.l.b16 %v861
      %v894 = vunpack.c.l.b16 %v862
      %v895 = vunpack.c.l.b16 %v863
      %v896 = vpack.c.b16 %v881, %v880
      %v897 = vpack.c.b16 %v883, %v882
      %v898 = vpack.c.b16 %v885, %v884
      %v899 = vpack.c.b16 %v887, %v886
      %v900 = vpack.c.b16 %v889, %v888
      %v901 = vpack.c.b16 %v891, %v890
      %v902 = vpack.c.b16 %v893, %v892
      %v903 = vpack.c.b16 %v895, %v894
      %912 = vmatpush.bf16.msra.mxu0 %v903
      %913 = vmatpush.bf16.msra.mxu0 %v902
      %914 = vmatpush.bf16.msra.mxu0 %v901
      %915 = vmatpush.bf16.msra.mxu0 %v900
      %916 = vmatpush.bf16.msra.mxu0 %v899
      %917 = vmatpush.bf16.msra.mxu0 %v898
      %918 = vmatpush.bf16.msra.mxu0 %v897
      %919 = vmatpush.bf16.msra.mxu0 %v896
      %920 = vmatmul.bf16.gmra.mxu0 %v843
      %v921 = vpop.f32.mrf.mxu0
      %v922 = vadd.f32 0.0, %v921
      %v923 = vpop.f32.mrf.mxu0
      %v924 = vadd.f32 0.0, %v923
      %925 = vmatmul.bf16.gmra.mxu0 %v844
      %v926 = vpop.f32.mrf.mxu0
      %v927 = vadd.f32 0.0, %v926
      %v928 = vpop.f32.mrf.mxu0
      %v929 = vadd.f32 0.0, %v928
      %930 = vmatmul.bf16.gmra.mxu0 %v845
      %v931 = vpop.f32.mrf.mxu0
      %v932 = vadd.f32 0.0, %v931
      %v933 = vpop.f32.mrf.mxu0
      %v934 = vadd.f32 0.0, %v933
      %935 = vmatmul.bf16.gmra.mxu0 %v846
      %v936 = vpop.f32.mrf.mxu0
      %v937 = vadd.f32 0.0, %v936
      %v938 = vpop.f32.mrf.mxu0
      %v939 = vadd.f32 0.0, %v938
      %940 = vdwg.mxu0
      %v941 = vadd.f32 %v831, %v922
      %v942 = vadd.f32 %v832, %v924
      %v943 = vadd.f32 %v833, %v927
      %v944 = vadd.f32 %v834, %v929
      %v945 = vadd.f32 %v835, %v932
      %v946 = vadd.f32 %v836, %v934
      %v947 = vadd.f32 %v837, %v937
      %v948 = vadd.f32 %v838, %v939
      %v949 = vpack.c.bf16 %v236, %v234
      %s950 = scalar_lea.vmem %s1, 384
      %v951 = vld [vmem:[%s950] sm:$0xf]
      %v952 = vld [vmem:[%s950 + $0x4] sm:$0xf]
      %v953 = vld [vmem:[%s950 + $0x8] sm:$0xf]
      %v954 = vld [vmem:[%s950 + $0xc] sm:$0xf]
      %v955 = vld [vmem:[%s950 + $0x10] sm:$0xf]
      %v956 = vld [vmem:[%s950 + $0x14] sm:$0xf]
      %v957 = vld [vmem:[%s950 + $0x18] sm:$0xf]
      %v958 = vld [vmem:[%s950 + $0x1c] sm:$0xf]
      %v959 = vld [vmem:[%s950 + $0x20] sm:$0xf]
      %v960 = vld [vmem:[%s950 + $0x24] sm:$0xf]
      %v961 = vld [vmem:[%s950 + $0x28] sm:$0xf]
      %v962 = vld [vmem:[%s950 + $0x2c] sm:$0xf]
      %v963 = vld [vmem:[%s950 + $0x30] sm:$0xf]
      %v964 = vld [vmem:[%s950 + $0x34] sm:$0xf]
      %v965 = vld [vmem:[%s950 + $0x38] sm:$0xf]
      %v966 = vld [vmem:[%s950 + $0x3c] sm:$0xf]
      %v983 = vunpack.c.l.b16 %v951
      %v984 = vunpack.c.l.b16 %v952
      %v985 = vunpack.c.l.b16 %v953
      %v986 = vunpack.c.l.b16 %v954
      %v987 = vunpack.c.l.b16 %v955
      %v988 = vunpack.c.l.b16 %v956
      %v989 = vunpack.c.l.b16 %v957
      %v990 = vunpack.c.l.b16 %v958
      %v991 = vunpack.c.l.b16 %v959
      %v992 = vunpack.c.l.b16 %v960
      %v993 = vunpack.c.l.b16 %v961
      %v994 = vunpack.c.l.b16 %v962
      %v995 = vunpack.c.l.b16 %v963
      %v996 = vunpack.c.l.b16 %v964
      %v997 = vunpack.c.l.b16 %v965
      %v998 = vunpack.c.l.b16 %v966
      %v999 = vpack.c.b16 %v984, %v983
      %v1000 = vpack.c.b16 %v986, %v985
      %v1001 = vpack.c.b16 %v988, %v987
      %v1002 = vpack.c.b16 %v990, %v989
      %v1003 = vpack.c.b16 %v992, %v991
      %v1004 = vpack.c.b16 %v994, %v993
      %v1005 = vpack.c.b16 %v996, %v995
      %v1006 = vpack.c.b16 %v998, %v997
      %1015 = vmatpush.bf16.msra.mxu0 %v1006
      %1016 = vmatpush.bf16.msra.mxu0 %v1005
      %1017 = vmatpush.bf16.msra.mxu0 %v1004
      %1018 = vmatpush.bf16.msra.mxu0 %v1003
      %1019 = vmatpush.bf16.msra.mxu0 %v1002
      %1020 = vmatpush.bf16.msra.mxu0 %v1001
      %1021 = vmatpush.bf16.msra.mxu0 %v1000
      %1022 = vmatpush.bf16.msra.mxu0 %v999
      %1023 = vmatmul.bf16.gmra.mxu0 %v239
      %v1024 = vpop.f32.mrf.mxu0
      %v1025 = vadd.f32 0.0, %v1024
      %v1026 = vpop.f32.mrf.mxu0
      %v1027 = vadd.f32 0.0, %v1026
      %1028 = vmatmul.bf16.gmra.mxu0 %v240
      %v1029 = vpop.f32.mrf.mxu0
      %v1030 = vadd.f32 0.0, %v1029
      %v1031 = vpop.f32.mrf.mxu0
      %v1032 = vadd.f32 0.0, %v1031
      %1033 = vmatmul.bf16.gmra.mxu0 %v241
      %v1034 = vpop.f32.mrf.mxu0
      %v1035 = vadd.f32 0.0, %v1034
      %v1036 = vpop.f32.mrf.mxu0
      %v1037 = vadd.f32 0.0, %v1036
      %1038 = vmatmul.bf16.gmra.mxu0 %v949
      %v1039 = vpop.f32.mrf.mxu0
      %v1040 = vadd.f32 0.0, %v1039
      %v1041 = vpop.f32.mrf.mxu0
      %v1042 = vadd.f32 0.0, %v1041
      %1043 = vdwg.mxu0
      %v1044 = vadd.f32 %v941, %v1025
      %v1045 = vadd.f32 %v942, %v1027
      %v1046 = vadd.f32 %v943, %v1030
      %v1047 = vadd.f32 %v944, %v1032
      %v1048 = vadd.f32 %v945, %v1035
      %v1049 = vadd.f32 %v946, %v1037
      %v1050 = vadd.f32 %v947, %v1040
      %v1051 = vadd.f32 %v948, %v1042
      %v1054 = vrot.slane %v236, 1
      %v1055 = vrot.slane %v237, 1
      %v1056 = vsel %vm274, %v1054, %v1055
      %v1058 = vpack.c.bf16 %v1056, %v731
      %s1059 = scalar_lea.vmem %s1, 448
      %v1060 = vld [vmem:[%s1059] sm:$0xf]
      %v1061 = vld [vmem:[%s1059 + $0x4] sm:$0xf]
      %v1062 = vld [vmem:[%s1059 + $0x8] sm:$0xf]
      %v1063 = vld [vmem:[%s1059 + $0xc] sm:$0xf]
      %v1064 = vld [vmem:[%s1059 + $0x10] sm:$0xf]
      %v1065 = vld [vmem:[%s1059 + $0x14] sm:$0xf]
      %v1066 = vld [vmem:[%s1059 + $0x18] sm:$0xf]
      %v1067 = vld [vmem:[%s1059 + $0x1c] sm:$0xf]
      %v1068 = vld [vmem:[%s1059 + $0x20] sm:$0xf]
      %v1069 = vld [vmem:[%s1059 + $0x24] sm:$0xf]
      %v1070 = vld [vmem:[%s1059 + $0x28] sm:$0xf]
      %v1071 = vld [vmem:[%s1059 + $0x2c] sm:$0xf]
      %v1072 = vld [vmem:[%s1059 + $0x30] sm:$0xf]
      %v1073 = vld [vmem:[%s1059 + $0x34] sm:$0xf]
      %v1074 = vld [vmem:[%s1059 + $0x38] sm:$0xf]
      %v1075 = vld [vmem:[%s1059 + $0x3c] sm:$0xf]
      %v1092 = vunpack.c.l.b16 %v1060
      %v1093 = vunpack.c.l.b16 %v1061
      %v1094 = vunpack.c.l.b16 %v1062
      %v1095 = vunpack.c.l.b16 %v1063
      %v1096 = vunpack.c.l.b16 %v1064
      %v1097 = vunpack.c.l.b16 %v1065
      %v1098 = vunpack.c.l.b16 %v1066
      %v1099 = vunpack.c.l.b16 %v1067
      %v1100 = vunpack.c.l.b16 %v1068
      %v1101 = vunpack.c.l.b16 %v1069
      %v1102 = vunpack.c.l.b16 %v1070
      %v1103 = vunpack.c.l.b16 %v1071
      %v1104 = vunpack.c.l.b16 %v1072
      %v1105 = vunpack.c.l.b16 %v1073
      %v1106 = vunpack.c.l.b16 %v1074
      %v1107 = vunpack.c.l.b16 %v1075
      %v1108 = vpack.c.b16 %v1093, %v1092
      %v1109 = vpack.c.b16 %v1095, %v1094
      %v1110 = vpack.c.b16 %v1097, %v1096
      %v1111 = vpack.c.b16 %v1099, %v1098
      %v1112 = vpack.c.b16 %v1101, %v1100
      %v1113 = vpack.c.b16 %v1103, %v1102
      %v1114 = vpack.c.b16 %v1105, %v1104
      %v1115 = vpack.c.b16 %v1107, %v1106
      %1124 = vmatpush.bf16.msra.mxu0 %v1115
      %1125 = vmatpush.bf16.msra.mxu0 %v1114
      %1126 = vmatpush.bf16.msra.mxu0 %v1113
      %1127 = vmatpush.bf16.msra.mxu0 %v1112
      %1128 = vmatpush.bf16.msra.mxu0 %v1111
      %1129 = vmatpush.bf16.msra.mxu0 %v1110
      %1130 = vmatpush.bf16.msra.mxu0 %v1109
      %1131 = vmatpush.bf16.msra.mxu0 %v1108
      %1132 = vmatmul.bf16.gmra.mxu0 %v308
      %v1133 = vpop.f32.mrf.mxu0
      %v1134 = vadd.f32 0.0, %v1133
      %v1135 = vpop.f32.mrf.mxu0
      %v1136 = vadd.f32 0.0, %v1135
      %1137 = vmatmul.bf16.gmra.mxu0 %v309
      %v1138 = vpop.f32.mrf.mxu0
      %v1139 = vadd.f32 0.0, %v1138
      %v1140 = vpop.f32.mrf.mxu0
      %v1141 = vadd.f32 0.0, %v1140
      %1142 = vmatmul.bf16.gmra.mxu0 %v310
      %v1143 = vpop.f32.mrf.mxu0
      %v1144 = vadd.f32 0.0, %v1143
      %v1145 = vpop.f32.mrf.mxu0
      %v1146 = vadd.f32 0.0, %v1145
      %1147 = vmatmul.bf16.gmra.mxu0 %v1058
      %v1148 = vpop.f32.mrf.mxu0
      %v1149 = vadd.f32 0.0, %v1148
      %v1150 = vpop.f32.mrf.mxu0
      %v1151 = vadd.f32 0.0, %v1150
      %1152 = vdwg.mxu0
      %v1153 = vadd.f32 %v1044, %v1134
      %v1154 = vadd.f32 %v1045, %v1136
      %v1155 = vadd.f32 %v1046, %v1139
      %v1156 = vadd.f32 %v1047, %v1141
      %v1157 = vadd.f32 %v1048, %v1144
      %v1158 = vadd.f32 %v1049, %v1146
      %v1159 = vadd.f32 %v1050, %v1149
      %v1160 = vadd.f32 %v1051, %v1151
      %v1161 = vrot.slane %v236, 2
      %v1162 = vrot.slane %v237, 2
      %v1163 = vsel %vm482, %v1161, %v1162
      %v1165 = vpack.c.bf16 %v1163, %v841
      %s1166 = scalar_lea.vmem %s1, 512
      %v1167 = vld [vmem:[%s1166] sm:$0xf]
      %v1168 = vld [vmem:[%s1166 + $0x4] sm:$0xf]
      %v1169 = vld [vmem:[%s1166 + $0x8] sm:$0xf]
      %v1170 = vld [vmem:[%s1166 + $0xc] sm:$0xf]
      %v1171 = vld [vmem:[%s1166 + $0x10] sm:$0xf]
      %v1172 = vld [vmem:[%s1166 + $0x14] sm:$0xf]
      %v1173 = vld [vmem:[%s1166 + $0x18] sm:$0xf]
      %v1174 = vld [vmem:[%s1166 + $0x1c] sm:$0xf]
      %v1175 = vld [vmem:[%s1166 + $0x20] sm:$0xf]
      %v1176 = vld [vmem:[%s1166 + $0x24] sm:$0xf]
      %v1177 = vld [vmem:[%s1166 + $0x28] sm:$0xf]
      %v1178 = vld [vmem:[%s1166 + $0x2c] sm:$0xf]
      %v1179 = vld [vmem:[%s1166 + $0x30] sm:$0xf]
      %v1180 = vld [vmem:[%s1166 + $0x34] sm:$0xf]
      %v1181 = vld [vmem:[%s1166 + $0x38] sm:$0xf]
      %v1182 = vld [vmem:[%s1166 + $0x3c] sm:$0xf]
      %v1199 = vunpack.c.l.b16 %v1167
      %v1200 = vunpack.c.l.b16 %v1168
      %v1201 = vunpack.c.l.b16 %v1169
      %v1202 = vunpack.c.l.b16 %v1170
      %v1203 = vunpack.c.l.b16 %v1171
      %v1204 = vunpack.c.l.b16 %v1172
      %v1205 = vunpack.c.l.b16 %v1173
      %v1206 = vunpack.c.l.b16 %v1174
      %v1207 = vunpack.c.l.b16 %v1175
      %v1208 = vunpack.c.l.b16 %v1176
      %v1209 = vunpack.c.l.b16 %v1177
      %v1210 = vunpack.c.l.b16 %v1178
      %v1211 = vunpack.c.l.b16 %v1179
      %v1212 = vunpack.c.l.b16 %v1180
      %v1213 = vunpack.c.l.b16 %v1181
      %v1214 = vunpack.c.l.b16 %v1182
      %v1215 = vpack.c.b16 %v1200, %v1199
      %v1216 = vpack.c.b16 %v1202, %v1201
      %v1217 = vpack.c.b16 %v1204, %v1203
      %v1218 = vpack.c.b16 %v1206, %v1205
      %v1219 = vpack.c.b16 %v1208, %v1207
      %v1220 = vpack.c.b16 %v1210, %v1209
      %v1221 = vpack.c.b16 %v1212, %v1211
      %v1222 = vpack.c.b16 %v1214, %v1213
      %1231 = vmatpush.bf16.msra.mxu0 %v1222
      %1232 = vmatpush.bf16.msra.mxu0 %v1221
      %1233 = vmatpush.bf16.msra.mxu0 %v1220
      %1234 = vmatpush.bf16.msra.mxu0 %v1219
      %1235 = vmatpush.bf16.msra.mxu0 %v1218
      %1236 = vmatpush.bf16.msra.mxu0 %v1217
      %1237 = vmatpush.bf16.msra.mxu0 %v1216
      %1238 = vmatpush.bf16.msra.mxu0 %v1215
      %1239 = vmatmul.bf16.gmra.mxu0 %v516
      %v1240 = vpop.f32.mrf.mxu0
      %v1241 = vadd.f32 0.0, %v1240
      %v1242 = vpop.f32.mrf.mxu0
      %v1243 = vadd.f32 0.0, %v1242
      %1244 = vmatmul.bf16.gmra.mxu0 %v517
      %v1245 = vpop.f32.mrf.mxu0
      %v1246 = vadd.f32 0.0, %v1245
      %v1247 = vpop.f32.mrf.mxu0
      %v1248 = vadd.f32 0.0, %v1247
      %1249 = vmatmul.bf16.gmra.mxu0 %v518
      %v1250 = vpop.f32.mrf.mxu0
      %v1251 = vadd.f32 0.0, %v1250
      %v1252 = vpop.f32.mrf.mxu0
      %v1253 = vadd.f32 0.0, %v1252
      %1254 = vmatmul.bf16.gmra.mxu0 %v1165
      %v1255 = vpop.f32.mrf.mxu0
      %v1256 = vadd.f32 0.0, %v1255
      %v1257 = vpop.f32.mrf.mxu0
      %v1258 = vadd.f32 0.0, %v1257
      %1259 = vdwg.mxu0
      %v1260 = vadd.f32 %v1153, %v1241
      %v1261 = vadd.f32 %v1154, %v1243
      %v1262 = vadd.f32 %v1155, %v1246
      %v1263 = vadd.f32 %v1156, %v1248
      %v1264 = vadd.f32 %v1157, %v1251
      %v1265 = vadd.f32 %v1158, %v1253
      %v1266 = vadd.f32 %v1159, %v1256
      %v1267 = vadd.f32 %v1160, %v1258
      %v1268 = vld [vmem:[%s2] sm:$0x1]
      %v1270 = vperm.slane %v1268, 0
      %v1272 = vmul.f32 %v1260, %v1270
      %v1273 = vmul.f32 %v1261, %v1270
      %v1274 = vmul.f32 %v1262, %v1270
      %v1275 = vmul.f32 %v1263, %v1270
      %v1276 = vmul.f32 %v1264, %v1270
      %v1277 = vmul.f32 %v1265, %v1270
      %v1278 = vmul.f32 %v1266, %v1270
      %v1279 = vmul.f32 %v1267, %v1270
      %v1280 = vld [vmem:[%s3] sm:$0x1]
      %v1282 = vperm.slane %v1280, 0
      %v1284 = vadd.f32 %v1272, %v1282
      %v1285 = vadd.f32 %v1273, %v1282
      %v1286 = vadd.f32 %v1274, %v1282
      %v1287 = vadd.f32 %v1275, %v1282
      %v1288 = vadd.f32 %v1276, %v1282
      %v1289 = vadd.f32 %v1277, %v1282
      %v1290 = vadd.f32 %v1278, %v1282
      %v1291 = vadd.f32 %v1279, %v1282
      %v1292 = vmax.f32 %v1284, 0.0
      %v1293 = vmax.f32 %v1285, 0.0
      %v1294 = vmax.f32 %v1286, 0.0
      %v1295 = vmax.f32 %v1287, 0.0
      %v1296 = vmax.f32 %v1288, 0.0
      %v1297 = vmax.f32 %v1289, 0.0
      %v1298 = vmax.f32 %v1290, 0.0
      %v1299 = vmax.f32 %v1291, 0.0
      %v1300 = vpack.c.bf16 %v1292, %v1292
      %v1301 = vpack.c.bf16 %v1293, %v1293
      %v1302 = vpack.c.bf16 %v1294, %v1294
      %v1303 = vpack.c.bf16 %v1295, %v1295
      %v1304 = vpack.c.bf16 %v1296, %v1296
      %v1305 = vpack.c.bf16 %v1297, %v1297
      %v1306 = vpack.c.bf16 %v1298, %v1298
      %v1307 = vpack.c.bf16 %v1299, %v1299
      %1308 = vst [vmem:[%s197] sm:$0xf] %v1300
      %1309 = vst [vmem:[%s197 + $0x4] sm:$0xf] %v1301
      %1310 = vst [vmem:[%s197 + $0x8] sm:$0xf] %v1302
      %1311 = vst [vmem:[%s197 + $0xc] sm:$0xf] %v1303
      %1312 = vst [vmem:[%s197 + $0x10] sm:$0xf] %v1304
      %1313 = vst [vmem:[%s197 + $0x14] sm:$0xf] %v1305
      %1314 = vst [vmem:[%s197 + $0x18] sm:$0xf] %v1306
      %1315 = vst [vmem:[%s197 + $0x1c] sm:$0xf] %v1307
      %p1316 = scmp.lt.s32.totalorder %s15, 1
      %s1317 = scalar_select %p1316, %s15, 1
      %s1318 = smul.addr %s1317, 8
      %s1319 = smul.addr %s1318, 4
      %s1320 = scalar_lea.vmem %s4, %s1319
      // Predicated region
      $region37: #{residual_block_forward.3} parent=35 // pred_check
        %p1321 = pneg %p122
      $region38: #{residual_block_forward.3} parent=35 // pred_check_branch
        %1323 = sbr.rel (%p1321) target = $region40
      $region39: #{residual_block_forward.3} parent=35 // pred_region
        _
      $region40: #{residual_block_forward.3} parent=35 // pred_fallthru
        _
    $region36: #{residual_block_forward.3} parent=5 // pred_fallthru
      _
    %p1324 = scmp.le.s32.totalorder 2, %s10
    // Predicated region
    $region41: #{residual_block_forward.3} parent=5 // pred_check
      %p1325 = pneg %p1324
    $region42: #{residual_block_forward.3} parent=5 // pred_check_branch
      %1327 = sbr.rel (%p1325) target = $region44
    $region43: #{residual_block_forward.3} parent=5 // pred_region
      %s1328 = ssub.s32 %s10, 2
      // Predicated region
      $region45: #{residual_block_forward.3} parent=43 // pred_check
        %p1329 = pneg %p128
      $region46: #{residual_block_forward.3} parent=43 // pred_check_branch
        %1331 = sbr.rel (%p1329) target = $region48
      $region47: #{residual_block_forward.3} parent=43 // pred_region
        %p1332 = scmp.lt.s32.totalorder %s16, 1
        %s1333 = scalar_select %p1332, %s16, 1
        %s1334 = smul.addr %s1333, 8
        %s1335 = smul.addr %s1334, 4
        %s1336 = scalar_lea.vmem %s4, %s1335
      $region48: #{residual_block_forward.3} parent=43 // pred_fallthru
        _
    $region44: #{residual_block_forward.3} parent=5 // pred_fallthru
      _
  $region6: #{residual_block_forward.3} parent=0 // loop_footer
    %s14 = sadd.s32 1, %s10
  $region7: #{residual_block_forward.3} parent=0 // loop_footer_branch
    %9 = sbr.rel target = $region3
  $region8: #{residual_block_forward.3} parent=0 // loop_exit
    _

// kernel: residual_block_forward.4
$region0: #{residual_block_forward.4}
  #allocation0 [shape = 'u32[]', space=smem, size = 0x4, offset = 0x4, fixed_abs, tag = 'smem constant byte address 0x4 - core index']
  #allocation1 [shape = 'u32[72,128]{1,0:T(1,128)}', space=vmem, size = 0x9000, scoped, tag = 'internal scratch']
  %s0 = inlined_call_operand.vmem [shape: bf16[2,10,10,128], index: 0, kind: input, shape index: {}]
  %s1 = inlined_call_operand.vmem [shape: bf16[3,3,128,128], index: 1, kind: input, shape index: {}]
  %s2 = inlined_call_operand.vmem [shape: f32[1,128], index: 2, kind: input, shape index: {}]
  %s3 = inlined_call_operand.vmem [shape: f32[1,128], index: 3, kind: input, shape index: {}]
  %s4 = inlined_call_operand.vmem [shape: bf16[2,64,128], index: 4, kind: output, shape index: {0}]
  %s5 = inlined_call_operand.vmem [shape: f32[2,1,128], index: 5, kind: output, shape index: {1}]
  %6 = xla_tuple %s4, %s5
  %s7 = sld [smem:[#allocation0]]
  $region57: #{residual_block_forward.4} parent=0
    _
  %s9 = ssub.s32 1, %s7
  %s10 = scalar_select 0, %s9, %s7
  loop: start=0, step=1, limit=4
  $region2: #{residual_block_forward.4} parent=0 // loop_pre_header
    _
  $region3: #{residual_block_forward.4} parent=0 // loop_header
    %s12 = sphi 0, %s16
    %p13 = scmp.ge.s32.totalorder %s12, 4
    %s22 = sphi 0, %s24
    %s25 = sphi 0, %s22
    %s26 = sphi 0, %s25
    %s42 = sphi 0, %s26
    %s46 = sphi 0, %s46
    %s48 = sphi 0, %s46
    %s49 = sphi 0, %s48
    %s63 = sphi 0, %s49
    %s67 = sphi 0, %s67
    %s69 = sphi 0, %s67
    %s70 = sphi 0, %s69
    %s84 = sphi 0, %s70
    %s88 = sphi 0, %s88
    %s90 = sphi 0, %s88
    %s91 = sphi 0, %s90
    %s105 = sphi 0, %s91
    %s111 = sphi 0, %s113
    %s114 = sphi 0, %s111
    %s115 = sphi 0, %s114
    %s131 = sphi 0, %s115
    %s137 = sphi 0, %s139
    %s140 = sphi 0, %s137
    %s141 = sphi 0, %s140
    %s157 = sphi 0, %s141
  $region4: #{residual_block_forward.4} parent=0 // loop_header_branch
    %15 = sbr.rel (%p13) target = $region8
  $region5: #{residual_block_forward.4} parent=0 // loop_body
    %s17 = ssub.s32 %s12, 1
    %s18 = ssub.s32 %s12, 2
    %s19 = sadd.s32 %s12, 1
    %s20 = ssub.s32 %s12, %s19
    %p21 = scmp.eq.s32.totalorder %s20, 0
    %s23 = sadd.s32 %s22, 1
    %s24 = scalar_select %p21, %s22, %s23
    %p27 = pneg %p21
    %p28 = scmp.eq.s32.totalorder %s12, 1
    %p29 = por %p27, %p28
    %p30 = scmp.ne.s32.totalorder %s22, %s25
    %p31 = scmp.eq.s32.totalorder %s12, 0
    %p32 = por %p30, %p31
    %p33 = scmp.ne.s32.totalorder %s22, %s25
    %p34 = scmp.eq.s32.totalorder %s17, 1
    %p35 = por %p33, %p34
    %p36 = scmp.ne.s32.totalorder %s25, %s26
    %p37 = scmp.eq.s32.totalorder %s17, 0
    %p38 = por %p36, %p37
    %p39 = scmp.ne.s32.totalorder %s25, %s26
    %p40 = scmp.eq.s32.totalorder %s18, 1
    %p41 = por %p39, %p40
    %p43 = scmp.ne.s32.totalorder %s26, %s42
    %p44 = scmp.eq.s32.totalorder %s18, 0
    %p45 = por %p43, %p44
    %s47 = sadd.s32 %s46, 1
    %p50 = scmp.eq.s32.totalorder %s12, 1
    %p51 = scmp.ne.s32.totalorder %s46, %s48
    %p52 = scmp.eq.s32.totalorder %s12, 0
    %p53 = por %p51, %p52
    %p54 = scmp.ne.s32.totalorder %s46, %s48
    %p55 = scmp.eq.s32.totalorder %s17, 1
    %p56 = por %p54, %p55
    %p57 = scmp.ne.s32.totalorder %s48, %s49
    %p58 = scmp.eq.s32.totalorder %s17, 0
    %p59 = por %p57, %p58
    %p60 = scmp.ne.s32.totalorder %s48, %s49
    %p61 = scmp.eq.s32.totalorder %s18, 1
    %p62 = por %p60, %p61
    %p64 = scmp.ne.s32.totalorder %s49, %s63
    %p65 = scmp.eq.s32.totalorder %s18, 0
    %p66 = por %p64, %p65
    %s68 = sadd.s32 %s67, 1
    %p71 = scmp.eq.s32.totalorder %s12, 1
    %p72 = scmp.ne.s32.totalorder %s67, %s69
    %p73 = scmp.eq.s32.totalorder %s12, 0
    %p74 = por %p72, %p73
    %p75 = scmp.ne.s32.totalorder %s67, %s69
    %p76 = scmp.eq.s32.totalorder %s17, 1
    %p77 = por %p75, %p76
    %p78 = scmp.ne.s32.totalorder %s69, %s70
    %p79 = scmp.eq.s32.totalorder %s17, 0
    %p80 = por %p78, %p79
    %p81 = scmp.ne.s32.totalorder %s69, %s70
    %p82 = scmp.eq.s32.totalorder %s18, 1
    %p83 = por %p81, %p82
    %p85 = scmp.ne.s32.totalorder %s70, %s84
    %p86 = scmp.eq.s32.totalorder %s18, 0
    %p87 = por %p85, %p86
    %s89 = sadd.s32 %s88, 1
    %p92 = scmp.eq.s32.totalorder %s12, 1
    %p93 = scmp.ne.s32.totalorder %s88, %s90
    %p94 = scmp.eq.s32.totalorder %s12, 0
    %p95 = por %p93, %p94
    %p96 = scmp.ne.s32.totalorder %s88, %s90
    %p97 = scmp.eq.s32.totalorder %s17, 1
    %p98 = por %p96, %p97
    %p99 = scmp.ne.s32.totalorder %s90, %s91
    %p100 = scmp.eq.s32.totalorder %s17, 0
    %p101 = por %p99, %p100
    %p102 = scmp.ne.s32.totalorder %s90, %s91
    %p103 = scmp.eq.s32.totalorder %s18, 1
    %p104 = por %p102, %p103
    %p106 = scmp.ne.s32.totalorder %s91, %s105
    %p107 = scmp.eq.s32.totalorder %s18, 0
    %p108 = por %p106, %p107
    %s109 = ssub.s32 %s12, %s19
    %p110 = scmp.eq.s32.totalorder %s109, 0
    %s112 = sadd.s32 %s111, 1
    %s113 = scalar_select %p110, %s111, %s112
    %p116 = pneg %p110
    %p117 = scmp.eq.s32.totalorder %s12, 1
    %p118 = por %p116, %p117
    %p119 = scmp.ne.s32.totalorder %s111, %s114
    %p120 = scmp.eq.s32.totalorder %s12, 0
    %p121 = por %p119, %p120
    %p122 = scmp.ne.s32.totalorder %s111, %s114
    %p123 = scmp.eq.s32.totalorder %s17, 1
    %p124 = por %p122, %p123
    %p125 = scmp.ne.s32.totalorder %s114, %s115
    %p126 = scmp.eq.s32.totalorder %s17, 0
    %p127 = por %p125, %p126
    %p128 = scmp.ne.s32.totalorder %s114, %s115
    %p129 = scmp.eq.s32.totalorder %s18, 1
    %p130 = por %p128, %p129
    %p132 = scmp.ne.s32.totalorder %s115, %s131
    %p133 = scmp.eq.s32.totalorder %s18, 0
    %p134 = por %p132, %p133
    %s135 = ssub.s32 %s12, %s19
    %p136 = scmp.eq.s32.totalorder %s135, 0
    %s138 = sadd.s32 %s137, 1
    %s139 = scalar_select %p136, %s137, %s138
    %p142 = pneg %p136
    %p143 = scmp.eq.s32.totalorder %s12, 1
    %p144 = por %p142, %p143
    %p145 = scmp.ne.s32.totalorder %s137, %s140
    %p146 = scmp.eq.s32.totalorder %s12, 0
    %p147 = por %p145, %p146
    %p148 = scmp.ne.s32.totalorder %s137, %s140
    %p149 = scmp.eq.s32.totalorder %s17, 1
    %p150 = por %p148, %p149
    %p151 = scmp.ne.s32.totalorder %s140, %s141
    %p152 = scmp.eq.s32.totalorder %s17, 0
    %p153 = por %p151, %p152
    %p154 = scmp.ne.s32.totalorder %s140, %s141
    %p155 = scmp.eq.s32.totalorder %s18, 1
    %p156 = por %p154, %p155
    %p158 = scmp.ne.s32.totalorder %s141, %s157
    %p159 = scmp.eq.s32.totalorder %s18, 0
    %p160 = por %p158, %p159
    %p161 = scmp.le.s32.totalorder 1, %s12
    %p162 = scmp.lt.s32.totalorder %s12, 3
    %p163 = pnand %p161, %p162
    %p164 = pneg %p163
    // Predicated region
    $region9: #{residual_block_forward.4} parent=5 // pred_check
      _
    $region10: #{residual_block_forward.4} parent=5 // pred_check_branch
      %166 = sbr.rel (%p163) target = $region12
    $region11: #{residual_block_forward.4} parent=5 // pred_region
      %s167 = ssub.s32 %s12, 1
      // Predicated region
      $region13: #{residual_block_forward.4} parent=11 // pred_check
        %p168 = pneg %p59
      $region14: #{residual_block_forward.4} parent=11 // pred_check_branch
        %170 = sbr.rel (%p168) target = $region16
      $region15: #{residual_block_forward.4} parent=11 // pred_region
        _
      $region16: #{residual_block_forward.4} parent=11 // pred_fallthru
        _
      // Predicated region
      $region17: #{residual_block_forward.4} parent=11 // pred_check
        %p171 = pneg %p80
      $region18: #{residual_block_forward.4} parent=11 // pred_check_branch
        %173 = sbr.rel (%p171) target = $region20
      $region19: #{residual_block_forward.4} parent=11 // pred_region
        _
      $region20: #{residual_block_forward.4} parent=11 // pred_fallthru
        _
      // Predicated region
      $region21: #{residual_block_forward.4} parent=11 // pred_check
        %p174 = pneg %p101
      $region22: #{residual_block_forward.4} parent=11 // pred_check_branch
        %176 = sbr.rel (%p174) target = $region24
      $region23: #{residual_block_forward.4} parent=11 // pred_region
        _
      $region24: #{residual_block_forward.4} parent=11 // pred_fallthru
        _
    $region12: #{residual_block_forward.4} parent=5 // pred_fallthru
      _
    %p177 = scmp.lt.s32.totalorder %s12, 2
    // Predicated region
    $region25: #{residual_block_forward.4} parent=5 // pred_check
      %p178 = pneg %p177
    $region26: #{residual_block_forward.4} parent=5 // pred_check_branch
      %180 = sbr.rel (%p178) target = $region28
    $region27: #{residual_block_forward.4} parent=5 // pred_region
      // Predicated region
      $region29: #{residual_block_forward.4} parent=27 // pred_check
        %p181 = pneg %p32
      $region30: #{residual_block_forward.4} parent=27 // pred_check_branch
        %183 = sbr.rel (%p181) target = $region32
      $region31: #{residual_block_forward.4} parent=27 // pred_region
        %p184 = scmp.lt.s32.totalorder %s12, 1
        %s185 = scalar_select %p184, %s12, 1
        %s186 = smul.addr %s185, 20
        %s187 = smul.addr %s186, 4
        %s188 = scalar_lea.vmem %s0, %s187
      $region32: #{residual_block_forward.4} parent=27 // pred_fallthru
        _
    $region28: #{residual_block_forward.4} parent=5 // pred_fallthru
      _
    %p189 = scmp.le.s32.totalorder 1, %s12
    %p190 = scmp.lt.s32.totalorder %s12, 3
    %p191 = pnand %p189, %p190
    %p192 = pneg %p191
    // Predicated region
    $region33: #{residual_block_forward.4} parent=5 // pred_check
      _
    $region34: #{residual_block_forward.4} parent=5 // pred_check_branch
      %194 = sbr.rel (%p191) target = $region36
    $region35: #{residual_block_forward.4} parent=5 // pred_region
      %s195 = ssub.s32 %s12, 1
      %p196 = scmp.lt.s32.totalorder %s17, 1
      %s197 = scalar_select %p196, %s17, 1
      %s198 = smul.addr %s197, 20
      %s199 = smul.addr %s198, 4
      %s200 = scalar_lea.vmem %s0, %s199
      %p201 = pneg %p38
      %p202 = pneg %p35
      %p203 = pneg %p59
      %p204 = pneg %p56
      %p205 = pneg %p80
      %p206 = pneg %p77
      %p207 = pneg %p101
      %p208 = pneg %p98
      %p209 = pneg %p127
      %p210 = pneg %p124
      %p211 = scmp.lt.s32.totalorder %s17, 1
      %s212 = scalar_select %p211, %s17, 1
      %s213 = smul.addr %s212, 8
      %s214 = smul.addr %s213, 4
      %s215 = scalar_lea.vmem %s4, %s214
      %p216 = pneg %p153
      %p217 = pneg %p150
      %p218 = scmp.lt.s32.totalorder %s17, 1
      %s219 = scalar_select %p218, %s17, 1
      %s220 = scalar_lea.vmem %s5, %s219
      %p221 = scmp.lt.s32.totalorder %s17, 1
      %s222 = scalar_select %p221, %s17, 1
      %s223 = smul.addr %s222, 20
      %s224 = smul.addr %s223, 4
      %s225 = scalar_lea.vmem %s0, %s224
      %p226 = scmp.lt.s32.totalorder %s17, 1
      %s227 = scalar_select %p226, %s17, 1
      %s228 = smul.addr %s227, 8
      %s229 = smul.addr %s228, 4
      %s230 = scalar_lea.vmem %s4, %s229
      %p231 = scmp.lt.s32.totalorder %s17, 1
      %s232 = scalar_select %p231, %s17, 1
      %s233 = scalar_lea.vmem %s5, %s232
      %v234 = vld [vmem:[%s225] sm:$0xf]
      %v235 = vld [vmem:[%s225 + $0x4] sm:$0x1]
      %v236 = vld [vmem:[%s225 + $0x8] sm:$0xf]
      %v237 = vld [vmem:[%s225 + $0xc] sm:$0x1]
      %v238 = vld [vmem:[%s225 + $0x10] sm:$0xf]
      %v239 = vld [vmem:[%s225 + $0x14] sm:$0x1]
      %v240 = vld [vmem:[%s225 + $0x18] sm:$0xf]
      %v241 = vld [vmem:[%s225 + $0x1c] sm:$0x1]
      %v242 = vld [vmem:[%s225 + $0x20] sm:$0xf]
      %v243 = vld [vmem:[%s225 + $0x24] sm:$0x1]
      %v244 = vld [vmem:[%s225 + $0x28] sm:$0xf]
      %v245 = vld [vmem:[%s225 + $0x2c] sm:$0x1]
      %v246 = vld [vmem:[%s225 + $0x30] sm:$0xf]
      %v247 = vld [vmem:[%s225 + $0x34] sm:$0x1]
      %v248 = vld [vmem:[%s225 + $0x38] sm:$0xf]
      %v249 = vld [vmem:[%s225 + $0x3c] sm:$0x1]
      %v250 = vld [vmem:[%s225 + $0x40] sm:$0xf]
      %v251 = vld [vmem:[%s225 + $0x44] sm:$0x1]
      %v252 = vld [vmem:[%s225 + $0x48] sm:$0xf]
      %v253 = vld [vmem:[%s225 + $0x4c] sm:$0x1]
      %v254 = vunpack.c.l.bf16 %v234
      %v255 = vunpack.c.l.bf16 %v235
      %v256 = vunpack.c.l.bf16 %v236
      %v257 = vunpack.c.l.bf16 %v237
      %v258 = vunpack.c.l.bf16 %v238
      %v259 = vunpack.c.l.bf16 %v239
      %v260 = vunpack.c.l.bf16 %v240
      %v261 = vunpack.c.l.bf16 %v241
      %v262 = vunpack.c.l.bf16 %v242
      %v263 = vunpack.c.l.bf16 %v243
      %v264 = vunpack.c.l.bf16 %v244
      %v265 = vunpack.c.l.bf16 %v245
      %v266 = vunpack.c.l.bf16 %v246
      %v267 = vunpack.c.l.bf16 %v247
      %v268 = vunpack.c.l.bf16 %v248
      %v269 = vunpack.c.l.bf16 %v249
      %v270 = vunpack.c.l.bf16 %v250
      %v271 = vunpack.c.l.bf16 %v251
      %v272 = vunpack.c.l.bf16 %v252
      %v273 = vunpack.c.l.bf16 %v253
      %v274 = vpack.c.bf16 %v256, %v254
      %v275 = vpack.c.bf16 %v260, %v258
      %v276 = vpack.c.bf16 %v264, %v262
      %v277 = vpack.c.bf16 %v268, %v266
      %v278 = vld [vmem:[%s1] sm:$0xf]
      %v279 = vld [vmem:[%s1 + $0x4] sm:$0xf]
      %v280 = vld [vmem:[%s1 + $0x8] sm:$0xf]
      %v281 = vld [vmem:[%s1 + $0xc] sm:$0xf]
      %v282 = vld [vmem:[%s1 + $0x10] sm:$0xf]
      %v283 = vld [vmem:[%s1 + $0x14] sm:$0xf]
      %v284 = vld [vmem:[%s1 + $0x18] sm:$0xf]
      %v285 = vld [vmem:[%s1 + $0x1c] sm:$0xf]
      %v286 = vld [vmem:[%s1 + $0x20] sm:$0xf]
      %v287 = vld [vmem:[%s1 + $0x24] sm:$0xf]
      %v288 = vld [vmem:[%s1 + $0x28] sm:$0xf]
      %v289 = vld [vmem:[%s1 + $0x2c] sm:$0xf]
      %v290 = vld [vmem:[%s1 + $0x30] sm:$0xf]
      %v291 = vld [vmem:[%s1 + $0x34] sm:$0xf]
      %v292 = vld [vmem:[%s1 + $0x38] sm:$0xf]
      %v293 = vld [vmem:[%s1 + $0x3c] sm:$0xf]
      %vm310 = vcmask 1046528
      %v311 = vrot.slane %v254, 1
      %v312 = vrot.slane %v255, 1
      %v313 = vsel %vm310, %v311, %v312
      %v314 = vrot.slane %v256, 1
      %v315 = vrot.slane %v257, 1
      %v316 = vsel %vm310, %v314, %v315
      %v317 = vrot.slane %v258, 1
      %v318 = vrot.slane %v259, 1
      %v319 = vsel %vm310, %v317, %v318
      %v320 = vrot.slane %v260, 1
      %v321 = vrot.slane %v261, 1
      %v322 = vsel %vm310, %v320, %v321
      %v323 = vrot.slane %v262, 1
      %v324 = vrot.slane %v263, 1
      %v325 = vsel %vm310, %v323, %v324
      %v326 = vrot.slane %v264, 1
      %v327 = vrot.slane %v265, 1
      %v328 = vsel %vm310, %v326, %v327
      %v329 = vrot.slane %v266, 1
      %v330 = vrot.slane %v267, 1
      %v331 = vsel %vm310, %v329, %v330
      %v332 = vrot.slane %v268, 1
      %v333 = vrot.slane %v269, 1
      %v334 = vsel %vm310, %v332, %v333
      %v343 = vpack.c.bf16 %v316, %v313
      %v344 = vpack.c.bf16 %v322, %v319
      %v345 = vpack.c.bf16 %v328, %v325
      %v346 = vpack.c.bf16 %v334, %v331
      %s347 = scalar_lea.vmem %s1, 64
      %v348 = vld [vmem:[%s347] sm:$0xf]
      %v349 = vld [vmem:[%s347 + $0x4] sm:$0xf]
      %v350 = vld [vmem:[%s347 + $0x8] sm:$0xf]
      %v351 = vld [vmem:[%s347 + $0xc] sm:$0xf]
      %v352 = vld [vmem:[%s347 + $0x10] sm:$0xf]
      %v353 = vld [vmem:[%s347 + $0x14] sm:$0xf]
      %v354 = vld [vmem:[%s347 + $0x18] sm:$0xf]
      %v355 = vld [vmem:[%s347 + $0x1c] sm:$0xf]
      %v356 = vld [vmem:[%s347 + $0x20] sm:$0xf]
      %v357 = vld [vmem:[%s347 + $0x24] sm:$0xf]
      %v358 = vld [vmem:[%s347 + $0x28] sm:$0xf]
      %v359 = vld [vmem:[%s347 + $0x2c] sm:$0xf]
      %v360 = vld [vmem:[%s347 + $0x30] sm:$0xf]
      %v361 = vld [vmem:[%s347 + $0x34] sm:$0xf]
      %v362 = vld [vmem:[%s347 + $0x38] sm:$0xf]
      %v363 = vld [vmem:[%s347 + $0x3c] sm:$0xf]
      %v380 = vunpack.c.l.b16 %v348
      %v381 = vunpack.c.l.b16 %v349
      %v382 = vunpack.c.l.b16 %v350
      %v383 = vunpack.c.l.b16 %v351
      %v384 = vunpack.c.l.b16 %v352
      %v385 = vunpack.c.l.b16 %v353
      %v386 = vunpack.c.l.b16 %v354
      %v387 = vunpack.c.l.b16 %v355
      %v388 = vunpack.c.l.b16 %v356
      %v389 = vunpack.c.l.b16 %v357
      %v390 = vunpack.c.l.b16 %v358
      %v391 = vunpack.c.l.b16 %v359
      %v392 = vunpack.c.l.b16 %v360
      %v393 = vunpack.c.l.b16 %v361
      %v394 = vunpack.c.l.b16 %v362
      %v395 = vunpack.c.l.b16 %v363
      %v396 = vpack.c.b16 %v381, %v380
      %v397 = vpack.c.b16 %v383, %v382
      %v398 = vpack.c.b16 %v385, %v384
      %v399 = vpack.c.b16 %v387, %v386
      %v400 = vpack.c.b16 %v389, %v388
      %v401 = vpack.c.b16 %v391, %v390
      %v402 = vpack.c.b16 %v393, %v392
      %v403 = vpack.c.b16 %v395, %v394
      %412 = vmatpush.bf16.msra.mxu0 %v403
      %413 = vmatpush.bf16.msra.mxu0 %v402
      %414 = vmatpush.bf16.msra.mxu0 %v401
      %415 = vmatpush.bf16.msra.mxu0 %v400
      %416 = vmatpush.bf16.msra.mxu0 %v399
      %417 = vmatpush.bf16.msra.mxu0 %v398
      %418 = vmatpush.bf16.msra.mxu0 %v397
      %419 = vmatpush.bf16.msra.mxu0 %v396
      %420 = vmatmul.bf16.gmra.mxu0 %v343
      %v421 = vpop.f32.mrf.mxu0
      %v422 = vadd.f32 0.0, %v421
      %v423 = vpop.f32.mrf.mxu0
      %v424 = vadd.f32 0.0, %v423
      %425 = vmatmul.bf16.gmra.mxu0 %v344
      %v426 = vpop.f32.mrf.mxu0
      %v427 = vadd.f32 0.0, %v426
      %v428 = vpop.f32.mrf.mxu0
      %v429 = vadd.f32 0.0, %v428
      %430 = vmatmul.bf16.gmra.mxu0 %v345
      %v431 = vpop.f32.mrf.mxu0
      %v432 = vadd.f32 0.0, %v431
      %v433 = vpop.f32.mrf.mxu0
      %v434 = vadd.f32 0.0, %v433
      %435 = vmatmul.bf16.gmra.mxu0 %v346
      %v436 = vpop.f32.mrf.mxu0
      %v437 = vadd.f32 0.0, %v436
      %v438 = vpop.f32.mrf.mxu0
      %v439 = vadd.f32 0.0, %v438
      %440 = vdwg.mxu0
      %v457 = vunpack.c.l.b16 %v278
      %v458 = vunpack.c.l.b16 %v279
      %v459 = vunpack.c.l.b16 %v280
      %v460 = vunpack.c.l.b16 %v281
      %v461 = vunpack.c.l.b16 %v282
      %v462 = vunpack.c.l.b16 %v283
      %v463 = vunpack.c.l.b16 %v284
      %v464 = vunpack.c.l.b16 %v285
      %v465 = vunpack.c.l.b16 %v286
      %v466 = vunpack.c.l.b16 %v287
      %v467 = vunpack.c.l.b16 %v288
      %v468 = vunpack.c.l.b16 %v289
      %v469 = vunpack.c.l.b16 %v290
      %v470 = vunpack.c.l.b16 %v291
      %v471 = vunpack.c.l.b16 %v292
      %v472 = vunpack.c.l.b16 %v293
      %v473 = vpack.c.b16 %v458, %v457
      %v474 = vpack.c.b16 %v460, %v459
      %v475 = vpack.c.b16 %v462, %v461
      %v476 = vpack.c.b16 %v464, %v463
      %v477 = vpack.c.b16 %v466, %v465
      %v478 = vpack.c.b16 %v468, %v467
      %v479 = vpack.c.b16 %v470, %v469
      %v480 = vpack.c.b16 %v472, %v471
      %489 = vmatpush.bf16.msra.mxu0 %v480
      %490 = vmatpush.bf16.msra.mxu0 %v479
      %491 = vmatpush.bf16.msra.mxu0 %v478
      %492 = vmatpush.bf16.msra.mxu0 %v477
      %493 = vmatpush.bf16.msra.mxu0 %v476
      %494 = vmatpush.bf16.msra.mxu0 %v475
      %495 = vmatpush.bf16.msra.mxu0 %v474
      %496 = vmatpush.bf16.msra.mxu0 %v473
      %497 = vmatmul.bf16.gmra.mxu0 %v274
      %v498 = vpop.f32.mrf.mxu0
      %v499 = vadd.f32 %v422, %v498
      %v500 = vpop.f32.mrf.mxu0
      %v501 = vadd.f32 %v424, %v500
      %502 = vmatmul.bf16.gmra.mxu0 %v275
      %v503 = vpop.f32.mrf.mxu0
      %v504 = vadd.f32 %v427, %v503
      %v505 = vpop.f32.mrf.mxu0
      %v506 = vadd.f32 %v429, %v505
      %507 = vmatmul.bf16.gmra.mxu0 %v276
      %v508 = vpop.f32.mrf.mxu0
      %v509 = vadd.f32 %v432, %v508
      %v510 = vpop.f32.mrf.mxu0
      %v511 = vadd.f32 %v434, %v510
      %512 = vmatmul.bf16.gmra.mxu0 %v277
      %v513 = vpop.f32.mrf.mxu0
      %v514 = vadd.f32 %v437, %v513
      %v515 = vpop.f32.mrf.mxu0
      %v516 = vadd.f32 %v439, %v515
      %517 = vdwg.mxu0
      %vm518 = vcmask 1045504
      %v519 = vrot.slane %v254, 2
      %v520 = vrot.slane %v255, 2
      %v521 = vsel %vm518, %v519, %v520
      %v522 = vrot.slane %v256, 2
      %v523 = vrot.slane %v257, 2
      %v524 = vsel %vm518, %v522, %v523
      %v525 = vrot.slane %v258, 2
      %v526 = vrot.slane %v259, 2
      %v527 = vsel %vm518, %v525, %v526
      %v528 = vrot.slane %v260, 2
      %v529 = vrot.slane %v261, 2
      %v530 = vsel %vm518, %v528, %v529
      %v531 = vrot.slane %v262, 2
      %v532 = vrot.slane %v263, 2
      %v533 = vsel %vm518, %v531, %v532
      %v534 = vrot.slane %v264, 2
      %v535 = vrot.slane %v265, 2
      %v536 = vsel %vm518, %v534, %v535
      %v537 = vrot.slane %v266, 2
      %v538 = vrot.slane %v267, 2
      %v539 = vsel %vm518, %v537, %v538
      %v540 = vrot.slane %v268, 2
      %v541 = vrot.slane %v269, 2
      %v542 = vsel %vm518, %v540, %v541
      %v551 = vpack.c.bf16 %v524, %v521
      %v552 = vpack.c.bf16 %v530, %v527
      %v553 = vpack.c.bf16 %v536, %v533
      %v554 = vpack.c.bf16 %v542, %v539
      %s555 = scalar_lea.vmem %s1, 128
      %v556 = vld [vmem:[%s555] sm:$0xf]
      %v557 = vld [vmem:[%s555 + $0x4] sm:$0xf]
      %v558 = vld [vmem:[%s555 + $0x8] sm:$0xf]
      %v559 = vld [vmem:[%s555 + $0xc] sm:$0xf]
      %v560 = vld [vmem:[%s555 + $0x10] sm:$0xf]
      %v561 = vld [vmem:[%s555 + $0x14] sm:$0xf]
      %v562 = vld [vmem:[%s555 + $0x18] sm:$0xf]
      %v563 = vld [vmem:[%s555 + $0x1c] sm:$0xf]
      %v564 = vld [vmem:[%s555 + $0x20] sm:$0xf]
      %v565 = vld [vmem:[%s555 + $0x24] sm:$0xf]
      %v566 = vld [vmem:[%s555 + $0x28] sm:$0xf]
      %v567 = vld [vmem:[%s555 + $0x2c] sm:$0xf]
      %v568 = vld [vmem:[%s555 + $0x30] sm:$0xf]
      %v569 = vld [vmem:[%s555 + $0x34] sm:$0xf]
      %v570 = vld [vmem:[%s555 + $0x38] sm:$0xf]
      %v571 = vld [vmem:[%s555 + $0x3c] sm:$0xf]
      %v588 = vunpack.c.l.b16 %v556
      %v589 = vunpack.c.l.b16 %v557
      %v590 = vunpack.c.l.b16 %v558
      %v591 = vunpack.c.l.b16 %v559
      %v592 = vunpack.c.l.b16 %v560
      %v593 = vunpack.c.l.b16 %v561
      %v594 = vunpack.c.l.b16 %v562
      %v595 = vunpack.c.l.b16 %v563
      %v596 = vunpack.c.l.b16 %v564
      %v597 = vunpack.c.l.b16 %v565
      %v598 = vunpack.c.l.b16 %v566
      %v599 = vunpack.c.l.b16 %v567
      %v600 = vunpack.c.l.b16 %v568
      %v601 = vunpack.c.l.b16 %v569
      %v602 = vunpack.c.l.b16 %v570
      %v603 = vunpack.c.l.b16 %v571
      %v604 = vpack.c.b16 %v589, %v588
      %v605 = vpack.c.b16 %v591, %v590
      %v606 = vpack.c.b16 %v593, %v592
      %v607 = vpack.c.b16 %v595, %v594
      %v608 = vpack.c.b16 %v597, %v596
      %v609 = vpack.c.b16 %v599, %v598
      %v610 = vpack.c.b16 %v601, %v600
      %v611 = vpack.c.b16 %v603, %v602
      %620 = vmatpush.bf16.msra.mxu0 %v611
      %621 = vmatpush.bf16.msra.mxu0 %v610
      %622 = vmatpush.bf16.msra.mxu0 %v609
      %623 = vmatpush.bf16.msra.mxu0 %v608
      %624 = vmatpush.bf16.msra.mxu0 %v607
      %625 = vmatpush.bf16.msra.mxu0 %v606
      %626 = vmatpush.bf16.msra.mxu0 %v605
      %627 = vmatpush.bf16.msra.mxu0 %v604
      %628 = vmatmul.bf16.gmra.mxu0 %v551
      %v629 = vpop.f32.mrf.mxu0
      %v630 = vadd.f32 0.0, %v629
      %v631 = vpop.f32.mrf.mxu0
      %v632 = vadd.f32 0.0, %v631
      %633 = vmatmul.bf16.gmra.mxu0 %v552
      %v634 = vpop.f32.mrf.mxu0
      %v635 = vadd.f32 0.0, %v634
      %v636 = vpop.f32.mrf.mxu0
      %v637 = vadd.f32 0.0, %v636
      %638 = vmatmul.bf16.gmra.mxu0 %v553
      %v639 = vpop.f32.mrf.mxu0
      %v640 = vadd.f32 0.0, %v639
      %v641 = vpop.f32.mrf.mxu0
      %v642 = vadd.f32 0.0, %v641
      %643 = vmatmul.bf16.gmra.mxu0 %v554
      %v644 = vpop.f32.mrf.mxu0
      %v645 = vadd.f32 0.0, %v644
      %v646 = vpop.f32.mrf.mxu0
      %v647 = vadd.f32 0.0, %v646
      %648 = vdwg.mxu0
      %v649 = vadd.f32 %v499, %v630
      %v650 = vadd.f32 %v501, %v632
      %v651 = vadd.f32 %v504, %v635
      %v652 = vadd.f32 %v506, %v637
      %v653 = vadd.f32 %v509, %v640
      %v654 = vadd.f32 %v511, %v642
      %v655 = vadd.f32 %v514, %v645
      %v656 = vadd.f32 %v516, %v647
      %v657 = vpack.c.bf16 %v258, %v256
      %v658 = vpack.c.bf16 %v262, %v260
      %v659 = vpack.c.bf16 %v266, %v264
      %v660 = vpack.c.bf16 %v270, %v268
      %s661 = scalar_lea.vmem %s1, 192
      %v662 = vld [vmem:[%s661] sm:$0xf]
      %v663 = vld [vmem:[%s661 + $0x4] sm:$0xf]
      %v664 = vld [vmem:[%s661 + $0x8] sm:$0xf]
      %v665 = vld [vmem:[%s661 + $0xc] sm:$0xf]
      %v666 = vld [vmem:[%s661 + $0x10] sm:$0xf]
      %v667 = vld [vmem:[%s661 + $0x14] sm:$0xf]
      %v668 = vld [vmem:[%s661 + $0x18] sm:$0xf]
      %v669 = vld [vmem:[%s661 + $0x1c] sm:$0xf]
      %v670 = vld [vmem:[%s661 + $0x20] sm:$0xf]
      %v671 = vld [vmem:[%s661 + $0x24] sm:$0xf]
      %v672 = vld [vmem:[%s661 + $0x28] sm:$0xf]
      %v673 = vld [vmem:[%s661 + $0x2c] sm:$0xf]
      %v674 = vld [vmem:[%s661 + $0x30] sm:$0xf]
      %v675 = vld [vmem:[%s661 + $0x34] sm:$0xf]
      %v676 = vld [vmem:[%s661 + $0x38] sm:$0xf]
      %v677 = vld [vmem:[%s661 + $0x3c] sm:$0xf]
      %v694 = vunpack.c.l.b16 %v662
      %v695 = vunpack.c.l.b16 %v663
      %v696 = vunpack.c.l.b16 %v664
      %v697 = vunpack.c.l.b16 %v665
      %v698 = vunpack.c.l.b16 %v666
      %v699 = vunpack.c.l.b16 %v667
      %v700 = vunpack.c.l.b16 %v668
      %v701 = vunpack.c.l.b16 %v669
      %v702 = vunpack.c.l.b16 %v670
      %v703 = vunpack.c.l.b16 %v671
      %v704 = vunpack.c.l.b16 %v672
      %v705 = vunpack.c.l.b16 %v673
      %v706 = vunpack.c.l.b16 %v674
      %v707 = vunpack.c.l.b16 %v675
      %v708 = vunpack.c.l.b16 %v676
      %v709 = vunpack.c.l.b16 %v677
      %v710 = vpack.c.b16 %v695, %v694
      %v711 = vpack.c.b16 %v697, %v696
      %v712 = vpack.c.b16 %v699, %v698
      %v713 = vpack.c.b16 %v701, %v700
      %v714 = vpack.c.b16 %v703, %v702
      %v715 = vpack.c.b16 %v705, %v704
      %v716 = vpack.c.b16 %v707, %v706
      %v717 = vpack.c.b16 %v709, %v708
      %726 = vmatpush.bf16.msra.mxu0 %v717
      %727 = vmatpush.bf16.msra.mxu0 %v716
      %728 = vmatpush.bf16.msra.mxu0 %v715
      %729 = vmatpush.bf16.msra.mxu0 %v714
      %730 = vmatpush.bf16.msra.mxu0 %v713
      %731 = vmatpush.bf16.msra.mxu0 %v712
      %732 = vmatpush.bf16.msra.mxu0 %v711
      %733 = vmatpush.bf16.msra.mxu0 %v710
      %734 = vmatmul.bf16.gmra.mxu0 %v657
      %v735 = vpop.f32.mrf.mxu0
      %v736 = vadd.f32 0.0, %v735
      %v737 = vpop.f32.mrf.mxu0
      %v738 = vadd.f32 0.0, %v737
      %739 = vmatmul.bf16.gmra.mxu0 %v658
      %v740 = vpop.f32.mrf.mxu0
      %v741 = vadd.f32 0.0, %v740
      %v742 = vpop.f32.mrf.mxu0
      %v743 = vadd.f32 0.0, %v742
      %744 = vmatmul.bf16.gmra.mxu0 %v659
      %v745 = vpop.f32.mrf.mxu0
      %v746 = vadd.f32 0.0, %v745
      %v747 = vpop.f32.mrf.mxu0
      %v748 = vadd.f32 0.0, %v747
      %749 = vmatmul.bf16.gmra.mxu0 %v660
      %v750 = vpop.f32.mrf.mxu0
      %v751 = vadd.f32 0.0, %v750
      %v752 = vpop.f32.mrf.mxu0
      %v753 = vadd.f32 0.0, %v752
      %754 = vdwg.mxu0
      %v755 = vadd.f32 %v649, %v736
      %v756 = vadd.f32 %v650, %v738
      %v757 = vadd.f32 %v651, %v741
      %v758 = vadd.f32 %v652, %v743
      %v759 = vadd.f32 %v653, %v746
      %v760 = vadd.f32 %v654, %v748
      %v761 = vadd.f32 %v655, %v751
      %v762 = vadd.f32 %v656, %v753
      %v765 = vrot.slane %v270, 1
      %v766 = vrot.slane %v271, 1
      %v767 = vsel %vm310, %v765, %v766
      %v769 = vpack.c.bf16 %v319, %v316
      %v770 = vpack.c.bf16 %v325, %v322
      %v771 = vpack.c.bf16 %v331, %v328
      %v772 = vpack.c.bf16 %v767, %v334
      %s773 = scalar_lea.vmem %s1, 256
      %v774 = vld [vmem:[%s773] sm:$0xf]
      %v775 = vld [vmem:[%s773 + $0x4] sm:$0xf]
      %v776 = vld [vmem:[%s773 + $0x8] sm:$0xf]
      %v777 = vld [vmem:[%s773 + $0xc] sm:$0xf]
      %v778 = vld [vmem:[%s773 + $0x10] sm:$0xf]
      %v779 = vld [vmem:[%s773 + $0x14] sm:$0xf]
      %v780 = vld [vmem:[%s773 + $0x18] sm:$0xf]
      %v781 = vld [vmem:[%s773 + $0x1c] sm:$0xf]
      %v782 = vld [vmem:[%s773 + $0x20] sm:$0xf]
      %v783 = vld [vmem:[%s773 + $0x24] sm:$0xf]
      %v784 = vld [vmem:[%s773 + $0x28] sm:$0xf]
      %v785 = vld [vmem:[%s773 + $0x2c] sm:$0xf]
      %v786 = vld [vmem:[%s773 + $0x30] sm:$0xf]
      %v787 = vld [vmem:[%s773 + $0x34] sm:$0xf]
      %v788 = vld [vmem:[%s773 + $0x38] sm:$0xf]
      %v789 = vld [vmem:[%s773 + $0x3c] sm:$0xf]
      %v806 = vunpack.c.l.b16 %v774
      %v807 = vunpack.c.l.b16 %v775
      %v808 = vunpack.c.l.b16 %v776
      %v809 = vunpack.c.l.b16 %v777
      %v810 = vunpack.c.l.b16 %v778
      %v811 = vunpack.c.l.b16 %v779
      %v812 = vunpack.c.l.b16 %v780
      %v813 = vunpack.c.l.b16 %v781
      %v814 = vunpack.c.l.b16 %v782
      %v815 = vunpack.c.l.b16 %v783
      %v816 = vunpack.c.l.b16 %v784
      %v817 = vunpack.c.l.b16 %v785
      %v818 = vunpack.c.l.b16 %v786
      %v819 = vunpack.c.l.b16 %v787
      %v820 = vunpack.c.l.b16 %v788
      %v821 = vunpack.c.l.b16 %v789
      %v822 = vpack.c.b16 %v807, %v806
      %v823 = vpack.c.b16 %v809, %v808
      %v824 = vpack.c.b16 %v811, %v810
      %v825 = vpack.c.b16 %v813, %v812
      %v826 = vpack.c.b16 %v815, %v814
      %v827 = vpack.c.b16 %v817, %v816
      %v828 = vpack.c.b16 %v819, %v818
      %v829 = vpack.c.b16 %v821, %v820
      %838 = vmatpush.bf16.msra.mxu0 %v829
      %839 = vmatpush.bf16.msra.mxu0 %v828
      %840 = vmatpush.bf16.msra.mxu0 %v827
      %841 = vmatpush.bf16.msra.mxu0 %v826
      %842 = vmatpush.bf16.msra.mxu0 %v825
      %843 = vmatpush.bf16.msra.mxu0 %v824
      %844 = vmatpush.bf16.msra.mxu0 %v823
      %845 = vmatpush.bf16.msra.mxu0 %v822
      %846 = vmatmul.bf16.gmra.mxu0 %v769
      %v847 = vpop.f32.mrf.mxu0
      %v848 = vadd.f32 0.0, %v847
      %v849 = vpop.f32.mrf.mxu0
      %v850 = vadd.f32 0.0, %v849
      %851 = vmatmul.bf16.gmra.mxu0 %v770
      %v852 = vpop.f32.mrf.mxu0
      %v853 = vadd.f32 0.0, %v852
      %v854 = vpop.f32.mrf.mxu0
      %v855 = vadd.f32 0.0, %v854
      %856 = vmatmul.bf16.gmra.mxu0 %v771
      %v857 = vpop.f32.mrf.mxu0
      %v858 = vadd.f32 0.0, %v857
      %v859 = vpop.f32.mrf.mxu0
      %v860 = vadd.f32 0.0, %v859
      %861 = vmatmul.bf16.gmra.mxu0 %v772
      %v862 = vpop.f32.mrf.mxu0
      %v863 = vadd.f32 0.0, %v862
      %v864 = vpop.f32.mrf.mxu0
      %v865 = vadd.f32 0.0, %v864
      %866 = vdwg.mxu0
      %v867 = vadd.f32 %v755, %v848
      %v868 = vadd.f32 %v756, %v850
      %v869 = vadd.f32 %v757, %v853
      %v870 = vadd.f32 %v758, %v855
      %v871 = vadd.f32 %v759, %v858
      %v872 = vadd.f32 %v760, %v860
      %v873 = vadd.f32 %v761, %v863
      %v874 = vadd.f32 %v762, %v865
      %v875 = vrot.slane %v270, 2
      %v876 = vrot.slane %v271, 2
      %v877 = vsel %vm518, %v875, %v876
      %v879 = vpack.c.bf16 %v527, %v524
      %v880 = vpack.c.bf16 %v533, %v530
      %v881 = vpack.c.bf16 %v539, %v536
      %v882 = vpack.c.bf16 %v877, %v542
      %s883 = scalar_lea.vmem %s1, 320
      %v884 = vld [vmem:[%s883] sm:$0xf]
      %v885 = vld [vmem:[%s883 + $0x4] sm:$0xf]
      %v886 = vld [vmem:[%s883 + $0x8] sm:$0xf]
      %v887 = vld [vmem:[%s883 + $0xc] sm:$0xf]
      %v888 = vld [vmem:[%s883 + $0x10] sm:$0xf]
      %v889 = vld [vmem:[%s883 + $0x14] sm:$0xf]
      %v890 = vld [vmem:[%s883 + $0x18] sm:$0xf]
      %v891 = vld [vmem:[%s883 + $0x1c] sm:$0xf]
      %v892 = vld [vmem:[%s883 + $0x20] sm:$0xf]
      %v893 = vld [vmem:[%s883 + $0x24] sm:$0xf]
      %v894 = vld [vmem:[%s883 + $0x28] sm:$0xf]
      %v895 = vld [vmem:[%s883 + $0x2c] sm:$0xf]
      %v896 = vld [vmem:[%s883 + $0x30] sm:$0xf]
      %v897 = vld [vmem:[%s883 + $0x34] sm:$0xf]
      %v898 = vld [vmem:[%s883 + $0x38] sm:$0xf]
      %v899 = vld [vmem:[%s883 + $0x3c] sm:$0xf]
      %v916 = vunpack.c.l.b16 %v884
      %v917 = vunpack.c.l.b16 %v885
      %v918 = vunpack.c.l.b16 %v886
      %v919 = vunpack.c.l.b16 %v887
      %v920 = vunpack.c.l.b16 %v888
      %v921 = vunpack.c.l.b16 %v889
      %v922 = vunpack.c.l.b16 %v890
      %v923 = vunpack.c.l.b16 %v891
      %v924 = vunpack.c.l.b16 %v892
      %v925 = vunpack.c.l.b16 %v893
      %v926 = vunpack.c.l.b16 %v894
      %v927 = vunpack.c.l.b16 %v895
      %v928 = vunpack.c.l.b16 %v896
      %v929 = vunpack.c.l.b16 %v897
      %v930 = vunpack.c.l.b16 %v898
      %v931 = vunpack.c.l.b16 %v899
      %v932 = vpack.c.b16 %v917, %v916
      %v933 = vpack.c.b16 %v919, %v918
      %v934 = vpack.c.b16 %v921, %v920
      %v935 = vpack.c.b16 %v923, %v922
      %v936 = vpack.c.b16 %v925, %v924
      %v937 = vpack.c.b16 %v927, %v926
      %v938 = vpack.c.b16 %v929, %v928
      %v939 = vpack.c.b16 %v931, %v930
      %948 = vmatpush.bf16.msra.mxu0 %v939
      %949 = vmatpush.bf16.msra.mxu0 %v938
      %950 = vmatpush.bf16.msra.mxu0 %v937
      %951 = vmatpush.bf16.msra.mxu0 %v936
      %952 = vmatpush.bf16.msra.mxu0 %v935
      %953 = vmatpush.bf16.msra.mxu0 %v934
      %954 = vmatpush.bf16.msra.mxu0 %v933
      %955 = vmatpush.bf16.msra.mxu0 %v932
      %956 = vmatmul.bf16.gmra.mxu0 %v879
      %v957 = vpop.f32.mrf.mxu0
      %v958 = vadd.f32 0.0, %v957
      %v959 = vpop.f32.mrf.mxu0
      %v960 = vadd.f32 0.0, %v959
      %961 = vmatmul.bf16.gmra.mxu0 %v880
      %v962 = vpop.f32.mrf.mxu0
      %v963 = vadd.f32 0.0, %v962
      %v964 = vpop.f32.mrf.mxu0
      %v965 = vadd.f32 0.0, %v964
      %966 = vmatmul.bf16.gmra.mxu0 %v881
      %v967 = vpop.f32.mrf.mxu0
      %v968 = vadd.f32 0.0, %v967
      %v969 = vpop.f32.mrf.mxu0
      %v970 = vadd.f32 0.0, %v969
      %971 = vmatmul.bf16.gmra.mxu0 %v882
      %v972 = vpop.f32.mrf.mxu0
      %v973 = vadd.f32 0.0, %v972
      %v974 = vpop.f32.mrf.mxu0
      %v975 = vadd.f32 0.0, %v974
      %976 = vdwg.mxu0
      %v977 = vadd.f32 %v867, %v958
      %v978 = vadd.f32 %v868, %v960
      %v979 = vadd.f32 %v869, %v963
      %v980 = vadd.f32 %v870, %v965
      %v981 = vadd.f32 %v871, %v968
      %v982 = vadd.f32 %v872, %v970
      %v983 = vadd.f32 %v873, %v973
      %v984 = vadd.f32 %v874, %v975
      %v985 = vpack.c.bf16 %v272, %v270
      %s986 = scalar_lea.vmem %s1, 384
      %v987 = vld [vmem:[%s986] sm:$0xf]
      %v988 = vld [vmem:[%s986 + $0x4] sm:$0xf]
      %v989 = vld [vmem:[%s986 + $0x8] sm:$0xf]
      %v990 = vld [vmem:[%s986 + $0xc] sm:$0xf]
      %v991 = vld [vmem:[%s986 + $0x10] sm:$0xf]
      %v992 = vld [vmem:[%s986 + $0x14] sm:$0xf]
      %v993 = vld [vmem:[%s986 + $0x18] sm:$0xf]
      %v994 = vld [vmem:[%s986 + $0x1c] sm:$0xf]
      %v995 = vld [vmem:[%s986 + $0x20] sm:$0xf]
      %v996 = vld [vmem:[%s986 + $0x24] sm:$0xf]
      %v997 = vld [vmem:[%s986 + $0x28] sm:$0xf]
      %v998 = vld [vmem:[%s986 + $0x2c] sm:$0xf]
      %v999 = vld [vmem:[%s986 + $0x30] sm:$0xf]
      %v1000 = vld [vmem:[%s986 + $0x34] sm:$0xf]
      %v1001 = vld [vmem:[%s986 + $0x38] sm:$0xf]
      %v1002 = vld [vmem:[%s986 + $0x3c] sm:$0xf]
      %v1019 = vunpack.c.l.b16 %v987
      %v1020 = vunpack.c.l.b16 %v988
      %v1021 = vunpack.c.l.b16 %v989
      %v1022 = vunpack.c.l.b16 %v990
      %v1023 = vunpack.c.l.b16 %v991
      %v1024 = vunpack.c.l.b16 %v992
      %v1025 = vunpack.c.l.b16 %v993
      %v1026 = vunpack.c.l.b16 %v994
      %v1027 = vunpack.c.l.b16 %v995
      %v1028 = vunpack.c.l.b16 %v996
      %v1029 = vunpack.c.l.b16 %v997
      %v1030 = vunpack.c.l.b16 %v998
      %v1031 = vunpack.c.l.b16 %v999
      %v1032 = vunpack.c.l.b16 %v1000
      %v1033 = vunpack.c.l.b16 %v1001
      %v1034 = vunpack.c.l.b16 %v1002
      %v1035 = vpack.c.b16 %v1020, %v1019
      %v1036 = vpack.c.b16 %v1022, %v1021
      %v1037 = vpack.c.b16 %v1024, %v1023
      %v1038 = vpack.c.b16 %v1026, %v1025
      %v1039 = vpack.c.b16 %v1028, %v1027
      %v1040 = vpack.c.b16 %v1030, %v1029
      %v1041 = vpack.c.b16 %v1032, %v1031
      %v1042 = vpack.c.b16 %v1034, %v1033
      %1051 = vmatpush.bf16.msra.mxu0 %v1042
      %1052 = vmatpush.bf16.msra.mxu0 %v1041
      %1053 = vmatpush.bf16.msra.mxu0 %v1040
      %1054 = vmatpush.bf16.msra.mxu0 %v1039
      %1055 = vmatpush.bf16.msra.mxu0 %v1038
      %1056 = vmatpush.bf16.msra.mxu0 %v1037
      %1057 = vmatpush.bf16.msra.mxu0 %v1036
      %1058 = vmatpush.bf16.msra.mxu0 %v1035
      %1059 = vmatmul.bf16.gmra.mxu0 %v275
      %v1060 = vpop.f32.mrf.mxu0
      %v1061 = vadd.f32 0.0, %v1060
      %v1062 = vpop.f32.mrf.mxu0
      %v1063 = vadd.f32 0.0, %v1062
      %1064 = vmatmul.bf16.gmra.mxu0 %v276
      %v1065 = vpop.f32.mrf.mxu0
      %v1066 = vadd.f32 0.0, %v1065
      %v1067 = vpop.f32.mrf.mxu0
      %v1068 = vadd.f32 0.0, %v1067
      %1069 = vmatmul.bf16.gmra.mxu0 %v277
      %v1070 = vpop.f32.mrf.mxu0
      %v1071 = vadd.f32 0.0, %v1070
      %v1072 = vpop.f32.mrf.mxu0
      %v1073 = vadd.f32 0.0, %v1072
      %1074 = vmatmul.bf16.gmra.mxu0 %v985
      %v1075 = vpop.f32.mrf.mxu0
      %v1076 = vadd.f32 0.0, %v1075
      %v1077 = vpop.f32.mrf.mxu0
      %v1078 = vadd.f32 0.0, %v1077
      %1079 = vdwg.mxu0
      %v1080 = vadd.f32 %v977, %v1061
      %v1081 = vadd.f32 %v978, %v1063
      %v1082 = vadd.f32 %v979, %v1066
      %v1083 = vadd.f32 %v980, %v1068
      %v1084 = vadd.f32 %v981, %v1071
      %v1085 = vadd.f32 %v982, %v1073
      %v1086 = vadd.f32 %v983, %v1076
      %v1087 = vadd.f32 %v984, %v1078
      %v1090 = vrot.slane %v272, 1
      %v1091 = vrot.slane %v273, 1
      %v1092 = vsel %vm310, %v1090, %v1091
      %v1094 = vpack.c.bf16 %v1092, %v767
      %s1095 = scalar_lea.vmem %s1, 448
      %v1096 = vld [vmem:[%s1095] sm:$0xf]
      %v1097 = vld [vmem:[%s1095 + $0x4] sm:$0xf]
      %v1098 = vld [vmem:[%s1095 + $0x8] sm:$0xf]
      %v1099 = vld [vmem:[%s1095 + $0xc] sm:$0xf]
      %v1100 = vld [vmem:[%s1095 + $0x10] sm:$0xf]
      %v1101 = vld [vmem:[%s1095 + $0x14] sm:$0xf]
      %v1102 = vld [vmem:[%s1095 + $0x18] sm:$0xf]
      %v1103 = vld [vmem:[%s1095 + $0x1c] sm:$0xf]
      %v1104 = vld [vmem:[%s1095 + $0x20] sm:$0xf]
      %v1105 = vld [vmem:[%s1095 + $0x24] sm:$0xf]
      %v1106 = vld [vmem:[%s1095 + $0x28] sm:$0xf]
      %v1107 = vld [vmem:[%s1095 + $0x2c] sm:$0xf]
      %v1108 = vld [vmem:[%s1095 + $0x30] sm:$0xf]
      %v1109 = vld [vmem:[%s1095 + $0x34] sm:$0xf]
      %v1110 = vld [vmem:[%s1095 + $0x38] sm:$0xf]
      %v1111 = vld [vmem:[%s1095 + $0x3c] sm:$0xf]
      %v1128 = vunpack.c.l.b16 %v1096
      %v1129 = vunpack.c.l.b16 %v1097
      %v1130 = vunpack.c.l.b16 %v1098
      %v1131 = vunpack.c.l.b16 %v1099
      %v1132 = vunpack.c.l.b16 %v1100
      %v1133 = vunpack.c.l.b16 %v1101
      %v1134 = vunpack.c.l.b16 %v1102
      %v1135 = vunpack.c.l.b16 %v1103
      %v1136 = vunpack.c.l.b16 %v1104
      %v1137 = vunpack.c.l.b16 %v1105
      %v1138 = vunpack.c.l.b16 %v1106
      %v1139 = vunpack.c.l.b16 %v1107
      %v1140 = vunpack.c.l.b16 %v1108
      %v1141 = vunpack.c.l.b16 %v1109
      %v1142 = vunpack.c.l.b16 %v1110
      %v1143 = vunpack.c.l.b16 %v1111
      %v1144 = vpack.c.b16 %v1129, %v1128
      %v1145 = vpack.c.b16 %v1131, %v1130
      %v1146 = vpack.c.b16 %v1133, %v1132
      %v1147 = vpack.c.b16 %v1135, %v1134
      %v1148 = vpack.c.b16 %v1137, %v1136
      %v1149 = vpack.c.b16 %v1139, %v1138
      %v1150 = vpack.c.b16 %v1141, %v1140
      %v1151 = vpack.c.b16 %v1143, %v1142
      %1160 = vmatpush.bf16.msra.mxu0 %v1151
      %1161 = vmatpush.bf16.msra.mxu0 %v1150
      %1162 = vmatpush.bf16.msra.mxu0 %v1149
      %1163 = vmatpush.bf16.msra.mxu0 %v1148
      %1164 = vmatpush.bf16.msra.mxu0 %v1147
      %1165 = vmatpush.bf16.msra.mxu0 %v1146
      %1166 = vmatpush.bf16.msra.mxu0 %v1145
      %1167 = vmatpush.bf16.msra.mxu0 %v1144
      %1168 = vmatmul.bf16.gmra.mxu0 %v344
      %v1169 = vpop.f32.mrf.mxu0
      %v1170 = vadd.f32 0.0, %v1169
      %v1171 = vpop.f32.mrf.mxu0
      %v1172 = vadd.f32 0.0, %v1171
      %1173 = vmatmul.bf16.gmra.mxu0 %v345
      %v1174 = vpop.f32.mrf.mxu0
      %v1175 = vadd.f32 0.0, %v1174
      %v1176 = vpop.f32.mrf.mxu0
      %v1177 = vadd.f32 0.0, %v1176
      %1178 = vmatmul.bf16.gmra.mxu0 %v346
      %v1179 = vpop.f32.mrf.mxu0
      %v1180 = vadd.f32 0.0, %v1179
      %v1181 = vpop.f32.mrf.mxu0
      %v1182 = vadd.f32 0.0, %v1181
      %1183 = vmatmul.bf16.gmra.mxu0 %v1094
      %v1184 = vpop.f32.mrf.mxu0
      %v1185 = vadd.f32 0.0, %v1184
      %v1186 = vpop.f32.mrf.mxu0
      %v1187 = vadd.f32 0.0, %v1186
      %1188 = vdwg.mxu0
      %v1189 = vadd.f32 %v1080, %v1170
      %v1190 = vadd.f32 %v1081, %v1172
      %v1191 = vadd.f32 %v1082, %v1175
      %v1192 = vadd.f32 %v1083, %v1177
      %v1193 = vadd.f32 %v1084, %v1180
      %v1194 = vadd.f32 %v1085, %v1182
      %v1195 = vadd.f32 %v1086, %v1185
      %v1196 = vadd.f32 %v1087, %v1187
      %v1197 = vrot.slane %v272, 2
      %v1198 = vrot.slane %v273, 2
      %v1199 = vsel %vm518, %v1197, %v1198
      %v1201 = vpack.c.bf16 %v1199, %v877
      %s1202 = scalar_lea.vmem %s1, 512
      %v1203 = vld [vmem:[%s1202] sm:$0xf]
      %v1204 = vld [vmem:[%s1202 + $0x4] sm:$0xf]
      %v1205 = vld [vmem:[%s1202 + $0x8] sm:$0xf]
      %v1206 = vld [vmem:[%s1202 + $0xc] sm:$0xf]
      %v1207 = vld [vmem:[%s1202 + $0x10] sm:$0xf]
      %v1208 = vld [vmem:[%s1202 + $0x14] sm:$0xf]
      %v1209 = vld [vmem:[%s1202 + $0x18] sm:$0xf]
      %v1210 = vld [vmem:[%s1202 + $0x1c] sm:$0xf]
      %v1211 = vld [vmem:[%s1202 + $0x20] sm:$0xf]
      %v1212 = vld [vmem:[%s1202 + $0x24] sm:$0xf]
      %v1213 = vld [vmem:[%s1202 + $0x28] sm:$0xf]
      %v1214 = vld [vmem:[%s1202 + $0x2c] sm:$0xf]
      %v1215 = vld [vmem:[%s1202 + $0x30] sm:$0xf]
      %v1216 = vld [vmem:[%s1202 + $0x34] sm:$0xf]
      %v1217 = vld [vmem:[%s1202 + $0x38] sm:$0xf]
      %v1218 = vld [vmem:[%s1202 + $0x3c] sm:$0xf]
      %v1235 = vunpack.c.l.b16 %v1203
      %v1236 = vunpack.c.l.b16 %v1204
      %v1237 = vunpack.c.l.b16 %v1205
      %v1238 = vunpack.c.l.b16 %v1206
      %v1239 = vunpack.c.l.b16 %v1207
      %v1240 = vunpack.c.l.b16 %v1208
      %v1241 = vunpack.c.l.b16 %v1209
      %v1242 = vunpack.c.l.b16 %v1210
      %v1243 = vunpack.c.l.b16 %v1211
      %v1244 = vunpack.c.l.b16 %v1212
      %v1245 = vunpack.c.l.b16 %v1213
      %v1246 = vunpack.c.l.b16 %v1214
      %v1247 = vunpack.c.l.b16 %v1215
      %v1248 = vunpack.c.l.b16 %v1216
      %v1249 = vunpack.c.l.b16 %v1217
      %v1250 = vunpack.c.l.b16 %v1218
      %v1251 = vpack.c.b16 %v1236, %v1235
      %v1252 = vpack.c.b16 %v1238, %v1237
      %v1253 = vpack.c.b16 %v1240, %v1239
      %v1254 = vpack.c.b16 %v1242, %v1241
      %v1255 = vpack.c.b16 %v1244, %v1243
      %v1256 = vpack.c.b16 %v1246, %v1245
      %v1257 = vpack.c.b16 %v1248, %v1247
      %v1258 = vpack.c.b16 %v1250, %v1249
      %1267 = vmatpush.bf16.msra.mxu0 %v1258
      %1268 = vmatpush.bf16.msra.mxu0 %v1257
      %1269 = vmatpush.bf16.msra.mxu0 %v1256
      %1270 = vmatpush.bf16.msra.mxu0 %v1255
      %1271 = vmatpush.bf16.msra.mxu0 %v1254
      %1272 = vmatpush.bf16.msra.mxu0 %v1253
      %1273 = vmatpush.bf16.msra.mxu0 %v1252
      %1274 = vmatpush.bf16.msra.mxu0 %v1251
      %1275 = vmatmul.bf16.gmra.mxu0 %v552
      %v1276 = vpop.f32.mrf.mxu0
      %v1277 = vadd.f32 0.0, %v1276
      %v1278 = vpop.f32.mrf.mxu0
      %v1279 = vadd.f32 0.0, %v1278
      %1280 = vmatmul.bf16.gmra.mxu0 %v553
      %v1281 = vpop.f32.mrf.mxu0
      %v1282 = vadd.f32 0.0, %v1281
      %v1283 = vpop.f32.mrf.mxu0
      %v1284 = vadd.f32 0.0, %v1283
      %1285 = vmatmul.bf16.gmra.mxu0 %v554
      %v1286 = vpop.f32.mrf.mxu0
      %v1287 = vadd.f32 0.0, %v1286
      %v1288 = vpop.f32.mrf.mxu0
      %v1289 = vadd.f32 0.0, %v1288
      %1290 = vmatmul.bf16.gmra.mxu0 %v1201
      %v1291 = vpop.f32.mrf.mxu0
      %v1292 = vadd.f32 0.0, %v1291
      %v1293 = vpop.f32.mrf.mxu0
      %v1294 = vadd.f32 0.0, %v1293
      %1295 = vdwg.mxu0
      %v1296 = vadd.f32 %v1189, %v1277
      %v1297 = vadd.f32 %v1190, %v1279
      %v1298 = vadd.f32 %v1191, %v1282
      %v1299 = vadd.f32 %v1192, %v1284
      %v1300 = vadd.f32 %v1193, %v1287
      %v1301 = vadd.f32 %v1194, %v1289
      %v1302 = vadd.f32 %v1195, %v1292
      %v1303 = vadd.f32 %v1196, %v1294
      %v1304 = vld [vmem:[%s2] sm:$0x1]
      %v1306 = vperm.slane %v1304, 0
      %v1308 = vmul.f32 %v1296, %v1306
      %v1309 = vmul.f32 %v1297, %v1306
      %v1310 = vmul.f32 %v1298, %v1306
      %v1311 = vmul.f32 %v1299, %v1306
      %v1312 = vmul.f32 %v1300, %v1306
      %v1313 = vmul.f32 %v1301, %v1306
      %v1314 = vmul.f32 %v1302, %v1306
      %v1315 = vmul.f32 %v1303, %v1306
      %v1316 = vld [vmem:[%s3] sm:$0x1]
      %v1318 = vperm.slane %v1316, 0
      %v1320 = vadd.f32 %v1308, %v1318
      %v1321 = vadd.f32 %v1309, %v1318
      %v1322 = vadd.f32 %v1310, %v1318
      %v1323 = vadd.f32 %v1311, %v1318
      %v1324 = vadd.f32 %v1312, %v1318
      %v1325 = vadd.f32 %v1313, %v1318
      %v1326 = vadd.f32 %v1314, %v1318
      %v1327 = vadd.f32 %v1315, %v1318
      %v1328 = vpack.c.bf16 %v1320, %v1320
      %v1329 = vpack.c.bf16 %v1321, %v1321
      %v1330 = vpack.c.bf16 %v1322, %v1322
      %v1331 = vpack.c.bf16 %v1323, %v1323
      %v1332 = vpack.c.bf16 %v1324, %v1324
      %v1333 = vpack.c.bf16 %v1325, %v1325
      %v1334 = vpack.c.bf16 %v1326, %v1326
      %v1335 = vpack.c.bf16 %v1327, %v1327
      %1336 = vst [vmem:[%s230] sm:$0xf] %v1328
      %1337 = vst [vmem:[%s230 + $0x4] sm:$0xf] %v1329
      %1338 = vst [vmem:[%s230 + $0x8] sm:$0xf] %v1330
      %1339 = vst [vmem:[%s230 + $0xc] sm:$0xf] %v1331
      %1340 = vst [vmem:[%s230 + $0x10] sm:$0xf] %v1332
      %1341 = vst [vmem:[%s230 + $0x14] sm:$0xf] %v1333
      %1342 = vst [vmem:[%s230 + $0x18] sm:$0xf] %v1334
      %1343 = vst [vmem:[%s230 + $0x1c] sm:$0xf] %v1335
      %v1344 = vadd.f32 %v1320, %v1321
      %v1345 = vadd.f32 %v1344, %v1322
      %v1346 = vadd.f32 %v1345, %v1323
      %v1347 = vadd.f32 %v1346, %v1324
      %v1348 = vadd.f32 %v1347, %v1325
      %v1349 = vadd.f32 %v1348, %v1326
      %v1350 = vadd.f32 %v1349, %v1327
      %v1351 = vrot.slane %v1350, 4
      %v1352 = vadd.f32 %v1350, %v1351
      %v1353 = vrot.slane %v1352, 2
      %v1354 = vadd.f32 %v1352, %v1353
      %v1355 = vrot.slane %v1354, 1
      %v1356 = vadd.f32 %v1354, %v1355
      %1357 = vst [vmem:[%s233] sm:$0x1] %v1356
      %p1358 = scmp.lt.s32.totalorder %s17, 1
      %s1359 = scalar_select %p1358, %s17, 1
      %s1360 = smul.addr %s1359, 8
      %s1361 = smul.addr %s1360, 4
      %s1362 = scalar_lea.vmem %s4, %s1361
      %p1363 = scmp.lt.s32.totalorder %s17, 1
      %s1364 = scalar_select %p1363, %s17, 1
      %s1365 = scalar_lea.vmem %s5, %s1364
      // Predicated region
      $region37: #{residual_block_forward.4} parent=35 // pred_check
        %p1366 = pneg %p124
      $region38: #{residual_block_forward.4} parent=35 // pred_check_branch
        %1368 = sbr.rel (%p1366) target = $region40
      $region39: #{residual_block_forward.4} parent=35 // pred_region
        _
      $region40: #{residual_block_forward.4} parent=35 // pred_fallthru
        _
      // Predicated region
      $region41: #{residual_block_forward.4} parent=35 // pred_check
        %p1369 = pneg %p150
      $region42: #{residual_block_forward.4} parent=35 // pred_check_branch
        %1371 = sbr.rel (%p1369) target = $region44
      $region43: #{residual_block_forward.4} parent=35 // pred_region
        _
      $region44: #{residual_block_forward.4} parent=35 // pred_fallthru
        _
    $region36: #{residual_block_forward.4} parent=5 // pred_fallthru
      _
    %p1372 = scmp.le.s32.totalorder 2, %s12
    // Predicated region
    $region45: #{residual_block_forward.4} parent=5 // pred_check
      %p1373 = pneg %p1372
    $region46: #{residual_block_forward.4} parent=5 // pred_check_branch
      %1375 = sbr.rel (%p1373) target = $region48
    $region47: #{residual_block_forward.4} parent=5 // pred_region
      %s1376 = ssub.s32 %s12, 2
      // Predicated region
      $region49: #{residual_block_forward.4} parent=47 // pred_check
        %p1377 = pneg %p130
      $region50: #{residual_block_forward.4} parent=47 // pred_check_branch
        %1379 = sbr.rel (%p1377) target = $region52
      $region51: #{residual_block_forward.4} parent=47 // pred_region
        %p1380 = scmp.lt.s32.totalorder %s18, 1
        %s1381 = scalar_select %p1380, %s18, 1
        %s1382 = smul.addr %s1381, 8
        %s1383 = smul.addr %s1382, 4
        %s1384 = scalar_lea.vmem %s4, %s1383
      $region52: #{residual_block_forward.4} parent=47 // pred_fallthru
        _
      // Predicated region
      $region53: #{residual_block_forward.4} parent=47 // pred_check
        %p1385 = pneg %p156
      $region54: #{residual_block_forward.4} parent=47 // pred_check_branch
        %1387 = sbr.rel (%p1385) target = $region56
      $region55: #{residual_block_forward.4} parent=47 // pred_region
        %p1388 = scmp.lt.s32.totalorder %s18, 1
        %s1389 = scalar_select %p1388, %s18, 1
        %s1390 = scalar_lea.vmem %s5, %s1389
      $region56: #{residual_block_forward.4} parent=47 // pred_fallthru
        _
    $region48: #{residual_block_forward.4} parent=5 // pred_fallthru
      _
  $region6: #{residual_block_forward.4} parent=0 // loop_footer
    %s16 = sadd.s32 1, %s12
  $region7: #{residual_block_forward.4} parent=0 // loop_footer_branch
    %11 = sbr.rel target = $region3
  $region8: #{residual_block_forward.4} parent=0 // loop_exit
    _

// kernel: squeeze.89
$region0: #{squeeze.89}
  %s0 = inlined_call_operand.vmem [shape: f32[2,128], index: 0, kind: input, shape index: {}]
  %s1 = inlined_call_operand.vmem [shape: f32[2,8,16], index: 1, kind: output, shape index: {}]
  $region1: #{squeeze.89} parent=0
    #allocation0 [shape = 'u8[4096]{0}', space=vmem, size = 0x1000, scoped, tag = 'scoped mem for input reshape']
    %s3 = ssub.s32 4, 1
    %v4 = vld [vmem:[%s0] sm:%s3]
    %5 = vst [vmem:[#allocation0] sm:%s3] %v4
    %v6 = vld [vmem:[#allocation0] sm:$0x3]
    %vm7 = vcmask 130048
    %8 = vst.msk [vmem:[%s1] ss:$8 sm:$0x3] %vm7, %v6
    %v9 = vld [vmem:[#allocation0] sm:$0x3]
    %10 = vrot.lane.b32.xlu0 %v9, 112
    %v11 = vpop.permute.xlu0 %10
    %vm12 = vcmask 130048
    %s13 = scalar_lea.vmem %s1, 1
    %14 = vst.msk [vmem:[%s13] ss:$8 sm:$0x3] %vm12, %v11
    %v15 = vld [vmem:[#allocation0] sm:$0x3]
    %16 = vrot.lane.b32.xlu0 %v15, 96
    %v17 = vpop.permute.xlu0 %16
    %vm18 = vcmask 130048
    %s19 = scalar_lea.vmem %s1, 2
    %20 = vst.msk [vmem:[%s19] ss:$8 sm:$0x3] %vm18, %v17
    %v21 = vld [vmem:[#allocation0] sm:$0x3]
    %22 = vrot.lane.b32.xlu0 %v21, 80
    %v23 = vpop.permute.xlu0 %22
    %vm24 = vcmask 130048
    %s25 = scalar_lea.vmem %s1, 3
    %26 = vst.msk [vmem:[%s25] ss:$8 sm:$0x3] %vm24, %v23
    %v27 = vld [vmem:[#allocation0] sm:$0x3]
    %28 = vrot.lane.b32.xlu0 %v27, 64
    %v29 = vpop.permute.xlu0 %28
    %vm30 = vcmask 130048
    %s31 = scalar_lea.vmem %s1, 4
    %32 = vst.msk [vmem:[%s31] ss:$8 sm:$0x3] %vm30, %v29
    %v33 = vld [vmem:[#allocation0] sm:$0x3]
    %34 = vrot.lane.b32.xlu0 %v33, 48
    %v35 = vpop.permute.xlu0 %34
    %vm36 = vcmask 130048
    %s37 = scalar_lea.vmem %s1, 5
    %38 = vst.msk [vmem:[%s37] ss:$8 sm:$0x3] %vm36, %v35
    %v39 = vld [vmem:[#allocation0] sm:$0x3]
    %40 = vrot.lane.b32.xlu0 %v39, 32
    %v41 = vpop.permute.xlu0 %40
    %vm42 = vcmask 130048
    %s43 = scalar_lea.vmem %s1, 6
    %44 = vst.msk [vmem:[%s43] ss:$8 sm:$0x3] %vm42, %v41
    %v45 = vld [vmem:[#allocation0] sm:$0x3]
    %46 = vrot.lane.b32.xlu0 %v45, 16
    %v47 = vpop.permute.xlu0 %46
    %vm48 = vcmask 130048
    %s49 = scalar_lea.vmem %s1, 7
    %50 = vst.msk [vmem:[%s49] ss:$8 sm:$0x3] %vm48, %v47

// kernel: residual_block_forward.5
$region0: #{residual_block_forward.5}
  #allocation0 [shape = 'u32[]', space=smem, size = 0x4, offset = 0x4, fixed_abs, tag = 'smem constant byte address 0x4 - core index']
  #allocation1 [shape = 'u32[72,128]{1,0:T(1,128)}', space=vmem, size = 0x9000, scoped, tag = 'internal scratch']
  %s0 = inlined_call_operand.vmem [shape: bf16[2,64,128], index: 0, kind: input, shape index: {}]
  %s1 = inlined_call_operand.vmem [shape: f32[2,64,128], index: 1, kind: input, shape index: {}]
  %s2 = inlined_call_operand.vmem [shape: f32[2,1,128], index: 2, kind: input, shape index: {}]
  %s3 = inlined_call_operand.vmem [shape: f32[2,64,128], index: 3, kind: output, shape index: {}]
  %s4 = sld [smem:[#allocation0]]
  $region45: #{residual_block_forward.5} parent=0
    _
  %s6 = ssub.s32 1, %s4
  %s7 = scalar_select 0, %s6, %s4
  loop: start=0, step=1, limit=4
  $region2: #{residual_block_forward.5} parent=0 // loop_pre_header
    _
  $region3: #{residual_block_forward.5} parent=0 // loop_header
    %s9 = sphi 0, %s13
    %p10 = scmp.ge.s32.totalorder %s9, 4
    %s16 = sphi 0, %s28
    %s17 = sphi 0, %s24
    %s18 = sphi 0, %s16
    %s19 = sphi 0, %s17
    %s20 = sphi 0, %s18
    %s21 = sphi 0, %s19
    %s33 = sphi 0, %s35
    %s36 = sphi 0, %s33
    %s37 = sphi 0, %s36
    %s53 = sphi 0, %s37
    %s61 = sphi 0, %s63
    %s64 = sphi 0, %s61
    %s65 = sphi 0, %s64
    %s81 = sphi 0, %s65
    %s87 = sphi 0, %s89
    %s90 = sphi 0, %s87
    %s91 = sphi 0, %s90
    %s107 = sphi 0, %s91
    %s115 = sphi 0, %s117
    %s118 = sphi 0, %s115
    %s119 = sphi 0, %s118
    %s135 = sphi 0, %s119
  $region4: #{residual_block_forward.5} parent=0 // loop_header_branch
    %12 = sbr.rel (%p10) target = $region8
  $region5: #{residual_block_forward.5} parent=0 // loop_body
    %s14 = ssub.s32 %s9, 1
    %s15 = ssub.s32 %s9, 2
    %s22 = sadd.s32 1, %s17
    %p23 = scmp.ge.s32.totalorder %s22, 1
    %s24 = scalar_select %p23, 0, %s22
    %s25 = sadd.s32 1, %s16
    %s26 = scalar_select %p23, %s25, %s16
    %p27 = scmp.ge.s32.totalorder %s26, 2
    %s28 = scalar_select %p27, 0, %s26
    %s29 = ssub.s32 %s16, %s28
    %s30 = ssub.s32 %s17, %s24
    %s31 = sor.u32 %s29, %s30
    %p32 = scmp.eq.s32.totalorder %s31, 0
    %s34 = sadd.s32 %s33, 1
    %s35 = scalar_select %p32, %s33, %s34
    %p38 = pneg %p32
    %p39 = scmp.eq.s32.totalorder %s9, 1
    %p40 = por %p38, %p39
    %p41 = scmp.ne.s32.totalorder %s33, %s36
    %p42 = scmp.eq.s32.totalorder %s9, 0
    %p43 = por %p41, %p42
    %p44 = scmp.ne.s32.totalorder %s33, %s36
    %p45 = scmp.eq.s32.totalorder %s14, 1
    %p46 = por %p44, %p45
    %p47 = scmp.ne.s32.totalorder %s36, %s37
    %p48 = scmp.eq.s32.totalorder %s14, 0
    %p49 = por %p47, %p48
    %p50 = scmp.ne.s32.totalorder %s36, %s37
    %p51 = scmp.eq.s32.totalorder %s15, 1
    %p52 = por %p50, %p51
    %p54 = scmp.ne.s32.totalorder %s37, %s53
    %p55 = scmp.eq.s32.totalorder %s15, 0
    %p56 = por %p54, %p55
    %s57 = ssub.s32 %s16, %s28
    %s58 = ssub.s32 %s17, %s24
    %s59 = sor.u32 %s57, %s58
    %p60 = scmp.eq.s32.totalorder %s59, 0
    %s62 = sadd.s32 %s61, 1
    %s63 = scalar_select %p60, %s61, %s62
    %p66 = pneg %p60
    %p67 = scmp.eq.s32.totalorder %s9, 1
    %p68 = por %p66, %p67
    %p69 = scmp.ne.s32.totalorder %s61, %s64
    %p70 = scmp.eq.s32.totalorder %s9, 0
    %p71 = por %p69, %p70
    %p72 = scmp.ne.s32.totalorder %s61, %s64
    %p73 = scmp.eq.s32.totalorder %s14, 1
    %p74 = por %p72, %p73
    %p75 = scmp.ne.s32.totalorder %s64, %s65
    %p76 = scmp.eq.s32.totalorder %s14, 0
    %p77 = por %p75, %p76
    %p78 = scmp.ne.s32.totalorder %s64, %s65
    %p79 = scmp.eq.s32.totalorder %s15, 1
    %p80 = por %p78, %p79
    %p82 = scmp.ne.s32.totalorder %s65, %s81
    %p83 = scmp.eq.s32.totalorder %s15, 0
    %p84 = por %p82, %p83
    %s85 = ssub.s32 %s16, %s28
    %p86 = scmp.eq.s32.totalorder %s85, 0
    %s88 = sadd.s32 %s87, 1
    %s89 = scalar_select %p86, %s87, %s88
    %p92 = pneg %p86
    %p93 = scmp.eq.s32.totalorder %s9, 1
    %p94 = por %p92, %p93
    %p95 = scmp.ne.s32.totalorder %s87, %s90
    %p96 = scmp.eq.s32.totalorder %s9, 0
    %p97 = por %p95, %p96
    %p98 = scmp.ne.s32.totalorder %s87, %s90
    %p99 = scmp.eq.s32.totalorder %s14, 1
    %p100 = por %p98, %p99
    %p101 = scmp.ne.s32.totalorder %s90, %s91
    %p102 = scmp.eq.s32.totalorder %s14, 0
    %p103 = por %p101, %p102
    %p104 = scmp.ne.s32.totalorder %s90, %s91
    %p105 = scmp.eq.s32.totalorder %s15, 1
    %p106 = por %p104, %p105
    %p108 = scmp.ne.s32.totalorder %s91, %s107
    %p109 = scmp.eq.s32.totalorder %s15, 0
    %p110 = por %p108, %p109
    %s111 = ssub.s32 %s16, %s28
    %s112 = ssub.s32 %s17, %s24
    %s113 = sor.u32 %s111, %s112
    %p114 = scmp.eq.s32.totalorder %s113, 0
    %s116 = sadd.s32 %s115, 1
    %s117 = scalar_select %p114, %s115, %s116
    %p120 = pneg %p114
    %p121 = scmp.eq.s32.totalorder %s9, 1
    %p122 = por %p120, %p121
    %p123 = scmp.ne.s32.totalorder %s115, %s118
    %p124 = scmp.eq.s32.totalorder %s9, 0
    %p125 = por %p123, %p124
    %p126 = scmp.ne.s32.totalorder %s115, %s118
    %p127 = scmp.eq.s32.totalorder %s14, 1
    %p128 = por %p126, %p127
    %p129 = scmp.ne.s32.totalorder %s118, %s119
    %p130 = scmp.eq.s32.totalorder %s14, 0
    %p131 = por %p129, %p130
    %p132 = scmp.ne.s32.totalorder %s118, %s119
    %p133 = scmp.eq.s32.totalorder %s15, 1
    %p134 = por %p132, %p133
    %p136 = scmp.ne.s32.totalorder %s119, %s135
    %p137 = scmp.eq.s32.totalorder %s15, 0
    %p138 = por %p136, %p137
    %p139 = scmp.le.s32.totalorder 1, %s9
    %p140 = scmp.lt.s32.totalorder %s9, 3
    %p141 = pnand %p139, %p140
    %p142 = pneg %p141
    // Predicated region
    $region9: #{residual_block_forward.5} parent=5 // pred_check
      _
    $region10: #{residual_block_forward.5} parent=5 // pred_check_branch
      %144 = sbr.rel (%p141) target = $region12
    $region11: #{residual_block_forward.5} parent=5 // pred_region
      %s145 = ssub.s32 %s9, 1
    $region12: #{residual_block_forward.5} parent=5 // pred_fallthru
      _
    %p146 = scmp.lt.s32.totalorder %s9, 2
    // Predicated region
    $region13: #{residual_block_forward.5} parent=5 // pred_check
      %p147 = pneg %p146
    $region14: #{residual_block_forward.5} parent=5 // pred_check_branch
      %149 = sbr.rel (%p147) target = $region16
    $region15: #{residual_block_forward.5} parent=5 // pred_region
      // Predicated region
      $region17: #{residual_block_forward.5} parent=15 // pred_check
        %p150 = pneg %p43
      $region18: #{residual_block_forward.5} parent=15 // pred_check_branch
        %152 = sbr.rel (%p150) target = $region20
      $region19: #{residual_block_forward.5} parent=15 // pred_region
        %s153 = smul.u32 8, %s17
        %p154 = scmp.lt.s32.totalorder %s16, 1
        %s155 = scalar_select %p154, %s16, 1
        %p156 = scmp.lt.s32.totalorder %s153, 7
        %s157 = scalar_select %p156, %s153, 7
        %s158 = smul.addr %s155, 8
        %s159 = sadd.s32 %s157, %s158
        %s160 = smul.addr %s159, 4
        %s161 = scalar_lea.vmem %s0, %s160
        %s162 = smul.u32 8, %s17
      $region20: #{residual_block_forward.5} parent=15 // pred_fallthru
        _
      // Predicated region
      $region21: #{residual_block_forward.5} parent=15 // pred_check
        %p163 = pneg %p71
      $region22: #{residual_block_forward.5} parent=15 // pred_check_branch
        %165 = sbr.rel (%p163) target = $region24
      $region23: #{residual_block_forward.5} parent=15 // pred_region
        %s166 = smul.u32 8, %s17
        %p167 = scmp.lt.s32.totalorder %s16, 1
        %s168 = scalar_select %p167, %s16, 1
        %p169 = scmp.lt.s32.totalorder %s166, 7
        %s170 = scalar_select %p169, %s166, 7
        %s171 = smul.addr %s168, 8
        %s172 = sadd.s32 %s170, %s171
        %s173 = smul.addr %s172, 8
        %s174 = scalar_lea.vmem %s1, %s173
        %s175 = smul.u32 8, %s17
      $region24: #{residual_block_forward.5} parent=15 // pred_fallthru
        _
      // Predicated region
      $region25: #{residual_block_forward.5} parent=15 // pred_check
        %p176 = pneg %p97
      $region26: #{residual_block_forward.5} parent=15 // pred_check_branch
        %178 = sbr.rel (%p176) target = $region28
      $region27: #{residual_block_forward.5} parent=15 // pred_region
        %p179 = scmp.lt.s32.totalorder %s16, 1
        %s180 = scalar_select %p179, %s16, 1
        %s181 = scalar_lea.vmem %s2, %s180
      $region28: #{residual_block_forward.5} parent=15 // pred_fallthru
        _
    $region16: #{residual_block_forward.5} parent=5 // pred_fallthru
      _
    %p182 = scmp.le.s32.totalorder 1, %s9
    %p183 = scmp.lt.s32.totalorder %s9, 3
    %p184 = pnand %p182, %p183
    %p185 = pneg %p184
    // Predicated region
    $region29: #{residual_block_forward.5} parent=5 // pred_check
      _
    $region30: #{residual_block_forward.5} parent=5 // pred_check_branch
      %187 = sbr.rel (%p184) target = $region32
    $region31: #{residual_block_forward.5} parent=5 // pred_region
      %s188 = ssub.s32 %s9, 1
      %s189 = smul.u32 8, %s19
      %p190 = scmp.lt.s32.totalorder %s18, 1
      %s191 = scalar_select %p190, %s18, 1
      %p192 = scmp.lt.s32.totalorder %s189, 7
      %s193 = scalar_select %p192, %s189, 7
      %s194 = smul.addr %s191, 8
      %s195 = sadd.s32 %s193, %s194
      %s196 = smul.addr %s195, 4
      %s197 = scalar_lea.vmem %s0, %s196
      %p198 = pneg %p49
      %p199 = pneg %p46
      %s200 = smul.u32 8, %s19
      %p201 = scmp.lt.s32.totalorder %s18, 1
      %s202 = scalar_select %p201, %s18, 1
      %p203 = scmp.lt.s32.totalorder %s200, 7
      %s204 = scalar_select %p203, %s200, 7
      %s205 = smul.addr %s202, 8
      %s206 = sadd.s32 %s204, %s205
      %s207 = smul.addr %s206, 8
      %s208 = scalar_lea.vmem %s1, %s207
      %p209 = pneg %p77
      %p210 = pneg %p74
      %p211 = scmp.lt.s32.totalorder %s18, 1
      %s212 = scalar_select %p211, %s18, 1
      %s213 = scalar_lea.vmem %s2, %s212
      %p214 = pneg %p103
      %p215 = pneg %p100
      %p216 = pneg %p131
      %p217 = pneg %p128
      %s218 = smul.u32 8, %s19
      %p219 = scmp.lt.s32.totalorder %s18, 1
      %s220 = scalar_select %p219, %s18, 1
      %p221 = scmp.lt.s32.totalorder %s218, 7
      %s222 = scalar_select %p221, %s218, 7
      %s223 = smul.addr %s220, 8
      %s224 = sadd.s32 %s222, %s223
      %s225 = smul.addr %s224, 8
      %s226 = scalar_lea.vmem %s3, %s225
      %s227 = smul.u32 8, %s19
      %p228 = scmp.lt.s32.totalorder %s18, 1
      %s229 = scalar_select %p228, %s18, 1
      %p230 = scmp.lt.s32.totalorder %s227, 7
      %s231 = scalar_select %p230, %s227, 7
      %s232 = smul.addr %s229, 8
      %s233 = sadd.s32 %s231, %s232
      %s234 = smul.addr %s233, 4
      %s235 = scalar_lea.vmem %s0, %s234
      %s236 = smul.u32 8, %s19
      %s237 = smul.u32 8, %s19
      %p238 = scmp.lt.s32.totalorder %s18, 1
      %s239 = scalar_select %p238, %s18, 1
      %p240 = scmp.lt.s32.totalorder %s237, 7
      %s241 = scalar_select %p240, %s237, 7
      %s242 = smul.addr %s239, 8
      %s243 = sadd.s32 %s241, %s242
      %s244 = smul.addr %s243, 8
      %s245 = scalar_lea.vmem %s1, %s244
      %s246 = smul.u32 8, %s19
      %p247 = scmp.lt.s32.totalorder %s18, 1
      %s248 = scalar_select %p247, %s18, 1
      %s249 = scalar_lea.vmem %s2, %s248
      %s250 = smul.u32 8, %s19
      %p251 = scmp.lt.s32.totalorder %s18, 1
      %s252 = scalar_select %p251, %s18, 1
      %p253 = scmp.lt.s32.totalorder %s250, 7
      %s254 = scalar_select %p253, %s250, 7
      %s255 = smul.addr %s252, 8
      %s256 = sadd.s32 %s254, %s255
      %s257 = smul.addr %s256, 8
      %s258 = scalar_lea.vmem %s3, %s257
      %s259 = smul.u32 8, %s19
      %v260 = vld [vmem:[%s235] sm:$0xf]
      %v261 = vld [vmem:[%s235 + $0x4] sm:$0xf]
      %v262 = vld [vmem:[%s235 + $0x8] sm:$0xf]
      %v263 = vld [vmem:[%s235 + $0xc] sm:$0xf]
      %v264 = vld [vmem:[%s235 + $0x10] sm:$0xf]
      %v265 = vld [vmem:[%s235 + $0x14] sm:$0xf]
      %v266 = vld [vmem:[%s235 + $0x18] sm:$0xf]
      %v267 = vld [vmem:[%s235 + $0x1c] sm:$0xf]
      %v268 = vunpack.c.l.bf16 %v260
      %v269 = vunpack.c.l.bf16 %v261
      %v270 = vunpack.c.l.bf16 %v262
      %v271 = vunpack.c.l.bf16 %v263
      %v272 = vunpack.c.l.bf16 %v264
      %v273 = vunpack.c.l.bf16 %v265
      %v274 = vunpack.c.l.bf16 %v266
      %v275 = vunpack.c.l.bf16 %v267
      %v276 = vld [vmem:[%s249] sm:$0x1]
      %v278 = vperm.slane %v276, 0
      %v280 = vmul.f32 %v268, %v278
      %v281 = vmul.f32 %v269, %v278
      %v282 = vmul.f32 %v270, %v278
      %v283 = vmul.f32 %v271, %v278
      %v284 = vmul.f32 %v272, %v278
      %v285 = vmul.f32 %v273, %v278
      %v286 = vmul.f32 %v274, %v278
      %v287 = vmul.f32 %v275, %v278
      %v288 = vld [vmem:[%s245] sm:$0xff]
      %v289 = vld [vmem:[%s245 + $0x8] sm:$0xff]
      %v290 = vld [vmem:[%s245 + $0x10] sm:$0xff]
      %v291 = vld [vmem:[%s245 + $0x18] sm:$0xff]
      %v292 = vld [vmem:[%s245 + $0x20] sm:$0xff]
      %v293 = vld [vmem:[%s245 + $0x28] sm:$0xff]
      %v294 = vld [vmem:[%s245 + $0x30] sm:$0xff]
      %v295 = vld [vmem:[%s245 + $0x38] sm:$0xff]
      %v296 = vadd.f32 %v280, %v288
      %v297 = vadd.f32 %v281, %v289
      %v298 = vadd.f32 %v282, %v290
      %v299 = vadd.f32 %v283, %v291
      %v300 = vadd.f32 %v284, %v292
      %v301 = vadd.f32 %v285, %v293
      %v302 = vadd.f32 %v286, %v294
      %v303 = vadd.f32 %v287, %v295
      %v304 = vmax.f32 %v296, 0.0
      %v305 = vmax.f32 %v297, 0.0
      %v306 = vmax.f32 %v298, 0.0
      %v307 = vmax.f32 %v299, 0.0
      %v308 = vmax.f32 %v300, 0.0
      %v309 = vmax.f32 %v301, 0.0
      %v310 = vmax.f32 %v302, 0.0
      %v311 = vmax.f32 %v303, 0.0
      %312 = vst [vmem:[%s258] sm:$0xff] %v304
      %313 = vst [vmem:[%s258 + $0x8] sm:$0xff] %v305
      %314 = vst [vmem:[%s258 + $0x10] sm:$0xff] %v306
      %315 = vst [vmem:[%s258 + $0x18] sm:$0xff] %v307
      %316 = vst [vmem:[%s258 + $0x20] sm:$0xff] %v308
      %317 = vst [vmem:[%s258 + $0x28] sm:$0xff] %v309
      %318 = vst [vmem:[%s258 + $0x30] sm:$0xff] %v310
      %319 = vst [vmem:[%s258 + $0x38] sm:$0xff] %v311
      %s320 = smul.u32 8, %s19
      %p321 = scmp.lt.s32.totalorder %s18, 1
      %s322 = scalar_select %p321, %s18, 1
      %p323 = scmp.lt.s32.totalorder %s320, 7
      %s324 = scalar_select %p323, %s320, 7
      %s325 = smul.addr %s322, 8
      %s326 = sadd.s32 %s324, %s325
      %s327 = smul.addr %s326, 8
      %s328 = scalar_lea.vmem %s3, %s327
      // Predicated region
      $region33: #{residual_block_forward.5} parent=31 // pred_check
        %p329 = pneg %p128
      $region34: #{residual_block_forward.5} parent=31 // pred_check_branch
        %331 = sbr.rel (%p329) target = $region36
      $region35: #{residual_block_forward.5} parent=31 // pred_region
        %s332 = smul.u32 8, %s19
      $region36: #{residual_block_forward.5} parent=31 // pred_fallthru
        _
    $region32: #{residual_block_forward.5} parent=5 // pred_fallthru
      _
    %p333 = scmp.le.s32.totalorder 2, %s9
    // Predicated region
    $region37: #{residual_block_forward.5} parent=5 // pred_check
      %p334 = pneg %p333
    $region38: #{residual_block_forward.5} parent=5 // pred_check_branch
      %336 = sbr.rel (%p334) target = $region40
    $region39: #{residual_block_forward.5} parent=5 // pred_region
      %s337 = ssub.s32 %s9, 2
      // Predicated region
      $region41: #{residual_block_forward.5} parent=39 // pred_check
        %p338 = pneg %p134
      $region42: #{residual_block_forward.5} parent=39 // pred_check_branch
        %340 = sbr.rel (%p338) target = $region44
      $region43: #{residual_block_forward.5} parent=39 // pred_region
        %s341 = smul.u32 8, %s21
        %p342 = scmp.lt.s32.totalorder %s20, 1
        %s343 = scalar_select %p342, %s20, 1
        %p344 = scmp.lt.s32.totalorder %s341, 7
        %s345 = scalar_select %p344, %s341, 7
        %s346 = smul.addr %s343, 8
        %s347 = sadd.s32 %s345, %s346
        %s348 = smul.addr %s347, 8
        %s349 = scalar_lea.vmem %s3, %s348
      $region44: #{residual_block_forward.5} parent=39 // pred_fallthru
        _
    $region40: #{residual_block_forward.5} parent=5 // pred_fallthru
      _
  $region6: #{residual_block_forward.5} parent=0 // loop_footer
    %s13 = sadd.s32 1, %s9
  $region7: #{residual_block_forward.5} parent=0 // loop_footer_branch
    %8 = sbr.rel target = $region3
  $region8: #{residual_block_forward.5} parent=0 // loop_exit
    _

</llo_original>
